<compile_context>
chip_gen: v5e
topology: v5e:2x2
jax: 0.10.0
libtpu: 0.0.40
codegen_flags: <defaults>
</compile_context>

<pallas_src>
import jax
import jax.numpy as jnp
import numpy as np
from jax.experimental import pallas as pl
from jax.experimental.pallas import tpu as pltpu


def _round_up(x, m):
    return (x + m - 1) // m * m


def news_embedding_kernel(ids_ref, ctx_ref,
                          table_ref, wctx_ref, bctx_ref, w2_ref, b2_ref,
                          wfe_ref, out_ref):
    BT, D = ctx_ref.shape            # news rows in this tile, embedding dim
    N = ids_ref.shape[0]             # BT * E flattened (news, entity) rows
    E = N // BT
    V = table_ref.shape[0]           # padded combined vocab (multiple of 128)
    DL = table_ref.shape[1]          # D + L (table | table @ w1_entity_half)
    L = DL - D

    # ---- fused multi-hot gather + entity half of attention layer 1 ----
    # The four vocab ranges are disjoint (host adds cumulative offsets), so the
    # sum of the four one-hots is the exact multi-hot selector; one bf16 MXU
    # matmul then yields  [sum of table rows | sum of (table@w1e) rows].
    ids = ids_ref[...]                                               # [N, 4]
    cols = jax.lax.broadcasted_iota(jnp.int32, (N, V), 1)
    hot = ((cols == ids[:, 0:1]).astype(jnp.float32)
           + (cols == ids[:, 1:2]).astype(jnp.float32)
           + (cols == ids[:, 2:3]).astype(jnp.float32)
           + (cols == ids[:, 3:4]).astype(jnp.float32))
    hot = hot.astype(table_ref.dtype)                                # bf16
    ent_h = jnp.dot(hot, table_ref[...],
                    preferred_element_type=jnp.float32)              # [N, D+L]
    ent = ent_h[:, :D]                                               # [N, D]
    h_ent = ent_h[:, D:]                                             # [N, L]

    # ---- fused context-side matmul (attention-1 ctx half + final ctx half),
    #      with b1 / bf folded into one bias row ----
    ctx = ctx_ref[...]                                               # [BT, D]
    ctx_h = (jnp.dot(ctx, wctx_ref[...],
                     preferred_element_type=jnp.float32)
             + bctx_ref[...])                                        # [BT, L+D]
    h_ctx = ctx_h[:, :L]          # ctx @ w1c + b1
    ctx_fin = ctx_h[:, L:]        # ctx @ wfc + bf

    # attention layer 1 (relu) -- computed per (news, entity)
    h1 = jnp.maximum(h_ent.reshape(BT, E, L) + h_ctx[:, None, :], 0.0)

    # attention layer 2 as elementwise mul + lane reduce; scores stay 2-D.
    score = jnp.sum(h1 * w2_ref[...], axis=-1) + b2_ref[0]           # [BT, E]
    att = jnp.maximum(score, 0.0)

    # softmax over entities (dim=-2 in the PyTorch module); E is the lane axis
    # here, so max / sum are plain lane reduces.
    m = jnp.max(att, axis=-1, keepdims=True)
    ex = jnp.exp(att - m)
    denom = jnp.sum(ex, axis=-1, keepdims=True)
    soft = ex * pl.reciprocal(denom, approx=True)                    # [BT, E]

    # weighted entity sum
    agg = jnp.sum(soft[:, :, None] * ent.reshape(BT, E, D), axis=1)  # [BT, D]

    # final linear (agg half; ctx half + bf already in ctx_fin) + tanh
    out = jnp.tanh(
        jnp.dot(agg, wfe_ref[...], preferred_element_type=jnp.float32)
        + ctx_fin)
    out_ref[...] = out.astype(out_ref.dtype)


def news_embedding_forward(ent_ids, ent_nums, istitle, ntype, ctx,
                           entity_table, entnum_table, title_table, type_table,
                           w1, b1, w2, b2, wf, bf, *,
                           block_b=256, table_dtype=jnp.bfloat16):
    """Batch-tiled Pallas forward.

    block_b = news rows per grid step.  Use ~256-512 on v5e/v6e, ~128-256 on
    v7x (64 MiB VMEM / TC), and keep the grid length >= 2 so both v7x
    TensorCores get work.  E (entities per news) may be any value; it is
    fastest when it is a multiple of 8 (sublane-aligned reshapes).
    NOTE: for production, D (and L) should be padded to multiples of 128 so
    the output stores are lane-dense (unmasked vst).
    """
    B, E = ent_ids.shape
    D = ctx.shape[-1]
    L = w1.shape[1]

    # tile size: multiple of 8 sublanes, clamped to the (padded) batch
    block_b = _round_up(max(8, min(block_b, _round_up(B, 8))), 8)
    Bp = _round_up(B, block_b)

    # --- host-side layout prep (one-off, outside the hot loop) ---
    tables = [entity_table, entnum_table, title_table, type_table]
    sizes = [int(t.shape[0]) for t in tables]
    offs = np.cumsum([0] + sizes[:-1]).tolist()

    w1e, w1c = w1[:D], w1[D:]          # attention layer-1 halves
    wfe, wfc = wf[:D], wf[D:]          # final-linear halves

    # stacked table, extended with precomputed table @ w1e columns, contraction
    # dim padded to a multiple of 128, stored in bf16 (VMEM + MXU win).
    big = jnp.concatenate(tables, axis=0)                              # [Vraw, D]
    big = jnp.concatenate(
        [big, jnp.dot(big, w1e, precision=jax.lax.Precision.HIGHEST)],
        axis=1)                                                        # [Vraw, D+L]
    Vtot = _round_up(big.shape[0], 128)
    big = jnp.pad(big, ((0, Vtot - big.shape[0]), (0, 0))).astype(table_dtype)

    # one lane-denser [B*E, 4] id slab; ids are assumed in-range per stream
    # (out-of-range ids would silently select nothing).
    ids = jnp.stack(
        [ent_ids.astype(jnp.int32) + offs[0],
         ent_nums.astype(jnp.int32) + offs[1],
         istitle.astype(jnp.int32) + offs[2],
         ntype.astype(jnp.int32) + offs[3]], axis=-1)                  # [B, E, 4]

    pad_b = Bp - B
    if pad_b:
        ids = jnp.pad(ids, ((0, pad_b), (0, 0), (0, 0)))
        ctx = jnp.pad(ctx, ((0, pad_b), (0, 0)))
    ids = ids.reshape(Bp * E, 4)
    ctx = ctx.astype(jnp.float32)

    # fused ctx-side weight / bias: one [D, L+D] matmul does both the
    # attention-1 ctx half (with b1) and the final-linear ctx half (with bf).
    w_ctx = jnp.concatenate([w1c, wfc], axis=1).astype(jnp.float32)    # [D, L+D]
    b_ctx = jnp.concatenate([jnp.reshape(b1, (1, L)),
                             jnp.reshape(bf, (1, D))], axis=1).astype(jnp.float32)
    w2row = jnp.reshape(w2, (1, L)).astype(jnp.float32)
    b2s = jnp.reshape(jnp.asarray(b2, jnp.float32), (1,))              # SMEM scalar
    wfe = wfe.astype(jnp.float32)

    Nt = block_b * E

    def vmem_const():
        # unblocked VMEM operand: resident once, not double-buffered per step
        return pl.BlockSpec(memory_space=pltpu.MemorySpace.VMEM)

    out = pl.pallas_call(
        news_embedding_kernel,
        out_shape=jax.ShapeDtypeStruct((Bp, D), jnp.float32),
        grid=(Bp // block_b,),
        in_specs=[
            pl.BlockSpec((Nt, 4), lambda i: (i, 0)),        # merged id streams
            pl.BlockSpec((block_b, D), lambda i: (i, 0)),   # context vectors
            vmem_const(),                                   # stacked table (bf16)
            vmem_const(),                                   # fused ctx weight
            vmem_const(),                                   # fused ctx bias
            vmem_const(),                                   # w2 as row vector
            pl.BlockSpec(memory_space=pltpu.MemorySpace.SMEM),  # b2 scalar
            vmem_const(),                                   # wf (agg half)
        ],
        out_specs=pl.BlockSpec((block_b, D), lambda i: (i, 0)),
        compiler_params=pltpu.CompilerParams(
            dimension_semantics=("parallel",),
            vmem_limit_bytes=48 * 1024 * 1024),
    )(ids, ctx, big, w_ctx, b_ctx, w2row, b2s, wfe)

    return out[:B]


def reference_forward(ent_ids, ent_nums, istitle, ntype, ctx,
                      entity_table, entnum_table, title_table, type_table,
                      w1, b1, w2, b2, wf, bf):
    ent = (jnp.take(entity_table, ent_ids, axis=0)
           + jnp.take(entnum_table, ent_nums, axis=0)
           + jnp.take(title_table, istitle, axis=0)
           + jnp.take(type_table, ntype, axis=0))            # [B, E, D]
    B, E, D = ent.shape
    ctx_b = jnp.broadcast_to(ctx[:, None, :], (B, E, D))
    x = jnp.concatenate([ent, ctx_b], axis=-1)
    h1 = jnp.maximum(x @ w1 + b1, 0.0)
    att = jnp.maximum(h1 @ w2 + b2, 0.0)                     # [B, E, 1]
    soft = jax.nn.softmax(att, axis=-2)
    agg = jnp.sum(soft * ent, axis=-2)                       # [B, D]
    cat = jnp.concatenate([agg, ctx], axis=-1)
    return jnp.tanh(cat @ wf + bf)


def xavier_normal(key, shape, gain):
    fan_in, fan_out = shape[0], shape[1]
    std = gain * (2.0 / (fan_in + fan_out)) ** 0.5
    return std * jax.random.normal(key, shape, dtype=jnp.float32)


if __name__ == "__main__":
    # Small synthetic configuration consistent with the module's forward.
    B, E = 64, 8          # batch of news, entities per news
    D, L = 32, 16         # args.embedding_dim, args.layer_dim
    total_entities = 64   # KG entity vocabulary
    entity_num = 100      # vocab for entity_num_embeddings
    position_num, type_num = 2, 4

    key = jax.random.PRNGKey(0)
    ks = jax.random.split(key, 16)

    # Pretrained-style entity table + xavier-initialized feature tables.
    entity_embedding = 0.1 * jax.random.normal(ks[0], (total_entities, D), jnp.float32)
    title_w = xavier_normal(ks[1], (position_num, D), 0.01)
    type_w = xavier_normal(ks[2], (type_num, D), 0.01)
    entnum_w = xavier_normal(ks[3], (entity_num, D), 0.01)

    # Linear layers (stored [in, out]); non-zero biases exercise the bias paths.
    w1 = xavier_normal(ks[4], (2 * D, L), 1.0)
    b1 = 0.1 * jax.random.normal(ks[5], (1, L), jnp.float32)
    w2 = xavier_normal(ks[6], (L, 1), 1.0)
    b2 = 0.1 * jax.random.normal(ks[7], (1,), jnp.float32)
    wf = xavier_normal(ks[8], (2 * D, D), 1.0)
    bf = 0.1 * jax.random.normal(ks[9], (1, D), jnp.float32)

    # Synthetic doc_feature_dict lookups (already resolved to index arrays).
    ent_ids = jax.random.randint(ks[10], (B, E), 0, total_entities)
    ent_nums = jax.random.randint(ks[11], (B, E), 0, entity_num)
    istitle = jax.random.randint(ks[12], (B, E), 0, position_num)
    ntype = jax.random.randint(ks[13], (B, E), 0, type_num)
    ctx = jax.random.normal(ks[14], (B, D), jnp.float32)

    # TODO(synk): the KGAT sub-module is not defined in the reference source;
    # its per-entity output is stood in by the pretrained entity-table lookup.
    out = news_embedding_forward(ent_ids, ent_nums, istitle, ntype, ctx,
                                 entity_embedding, entnum_w, title_w, type_w,
                                 w1, b1, w2, b2, wf, bf,
                                 block_b=32)          # 2 grid steps at B=64
    out = jax.block_until_ready(out)

    with jax.default_matmul_precision("highest"):     # true f32 ground truth
        ref = reference_forward(ent_ids, ent_nums, istitle, ntype, ctx,
                                entity_embedding, entnum_w, title_w, type_w,
                                w1, b1, w2, b2, wf, bf)
    ref = jax.block_until_ready(ref)

    assert out.shape == (B, D)
    # bf16 stacked table + precomputed table@w1e columns + approx=True EUP
    # reciprocal in the softmax -> compare at 5e-3 against the f32 reference.
    np.testing.assert_allclose(np.asarray(out), np.asarray(ref),
                               atol=5e-3, rtol=5e-3)
    print("KERNEL_OK")
</pallas_src>

<mosaic_0001>
module attributes {stable_mosaic.version = 11 : i64} {
  func.func @news_embedding_kernel(%arg0: i32, %arg1: memref<256x4xi32, #tpu.memory_space<vmem>>, %arg2: memref<32x32xf32, #tpu.memory_space<vmem>>, %arg3: memref<256x48xbf16, #tpu.memory_space<vmem>>, %arg4: memref<32x48xf32, #tpu.memory_space<vmem>>, %arg5: memref<1x48xf32, #tpu.memory_space<vmem>>, %arg6: memref<1x16xf32, #tpu.memory_space<vmem>>, %arg7: memref<1xf32, #tpu.memory_space<smem>>, %arg8: memref<32x32xf32, #tpu.memory_space<vmem>>, %arg9: memref<32x32xf32, #tpu.memory_space<vmem>>) attributes {dimension_semantics = [#tpu.dimension_semantics<parallel>], iteration_bounds = array<i64: 2>, scalar_prefetch = 0 : i64, scratch_operands = 0 : i64, tpu.core_type = #tpu.core_type<tc>, window_params = [{transform_indices = @transform_0, window_bounds = array<i64: 256, 4>}, {transform_indices = @transform_1, window_bounds = array<i64: 32, 32>}, {pipeline_mode = #tpu.pipeline_mode<synchronous>, transform_indices = @transform_2, window_bounds = array<i64: 256, 48>}, {pipeline_mode = #tpu.pipeline_mode<synchronous>, transform_indices = @transform_3, window_bounds = array<i64: 32, 48>}, {pipeline_mode = #tpu.pipeline_mode<synchronous>, transform_indices = @transform_4, window_bounds = array<i64: 1, 48>}, {pipeline_mode = #tpu.pipeline_mode<synchronous>, transform_indices = @transform_5, window_bounds = array<i64: 1, 16>}, {transform_indices = @transform_6, window_bounds = array<i64: 1>}, {pipeline_mode = #tpu.pipeline_mode<synchronous>, transform_indices = @transform_7, window_bounds = array<i64: 32, 32>}, {transform_indices = @transform_8, window_bounds = array<i64: 32, 32>}]} {
    %c0 = arith.constant 0 : index
    %c0_0 = arith.constant 0 : index
    %0 = vector.load %arg1[%c0, %c0_0] : memref<256x4xi32, #tpu.memory_space<vmem>>, vector<256x4xi32>
    %1 = tpu.iota {dimensions = array<i32: 1>} : vector<256x256xi32>
    %2 = vector.extract_strided_slice %0 {offsets = [0, 0], sizes = [256, 1], strides = [1, 1]} : vector<256x4xi32> to vector<256x1xi32>
    %3 = vector.broadcast %2 : vector<256x1xi32> to vector<256x256xi32>
    %4 = arith.cmpi eq, %1, %3 : vector<256x256xi32>
    %5 = arith.extui %4 : vector<256x256xi1> to vector<256x256xi32>
    %6 = arith.sitofp %5 : vector<256x256xi32> to vector<256x256xf32>
    %7 = vector.extract_strided_slice %0 {offsets = [0, 1], sizes = [256, 1], strides = [1, 1]} : vector<256x4xi32> to vector<256x1xi32>
    %8 = vector.broadcast %7 : vector<256x1xi32> to vector<256x256xi32>
    %9 = arith.cmpi eq, %1, %8 : vector<256x256xi32>
    %10 = arith.extui %9 : vector<256x256xi1> to vector<256x256xi32>
    %11 = arith.sitofp %10 : vector<256x256xi32> to vector<256x256xf32>
    %12 = arith.addf %6, %11 : vector<256x256xf32>
    %13 = vector.extract_strided_slice %0 {offsets = [0, 2], sizes = [256, 1], strides = [1, 1]} : vector<256x4xi32> to vector<256x1xi32>
    %14 = vector.broadcast %13 : vector<256x1xi32> to vector<256x256xi32>
    %15 = arith.cmpi eq, %1, %14 : vector<256x256xi32>
    %16 = arith.extui %15 : vector<256x256xi1> to vector<256x256xi32>
    %17 = arith.sitofp %16 : vector<256x256xi32> to vector<256x256xf32>
    %18 = arith.addf %12, %17 : vector<256x256xf32>
    %19 = vector.extract_strided_slice %0 {offsets = [0, 3], sizes = [256, 1], strides = [1, 1]} : vector<256x4xi32> to vector<256x1xi32>
    %20 = vector.broadcast %19 : vector<256x1xi32> to vector<256x256xi32>
    %21 = arith.cmpi eq, %1, %20 : vector<256x256xi32>
    %22 = arith.extui %21 : vector<256x256xi1> to vector<256x256xi32>
    %23 = arith.sitofp %22 : vector<256x256xi32> to vector<256x256xf32>
    %24 = arith.addf %18, %23 : vector<256x256xf32>
    %25 = arith.truncf %24 : vector<256x256xf32> to vector<256x256xbf16>
    %c0_1 = arith.constant 0 : index
    %c0_2 = arith.constant 0 : index
    %26 = vector.load %arg3[%c0_1, %c0_2] : memref<256x48xbf16, #tpu.memory_space<vmem>>, vector<256x48xbf16>
    %cst = arith.constant dense<0.000000e+00> : vector<256x48xf32>
    %27 = tpu.matmul %25, %26, %cst {dimension_numbers = #tpu.dot_dimension_numbers<[1], [0], [0], [1], [0, 0, 1, 1], [], []>} : vector<256x256xbf16>, vector<256x48xbf16>, vector<256x48xf32> -> vector<256x48xf32>
    %28 = vector.extract_strided_slice %27 {offsets = [0, 0], sizes = [256, 32], strides = [1, 1]} : vector<256x48xf32> to vector<256x32xf32>
    %29 = vector.extract_strided_slice %27 {offsets = [0, 32], sizes = [256, 16], strides = [1, 1]} : vector<256x48xf32> to vector<256x16xf32>
    %c0_3 = arith.constant 0 : index
    %c0_4 = arith.constant 0 : index
    %30 = vector.load %arg2[%c0_3, %c0_4] : memref<32x32xf32, #tpu.memory_space<vmem>>, vector<32x32xf32>
    %c0_5 = arith.constant 0 : index
    %c0_6 = arith.constant 0 : index
    %31 = vector.load %arg4[%c0_5, %c0_6] : memref<32x48xf32, #tpu.memory_space<vmem>>, vector<32x48xf32>
    %cst_7 = arith.constant dense<0.000000e+00> : vector<32x48xf32>
    %32 = tpu.matmul %30, %31, %cst_7 {dimension_numbers = #tpu.dot_dimension_numbers<[1], [0], [0], [1], [0, 0, 1, 1], [], []>} : vector<32x32xf32>, vector<32x48xf32>, vector<32x48xf32> -> vector<32x48xf32>
    %c0_8 = arith.constant 0 : index
    %c0_9 = arith.constant 0 : index
    %33 = vector.load %arg5[%c0_8, %c0_9] : memref<1x48xf32, #tpu.memory_space<vmem>>, vector<1x48xf32>
    %34 = vector.broadcast %33 : vector<1x48xf32> to vector<32x48xf32>
    %35 = arith.addf %32, %34 : vector<32x48xf32>
    %36 = vector.extract_strided_slice %35 {offsets = [0, 0], sizes = [32, 16], strides = [1, 1]} : vector<32x48xf32> to vector<32x16xf32>
    %37 = vector.extract_strided_slice %35 {offsets = [0, 16], sizes = [32, 32], strides = [1, 1]} : vector<32x48xf32> to vector<32x32xf32>
    %38 = vector.shape_cast %29 : vector<256x16xf32> to vector<32x8x16xf32>
    %39 = vector.shape_cast %36 : vector<32x16xf32> to vector<32x1x16xf32>
    %40 = vector.broadcast %39 : vector<32x1x16xf32> to vector<32x8x16xf32>
    %41 = arith.addf %38, %40 : vector<32x8x16xf32>
    %cst_10 = arith.constant 0.000000e+00 : f32
    %42 = vector.broadcast %cst_10 : f32 to vector<32x8x16xf32>
    %43 = arith.maximumf %41, %42 : vector<32x8x16xf32>
    %c0_11 = arith.constant 0 : index
    %c0_12 = arith.constant 0 : index
    %44 = vector.load %arg6[%c0_11, %c0_12] : memref<1x16xf32, #tpu.memory_space<vmem>>, vector<1x16xf32>
    %45 = vector.shape_cast %44 : vector<1x16xf32> to vector<1x1x16xf32>
    %46 = vector.broadcast %45 : vector<1x1x16xf32> to vector<32x8x16xf32>
    %47 = arith.mulf %43, %46 : vector<32x8x16xf32>
    %cst_13 = arith.constant dense<0.000000e+00> : vector<32x8xf32>
    %48 = vector.multi_reduction <add>, %47, %cst_13 [2] : vector<32x8x16xf32> to vector<32x8xf32>
    %c0_14 = arith.constant 0 : index
    %49 = memref.load %arg7[%c0_14] : memref<1xf32, #tpu.memory_space<smem>>
    %50 = vector.broadcast %49 : f32 to vector<32x8xf32>
    %51 = arith.addf %48, %50 : vector<32x8xf32>
    %cst_15 = arith.constant 0.000000e+00 : f32
    %52 = vector.broadcast %cst_15 : f32 to vector<32x8xf32>
    %53 = arith.maximumf %51, %52 : vector<32x8xf32>
    %cst_16 = arith.constant dense<0xFF800000> : vector<32xf32>
    %54 = vector.multi_reduction <maximumf>, %53, %cst_16 [1] : vector<32x8xf32> to vector<32xf32>
    %55 = vector.shape_cast %54 : vector<32xf32> to vector<32x1xf32>
    %56 = vector.broadcast %55 : vector<32x1xf32> to vector<32x8xf32>
    %57 = arith.subf %53, %56 : vector<32x8xf32>
    %58 = math.exp %57 : vector<32x8xf32>
    %cst_17 = arith.constant dense<0.000000e+00> : vector<32xf32>
    %59 = vector.multi_reduction <add>, %58, %cst_17 [1] : vector<32x8xf32> to vector<32xf32>
    %60 = vector.shape_cast %59 : vector<32xf32> to vector<32x1xf32>
    %61 = tpu.reciprocal %60 {approx = true} : vector<32x1xf32> -> vector<32x1xf32>
    %62 = vector.broadcast %61 : vector<32x1xf32> to vector<32x8xf32>
    %63 = arith.mulf %58, %62 : vector<32x8xf32>
    %64 = vector.shape_cast %63 : vector<32x8xf32> to vector<32x8x1xf32>
    %65 = vector.shape_cast %28 : vector<256x32xf32> to vector<32x8x32xf32>
    %66 = vector.broadcast %64 : vector<32x8x1xf32> to vector<32x8x32xf32>
    %67 = arith.mulf %66, %65 : vector<32x8x32xf32>
    %cst_18 = arith.constant dense<0.000000e+00> : vector<32x32xf32>
    %68 = vector.multi_reduction <add>, %67, %cst_18 [1] : vector<32x8x32xf32> to vector<32x32xf32>
    %c0_19 = arith.constant 0 : index
    %c0_20 = arith.constant 0 : index
    %69 = vector.load %arg8[%c0_19, %c0_20] : memref<32x32xf32, #tpu.memory_space<vmem>>, vector<32x32xf32>
    %cst_21 = arith.constant dense<0.000000e+00> : vector<32x32xf32>
    %70 = tpu.matmul %68, %69, %cst_21 {dimension_numbers = #tpu.dot_dimension_numbers<[1], [0], [0], [1], [0, 0, 1, 1], [], []>} : vector<32x32xf32>, vector<32x32xf32>, vector<32x32xf32> -> vector<32x32xf32>
    %71 = arith.addf %70, %37 : vector<32x32xf32>
    %72 = math.tanh %71 : vector<32x32xf32>
    %c0_22 = arith.constant 0 : index
    %c0_23 = arith.constant 0 : index
    %73 = vector.load %arg9[%c0_22, %c0_23] : memref<32x32xf32, #tpu.memory_space<vmem>>, vector<32x32xf32>
    tpu.vector_store %arg9[%c0_22, %c0_23], %72 {strides = array<i32>} : memref<32x32xf32, #tpu.memory_space<vmem>>, vector<32x32xf32>,
    return
  }
  func.func @transform_0(%arg0: i32) -> (i32, i32) {
    %c0_i32 = arith.constant 0 : i32
    %c0_i32_0 = arith.constant 0 : i32
    return %arg0, %c0_i32 : i32, i32
  }
  func.func @transform_1(%arg0: i32) -> (i32, i32) {
    %c0_i32 = arith.constant 0 : i32
    %c0_i32_0 = arith.constant 0 : i32
    return %arg0, %c0_i32 : i32, i32
  }
  func.func @transform_2(%arg0: i32) -> (i32, i32) {
    %c0_i32 = arith.constant 0 : i32
    %c0_i32_0 = arith.constant 0 : i32
    %c0_i32_1 = arith.constant 0 : i32
    return %c0_i32, %c0_i32_0 : i32, i32
  }
  func.func @transform_3(%arg0: i32) -> (i32, i32) {
    %c0_i32 = arith.constant 0 : i32
    %c0_i32_0 = arith.constant 0 : i32
    %c0_i32_1 = arith.constant 0 : i32
    return %c0_i32, %c0_i32_0 : i32, i32
  }
  func.func @transform_4(%arg0: i32) -> (i32, i32) {
    %c0_i32 = arith.constant 0 : i32
    %c0_i32_0 = arith.constant 0 : i32
    %c0_i32_1 = arith.constant 0 : i32
    return %c0_i32, %c0_i32_0 : i32, i32
  }
  func.func @transform_5(%arg0: i32) -> (i32, i32) {
    %c0_i32 = arith.constant 0 : i32
    %c0_i32_0 = arith.constant 0 : i32
    %c0_i32_1 = arith.constant 0 : i32
    return %c0_i32, %c0_i32_0 : i32, i32
  }
  func.func @transform_6(%arg0: i32) -> i32 {
    %c0_i32 = arith.constant 0 : i32
    %c0_i32_0 = arith.constant 0 : i32
    return %c0_i32 : i32
  }
  func.func @transform_7(%arg0: i32) -> (i32, i32) {
    %c0_i32 = arith.constant 0 : i32
    %c0_i32_0 = arith.constant 0 : i32
    %c0_i32_1 = arith.constant 0 : i32
    return %c0_i32, %c0_i32_0 : i32, i32
  }
  func.func @transform_8(%arg0: i32) -> (i32, i32) {
    %c0_i32 = arith.constant 0 : i32
    %c0_i32_0 = arith.constant 0 : i32
    return %arg0, %c0_i32 : i32, i32
  }
}

</mosaic_0001>

<llo_original>
// kernel: tpu_custom_call.1
$region0: #{tpu_custom_call.1}
  #allocation0 [shape = 'u32[]', space=smem, size = 0x4, offset = 0x4, fixed_abs, tag = 'smem constant byte address 0x4 - core index']
  #allocation1 [shape = 'u32[72,128]{1,0:T(1,128)}', space=vmem, size = 0x9000, scoped, tag = 'internal scratch']
  #allocation2 [shape = 'f32[1]{0:T(128)S(6)}', space=smem, size = 0x200, scoped, tag = 'scoped memory for tpu_custom_call.1']
  %s0 = inlined_call_operand.vmem [shape: s32[512,4], index: 0, kind: input, shape index: {}]
  %s1 = inlined_call_operand.vmem [shape: f32[64,32], index: 1, kind: input, shape index: {}]
  %s2 = inlined_call_operand.vmem [shape: bf16[256,48], index: 2, kind: input, shape index: {}]
  %s3 = inlined_call_operand.vmem [shape: f32[32,48], index: 3, kind: input, shape index: {}]
  %s4 = inlined_call_operand.vmem [shape: f32[1,48], index: 4, kind: input, shape index: {}]
  %s5 = inlined_call_operand.vmem [shape: f32[1,16], index: 5, kind: input, shape index: {}]
  %s6 = inlined_call_operand.<no memory space> [shape: f32[1], index: 6, kind: input, shape index: {}]
  %s7 = inlined_call_operand.vmem [shape: f32[32,32], index: 7, kind: input, shape index: {}]
  %s8 = inlined_call_operand.vmem [shape: f32[64,32], index: 8, kind: output, shape index: {}]
  %s9 = sld [smem:[#allocation0]]
  $region65: #{tpu_custom_call.1} parent=0
    _
  %s11 = ssub.s32 1, %s9
  %s12 = scalar_select 0, %s11, %s9
  %13 = sst [smem:[#allocation2]] %s6
  loop: start=0, step=1, limit=4
  $region2: #{tpu_custom_call.1} parent=0 // loop_pre_header
    _
  $region3: #{tpu_custom_call.1} parent=0 // loop_header
    %s15 = sphi 0, %s19
    %p16 = scmp.ge.s32.totalorder %s15, 4
    %s25 = sphi 0, %s27
    %s28 = sphi 0, %s25
    %s29 = sphi 0, %s28
    %s45 = sphi 0, %s29
    %s51 = sphi 0, %s53
    %s54 = sphi 0, %s51
    %s55 = sphi 0, %s54
    %s71 = sphi 0, %s55
    %s75 = sphi 0, %s75
    %s77 = sphi 0, %s75
    %s78 = sphi 0, %s77
    %s92 = sphi 0, %s78
    %s96 = sphi 0, %s96
    %s98 = sphi 0, %s96
    %s99 = sphi 0, %s98
    %s113 = sphi 0, %s99
    %s117 = sphi 0, %s117
    %s119 = sphi 0, %s117
    %s120 = sphi 0, %s119
    %s134 = sphi 0, %s120
    %s138 = sphi 0, %s138
    %s140 = sphi 0, %s138
    %s141 = sphi 0, %s140
    %s155 = sphi 0, %s141
    %s159 = sphi 0, %s159
    %s161 = sphi 0, %s159
    %s162 = sphi 0, %s161
    %s176 = sphi 0, %s162
    %s180 = sphi 0, %s180
    %s182 = sphi 0, %s180
    %s183 = sphi 0, %s182
    %s197 = sphi 0, %s183
    %s203 = sphi 0, %s205
    %s206 = sphi 0, %s203
    %s207 = sphi 0, %s206
    %s223 = sphi 0, %s207
  $region4: #{tpu_custom_call.1} parent=0 // loop_header_branch
    %18 = sbr.rel (%p16) target = $region8
  $region5: #{tpu_custom_call.1} parent=0 // loop_body
    %s20 = ssub.s32 %s15, 1
    %s21 = ssub.s32 %s15, 2
    %s22 = sadd.s32 %s15, 1
    %s23 = ssub.s32 %s15, %s22
    %p24 = scmp.eq.s32.totalorder %s23, 0
    %s26 = sadd.s32 %s25, 1
    %s27 = scalar_select %p24, %s25, %s26
    %p30 = pneg %p24
    %p31 = scmp.eq.s32.totalorder %s15, 1
    %p32 = por %p30, %p31
    %p33 = scmp.ne.s32.totalorder %s25, %s28
    %p34 = scmp.eq.s32.totalorder %s15, 0
    %p35 = por %p33, %p34
    %p36 = scmp.ne.s32.totalorder %s25, %s28
    %p37 = scmp.eq.s32.totalorder %s20, 1
    %p38 = por %p36, %p37
    %p39 = scmp.ne.s32.totalorder %s28, %s29
    %p40 = scmp.eq.s32.totalorder %s20, 0
    %p41 = por %p39, %p40
    %p42 = scmp.ne.s32.totalorder %s28, %s29
    %p43 = scmp.eq.s32.totalorder %s21, 1
    %p44 = por %p42, %p43
    %p46 = scmp.ne.s32.totalorder %s29, %s45
    %p47 = scmp.eq.s32.totalorder %s21, 0
    %p48 = por %p46, %p47
    %s49 = ssub.s32 %s15, %s22
    %p50 = scmp.eq.s32.totalorder %s49, 0
    %s52 = sadd.s32 %s51, 1
    %s53 = scalar_select %p50, %s51, %s52
    %p56 = pneg %p50
    %p57 = scmp.eq.s32.totalorder %s15, 1
    %p58 = por %p56, %p57
    %p59 = scmp.ne.s32.totalorder %s51, %s54
    %p60 = scmp.eq.s32.totalorder %s15, 0
    %p61 = por %p59, %p60
    %p62 = scmp.ne.s32.totalorder %s51, %s54
    %p63 = scmp.eq.s32.totalorder %s20, 1
    %p64 = por %p62, %p63
    %p65 = scmp.ne.s32.totalorder %s54, %s55
    %p66 = scmp.eq.s32.totalorder %s20, 0
    %p67 = por %p65, %p66
    %p68 = scmp.ne.s32.totalorder %s54, %s55
    %p69 = scmp.eq.s32.totalorder %s21, 1
    %p70 = por %p68, %p69
    %p72 = scmp.ne.s32.totalorder %s55, %s71
    %p73 = scmp.eq.s32.totalorder %s21, 0
    %p74 = por %p72, %p73
    %s76 = sadd.s32 %s75, 1
    %p79 = scmp.eq.s32.totalorder %s15, 1
    %p80 = scmp.ne.s32.totalorder %s75, %s77
    %p81 = scmp.eq.s32.totalorder %s15, 0
    %p82 = por %p80, %p81
    %p83 = scmp.ne.s32.totalorder %s75, %s77
    %p84 = scmp.eq.s32.totalorder %s20, 1
    %p85 = por %p83, %p84
    %p86 = scmp.ne.s32.totalorder %s77, %s78
    %p87 = scmp.eq.s32.totalorder %s20, 0
    %p88 = por %p86, %p87
    %p89 = scmp.ne.s32.totalorder %s77, %s78
    %p90 = scmp.eq.s32.totalorder %s21, 1
    %p91 = por %p89, %p90
    %p93 = scmp.ne.s32.totalorder %s78, %s92
    %p94 = scmp.eq.s32.totalorder %s21, 0
    %p95 = por %p93, %p94
    %s97 = sadd.s32 %s96, 1
    %p100 = scmp.eq.s32.totalorder %s15, 1
    %p101 = scmp.ne.s32.totalorder %s96, %s98
    %p102 = scmp.eq.s32.totalorder %s15, 0
    %p103 = por %p101, %p102
    %p104 = scmp.ne.s32.totalorder %s96, %s98
    %p105 = scmp.eq.s32.totalorder %s20, 1
    %p106 = por %p104, %p105
    %p107 = scmp.ne.s32.totalorder %s98, %s99
    %p108 = scmp.eq.s32.totalorder %s20, 0
    %p109 = por %p107, %p108
    %p110 = scmp.ne.s32.totalorder %s98, %s99
    %p111 = scmp.eq.s32.totalorder %s21, 1
    %p112 = por %p110, %p111
    %p114 = scmp.ne.s32.totalorder %s99, %s113
    %p115 = scmp.eq.s32.totalorder %s21, 0
    %p116 = por %p114, %p115
    %s118 = sadd.s32 %s117, 1
    %p121 = scmp.eq.s32.totalorder %s15, 1
    %p122 = scmp.ne.s32.totalorder %s117, %s119
    %p123 = scmp.eq.s32.totalorder %s15, 0
    %p124 = por %p122, %p123
    %p125 = scmp.ne.s32.totalorder %s117, %s119
    %p126 = scmp.eq.s32.totalorder %s20, 1
    %p127 = por %p125, %p126
    %p128 = scmp.ne.s32.totalorder %s119, %s120
    %p129 = scmp.eq.s32.totalorder %s20, 0
    %p130 = por %p128, %p129
    %p131 = scmp.ne.s32.totalorder %s119, %s120
    %p132 = scmp.eq.s32.totalorder %s21, 1
    %p133 = por %p131, %p132
    %p135 = scmp.ne.s32.totalorder %s120, %s134
    %p136 = scmp.eq.s32.totalorder %s21, 0
    %p137 = por %p135, %p136
    %s139 = sadd.s32 %s138, 1
    %p142 = scmp.eq.s32.totalorder %s15, 1
    %p143 = scmp.ne.s32.totalorder %s138, %s140
    %p144 = scmp.eq.s32.totalorder %s15, 0
    %p145 = por %p143, %p144
    %p146 = scmp.ne.s32.totalorder %s138, %s140
    %p147 = scmp.eq.s32.totalorder %s20, 1
    %p148 = por %p146, %p147
    %p149 = scmp.ne.s32.totalorder %s140, %s141
    %p150 = scmp.eq.s32.totalorder %s20, 0
    %p151 = por %p149, %p150
    %p152 = scmp.ne.s32.totalorder %s140, %s141
    %p153 = scmp.eq.s32.totalorder %s21, 1
    %p154 = por %p152, %p153
    %p156 = scmp.ne.s32.totalorder %s141, %s155
    %p157 = scmp.eq.s32.totalorder %s21, 0
    %p158 = por %p156, %p157
    %s160 = sadd.s32 %s159, 1
    %p163 = scmp.eq.s32.totalorder %s15, 1
    %p164 = scmp.ne.s32.totalorder %s159, %s161
    %p165 = scmp.eq.s32.totalorder %s15, 0
    %p166 = por %p164, %p165
    %p167 = scmp.ne.s32.totalorder %s159, %s161
    %p168 = scmp.eq.s32.totalorder %s20, 1
    %p169 = por %p167, %p168
    %p170 = scmp.ne.s32.totalorder %s161, %s162
    %p171 = scmp.eq.s32.totalorder %s20, 0
    %p172 = por %p170, %p171
    %p173 = scmp.ne.s32.totalorder %s161, %s162
    %p174 = scmp.eq.s32.totalorder %s21, 1
    %p175 = por %p173, %p174
    %p177 = scmp.ne.s32.totalorder %s162, %s176
    %p178 = scmp.eq.s32.totalorder %s21, 0
    %p179 = por %p177, %p178
    %s181 = sadd.s32 %s180, 1
    %p184 = scmp.eq.s32.totalorder %s15, 1
    %p185 = scmp.ne.s32.totalorder %s180, %s182
    %p186 = scmp.eq.s32.totalorder %s15, 0
    %p187 = por %p185, %p186
    %p188 = scmp.ne.s32.totalorder %s180, %s182
    %p189 = scmp.eq.s32.totalorder %s20, 1
    %p190 = por %p188, %p189
    %p191 = scmp.ne.s32.totalorder %s182, %s183
    %p192 = scmp.eq.s32.totalorder %s20, 0
    %p193 = por %p191, %p192
    %p194 = scmp.ne.s32.totalorder %s182, %s183
    %p195 = scmp.eq.s32.totalorder %s21, 1
    %p196 = por %p194, %p195
    %p198 = scmp.ne.s32.totalorder %s183, %s197
    %p199 = scmp.eq.s32.totalorder %s21, 0
    %p200 = por %p198, %p199
    %s201 = ssub.s32 %s15, %s22
    %p202 = scmp.eq.s32.totalorder %s201, 0
    %s204 = sadd.s32 %s203, 1
    %s205 = scalar_select %p202, %s203, %s204
    %p208 = pneg %p202
    %p209 = scmp.eq.s32.totalorder %s15, 1
    %p210 = por %p208, %p209
    %p211 = scmp.ne.s32.totalorder %s203, %s206
    %p212 = scmp.eq.s32.totalorder %s15, 0
    %p213 = por %p211, %p212
    %p214 = scmp.ne.s32.totalorder %s203, %s206
    %p215 = scmp.eq.s32.totalorder %s20, 1
    %p216 = por %p214, %p215
    %p217 = scmp.ne.s32.totalorder %s206, %s207
    %p218 = scmp.eq.s32.totalorder %s20, 0
    %p219 = por %p217, %p218
    %p220 = scmp.ne.s32.totalorder %s206, %s207
    %p221 = scmp.eq.s32.totalorder %s21, 1
    %p222 = por %p220, %p221
    %p224 = scmp.ne.s32.totalorder %s207, %s223
    %p225 = scmp.eq.s32.totalorder %s21, 0
    %p226 = por %p224, %p225
    %p227 = scmp.le.s32.totalorder 1, %s15
    %p228 = scmp.lt.s32.totalorder %s15, 3
    %p229 = pnand %p227, %p228
    %p230 = pneg %p229
    // Predicated region
    $region9: #{tpu_custom_call.1} parent=5 // pred_check
      _
    $region10: #{tpu_custom_call.1} parent=5 // pred_check_branch
      %232 = sbr.rel (%p229) target = $region12
    $region11: #{tpu_custom_call.1} parent=5 // pred_region
      %s233 = ssub.s32 %s15, 1
      // Predicated region
      $region13: #{tpu_custom_call.1} parent=11 // pred_check
        %p234 = pneg %p88
      $region14: #{tpu_custom_call.1} parent=11 // pred_check_branch
        %236 = sbr.rel (%p234) target = $region16
      $region15: #{tpu_custom_call.1} parent=11 // pred_region
        _
      $region16: #{tpu_custom_call.1} parent=11 // pred_fallthru
        _
      // Predicated region
      $region17: #{tpu_custom_call.1} parent=11 // pred_check
        %p237 = pneg %p109
      $region18: #{tpu_custom_call.1} parent=11 // pred_check_branch
        %239 = sbr.rel (%p237) target = $region20
      $region19: #{tpu_custom_call.1} parent=11 // pred_region
        _
      $region20: #{tpu_custom_call.1} parent=11 // pred_fallthru
        _
      // Predicated region
      $region21: #{tpu_custom_call.1} parent=11 // pred_check
        %p240 = pneg %p130
      $region22: #{tpu_custom_call.1} parent=11 // pred_check_branch
        %242 = sbr.rel (%p240) target = $region24
      $region23: #{tpu_custom_call.1} parent=11 // pred_region
        _
      $region24: #{tpu_custom_call.1} parent=11 // pred_fallthru
        _
      // Predicated region
      $region25: #{tpu_custom_call.1} parent=11 // pred_check
        %p243 = pneg %p151
      $region26: #{tpu_custom_call.1} parent=11 // pred_check_branch
        %245 = sbr.rel (%p243) target = $region28
      $region27: #{tpu_custom_call.1} parent=11 // pred_region
        _
      $region28: #{tpu_custom_call.1} parent=11 // pred_fallthru
        _
      // Predicated region
      $region29: #{tpu_custom_call.1} parent=11 // pred_check
        %p246 = pneg %p172
      $region30: #{tpu_custom_call.1} parent=11 // pred_check_branch
        %248 = sbr.rel (%p246) target = $region32
      $region31: #{tpu_custom_call.1} parent=11 // pred_region
        _
      $region32: #{tpu_custom_call.1} parent=11 // pred_fallthru
        _
      // Predicated region
      $region33: #{tpu_custom_call.1} parent=11 // pred_check
        %p249 = pneg %p193
      $region34: #{tpu_custom_call.1} parent=11 // pred_check_branch
        %251 = sbr.rel (%p249) target = $region36
      $region35: #{tpu_custom_call.1} parent=11 // pred_region
        _
      $region36: #{tpu_custom_call.1} parent=11 // pred_fallthru
        _
    $region12: #{tpu_custom_call.1} parent=5 // pred_fallthru
      _
    %p252 = scmp.lt.s32.totalorder %s15, 2
    // Predicated region
    $region37: #{tpu_custom_call.1} parent=5 // pred_check
      %p253 = pneg %p252
    $region38: #{tpu_custom_call.1} parent=5 // pred_check_branch
      %255 = sbr.rel (%p253) target = $region40
    $region39: #{tpu_custom_call.1} parent=5 // pred_region
      // Predicated region
      $region41: #{tpu_custom_call.1} parent=39 // pred_check
        %p256 = pneg %p35
      $region42: #{tpu_custom_call.1} parent=39 // pred_check_branch
        %258 = sbr.rel (%p256) target = $region44
      $region43: #{tpu_custom_call.1} parent=39 // pred_region
        %s259 = smul.u32 32, %s15
        %p260 = scmp.lt.s32.totalorder %s259, 63
        %s261 = scalar_select %p260, %s259, 63
        %s262 = smul.addr %s261, 8
        %s263 = scalar_lea.vmem %s0, %s262
        %s264 = smul.u32 32, %s15
      $region44: #{tpu_custom_call.1} parent=39 // pred_fallthru
        _
      // Predicated region
      $region45: #{tpu_custom_call.1} parent=39 // pred_check
        %p265 = pneg %p61
      $region46: #{tpu_custom_call.1} parent=39 // pred_check_branch
        %267 = sbr.rel (%p265) target = $region48
      $region47: #{tpu_custom_call.1} parent=39 // pred_region
        %s268 = smul.u32 4, %s15
        %p269 = scmp.lt.s32.totalorder %s268, 7
        %s270 = scalar_select %p269, %s268, 7
        %s271 = smul.addr %s270, 8
        %s272 = scalar_lea.vmem %s1, %s271
        %s273 = smul.u32 4, %s15
      $region48: #{tpu_custom_call.1} parent=39 // pred_fallthru
        _
    $region40: #{tpu_custom_call.1} parent=5 // pred_fallthru
      _
    %p274 = scmp.le.s32.totalorder 1, %s15
    %p275 = scmp.lt.s32.totalorder %s15, 3
    %p276 = pnand %p274, %p275
    %p277 = pneg %p276
    // Predicated region
    $region49: #{tpu_custom_call.1} parent=5 // pred_check
      _
    $region50: #{tpu_custom_call.1} parent=5 // pred_check_branch
      %279 = sbr.rel (%p276) target = $region52
    $region51: #{tpu_custom_call.1} parent=5 // pred_region
      %s280 = ssub.s32 %s15, 1
      %s281 = smul.u32 32, %s20
      %p282 = scmp.lt.s32.totalorder %s281, 63
      %s283 = scalar_select %p282, %s281, 63
      %s284 = smul.addr %s283, 8
      %s285 = scalar_lea.vmem %s0, %s284
      %p286 = pneg %p41
      %p287 = pneg %p38
      %s288 = smul.u32 4, %s20
      %p289 = scmp.lt.s32.totalorder %s288, 7
      %s290 = scalar_select %p289, %s288, 7
      %s291 = smul.addr %s290, 8
      %s292 = scalar_lea.vmem %s1, %s291
      %p293 = pneg %p67
      %p294 = pneg %p64
      %p295 = pneg %p88
      %p296 = pneg %p85
      %p297 = pneg %p109
      %p298 = pneg %p106
      %p299 = pneg %p130
      %p300 = pneg %p127
      %p301 = pneg %p151
      %p302 = pneg %p148
      %p303 = pneg %p172
      %p304 = pneg %p169
      %p305 = pneg %p193
      %p306 = pneg %p190
      %p307 = pneg %p219
      %p308 = pneg %p216
      %s309 = smul.u32 4, %s20
      %p310 = scmp.lt.s32.totalorder %s309, 7
      %s311 = scalar_select %p310, %s309, 7
      %s312 = smul.addr %s311, 8
      %s313 = scalar_lea.vmem %s8, %s312
      %s314 = smul.u32 32, %s20
      %p315 = scmp.lt.s32.totalorder %s314, 63
      %s316 = scalar_select %p315, %s314, 63
      %s317 = smul.addr %s316, 8
      %s318 = scalar_lea.vmem %s0, %s317
      %s319 = smul.u32 32, %s20
      %s320 = smul.u32 4, %s20
      %p321 = scmp.lt.s32.totalorder %s320, 7
      %s322 = scalar_select %p321, %s320, 7
      %s323 = smul.addr %s322, 8
      %s324 = scalar_lea.vmem %s1, %s323
      %s325 = smul.u32 4, %s20
      %s326 = smul.u32 4, %s20
      %p327 = scmp.lt.s32.totalorder %s326, 7
      %s328 = scalar_select %p327, %s326, 7
      %s329 = smul.addr %s328, 8
      %s330 = scalar_lea.vmem %s8, %s329
      %s331 = smul.u32 4, %s20
      %v332 = vld [vmem:[%s318] sm:$0xff]
      %v333 = vld [vmem:[%s318 + $0x8] sm:$0xff]
      %v334 = vld [vmem:[%s318 + $0x10] sm:$0xff]
      %v335 = vld [vmem:[%s318 + $0x18] sm:$0xff]
      %v336 = vld [vmem:[%s318 + $0x20] sm:$0xff]
      %v337 = vld [vmem:[%s318 + $0x28] sm:$0xff]
      %v338 = vld [vmem:[%s318 + $0x30] sm:$0xff]
      %v339 = vld [vmem:[%s318 + $0x38] sm:$0xff]
      %v340 = vld [vmem:[%s318 + $0x40] sm:$0xff]
      %v341 = vld [vmem:[%s318 + $0x48] sm:$0xff]
      %v342 = vld [vmem:[%s318 + $0x50] sm:$0xff]
      %v343 = vld [vmem:[%s318 + $0x58] sm:$0xff]
      %v344 = vld [vmem:[%s318 + $0x60] sm:$0xff]
      %v345 = vld [vmem:[%s318 + $0x68] sm:$0xff]
      %v346 = vld [vmem:[%s318 + $0x70] sm:$0xff]
      %v347 = vld [vmem:[%s318 + $0x78] sm:$0xff]
      %v348 = vld [vmem:[%s318 + $0x80] sm:$0xff]
      %v349 = vld [vmem:[%s318 + $0x88] sm:$0xff]
      %v350 = vld [vmem:[%s318 + $0x90] sm:$0xff]
      %v351 = vld [vmem:[%s318 + $0x98] sm:$0xff]
      %v352 = vld [vmem:[%s318 + $0xa0] sm:$0xff]
      %v353 = vld [vmem:[%s318 + $0xa8] sm:$0xff]
      %v354 = vld [vmem:[%s318 + $0xb0] sm:$0xff]
      %v355 = vld [vmem:[%s318 + $0xb8] sm:$0xff]
      %v356 = vld [vmem:[%s318 + $0xc0] sm:$0xff]
      %v357 = vld [vmem:[%s318 + $0xc8] sm:$0xff]
      %v358 = vld [vmem:[%s318 + $0xd0] sm:$0xff]
      %v359 = vld [vmem:[%s318 + $0xd8] sm:$0xff]
      %v360 = vld [vmem:[%s318 + $0xe0] sm:$0xff]
      %v361 = vld [vmem:[%s318 + $0xe8] sm:$0xff]
      %v362 = vld [vmem:[%s318 + $0xf0] sm:$0xff]
      %v363 = vld [vmem:[%s318 + $0xf8] sm:$0xff]
      %v364 = vlaneseq
      %v365 = vand.u32 %v364, 127
      %v366 = vadd.s32 %v365, 128
      %367 = vset.pattern.permute.xlu0 0
      %368 = vperm.xlu0 %367, %v332
      %v369 = vpop.permute.xlu0 %368
      %370 = vset.pattern.permute.xlu0 0
      %371 = vperm.xlu0 %370, %v333
      %v372 = vpop.permute.xlu0 %371
      %373 = vset.pattern.permute.xlu0 0
      %374 = vperm.xlu0 %373, %v334
      %v375 = vpop.permute.xlu0 %374
      %376 = vset.pattern.permute.xlu0 0
      %377 = vperm.xlu0 %376, %v335
      %v378 = vpop.permute.xlu0 %377
      %379 = vset.pattern.permute.xlu0 0
      %380 = vperm.xlu0 %379, %v336
      %v381 = vpop.permute.xlu0 %380
      %382 = vset.pattern.permute.xlu0 0
      %383 = vperm.xlu0 %382, %v337
      %v384 = vpop.permute.xlu0 %383
      %385 = vset.pattern.permute.xlu0 0
      %386 = vperm.xlu0 %385, %v338
      %v387 = vpop.permute.xlu0 %386
      %388 = vset.pattern.permute.xlu0 0
      %389 = vperm.xlu0 %388, %v339
      %v390 = vpop.permute.xlu0 %389
      %391 = vset.pattern.permute.xlu0 0
      %392 = vperm.xlu0 %391, %v340
      %v393 = vpop.permute.xlu0 %392
      %394 = vset.pattern.permute.xlu0 0
      %395 = vperm.xlu0 %394, %v341
      %v396 = vpop.permute.xlu0 %395
      %397 = vset.pattern.permute.xlu0 0
      %398 = vperm.xlu0 %397, %v342
      %v399 = vpop.permute.xlu0 %398
      %400 = vset.pattern.permute.xlu0 0
      %401 = vperm.xlu0 %400, %v343
      %v402 = vpop.permute.xlu0 %401
      %403 = vset.pattern.permute.xlu0 0
      %404 = vperm.xlu0 %403, %v344
      %v405 = vpop.permute.xlu0 %404
      %406 = vset.pattern.permute.xlu0 0
      %407 = vperm.xlu0 %406, %v345
      %v408 = vpop.permute.xlu0 %407
      %409 = vset.pattern.permute.xlu0 0
      %410 = vperm.xlu0 %409, %v346
      %v411 = vpop.permute.xlu0 %410
      %412 = vset.pattern.permute.xlu0 0
      %413 = vperm.xlu0 %412, %v347
      %v414 = vpop.permute.xlu0 %413
      %415 = vset.pattern.permute.xlu0 0
      %416 = vperm.xlu0 %415, %v348
      %v417 = vpop.permute.xlu0 %416
      %418 = vset.pattern.permute.xlu0 0
      %419 = vperm.xlu0 %418, %v349
      %v420 = vpop.permute.xlu0 %419
      %421 = vset.pattern.permute.xlu0 0
      %422 = vperm.xlu0 %421, %v350
      %v423 = vpop.permute.xlu0 %422
      %424 = vset.pattern.permute.xlu0 0
      %425 = vperm.xlu0 %424, %v351
      %v426 = vpop.permute.xlu0 %425
      %427 = vset.pattern.permute.xlu0 0
      %428 = vperm.xlu0 %427, %v352
      %v429 = vpop.permute.xlu0 %428
      %430 = vset.pattern.permute.xlu0 0
      %431 = vperm.xlu0 %430, %v353
      %v432 = vpop.permute.xlu0 %431
      %433 = vset.pattern.permute.xlu0 0
      %434 = vperm.xlu0 %433, %v354
      %v435 = vpop.permute.xlu0 %434
      %436 = vset.pattern.permute.xlu0 0
      %437 = vperm.xlu0 %436, %v355
      %v438 = vpop.permute.xlu0 %437
      %439 = vset.pattern.permute.xlu0 0
      %440 = vperm.xlu0 %439, %v356
      %v441 = vpop.permute.xlu0 %440
      %442 = vset.pattern.permute.xlu0 0
      %443 = vperm.xlu0 %442, %v357
      %v444 = vpop.permute.xlu0 %443
      %445 = vset.pattern.permute.xlu0 0
      %446 = vperm.xlu0 %445, %v358
      %v447 = vpop.permute.xlu0 %446
      %448 = vset.pattern.permute.xlu0 0
      %449 = vperm.xlu0 %448, %v359
      %v450 = vpop.permute.xlu0 %449
      %451 = vset.pattern.permute.xlu0 0
      %452 = vperm.xlu0 %451, %v360
      %v453 = vpop.permute.xlu0 %452
      %454 = vset.pattern.permute.xlu0 0
      %455 = vperm.xlu0 %454, %v361
      %v456 = vpop.permute.xlu0 %455
      %457 = vset.pattern.permute.xlu0 0
      %458 = vperm.xlu0 %457, %v362
      %v459 = vpop.permute.xlu0 %458
      %460 = vset.pattern.permute.xlu0 0
      %461 = vperm.xlu0 %460, %v363
      %v462 = vpop.permute.xlu0 %461
      %vm463 = vcmp.eq.s32.totalorder %v365, %v369
      %vm464 = vcmp.eq.s32.totalorder %v366, %v369
      %vm465 = vcmp.eq.s32.totalorder %v365, %v372
      %vm466 = vcmp.eq.s32.totalorder %v366, %v372
      %vm467 = vcmp.eq.s32.totalorder %v365, %v375
      %vm468 = vcmp.eq.s32.totalorder %v366, %v375
      %vm469 = vcmp.eq.s32.totalorder %v365, %v378
      %vm470 = vcmp.eq.s32.totalorder %v366, %v378
      %vm471 = vcmp.eq.s32.totalorder %v365, %v381
      %vm472 = vcmp.eq.s32.totalorder %v366, %v381
      %vm473 = vcmp.eq.s32.totalorder %v365, %v384
      %vm474 = vcmp.eq.s32.totalorder %v366, %v384
      %vm475 = vcmp.eq.s32.totalorder %v365, %v387
      %vm476 = vcmp.eq.s32.totalorder %v366, %v387
      %vm477 = vcmp.eq.s32.totalorder %v365, %v390
      %vm478 = vcmp.eq.s32.totalorder %v366, %v390
      %vm479 = vcmp.eq.s32.totalorder %v365, %v393
      %vm480 = vcmp.eq.s32.totalorder %v366, %v393
      %vm481 = vcmp.eq.s32.totalorder %v365, %v396
      %vm482 = vcmp.eq.s32.totalorder %v366, %v396
      %vm483 = vcmp.eq.s32.totalorder %v365, %v399
      %vm484 = vcmp.eq.s32.totalorder %v366, %v399
      %vm485 = vcmp.eq.s32.totalorder %v365, %v402
      %vm486 = vcmp.eq.s32.totalorder %v366, %v402
      %vm487 = vcmp.eq.s32.totalorder %v365, %v405
      %vm488 = vcmp.eq.s32.totalorder %v366, %v405
      %vm489 = vcmp.eq.s32.totalorder %v365, %v408
      %vm490 = vcmp.eq.s32.totalorder %v366, %v408
      %vm491 = vcmp.eq.s32.totalorder %v365, %v411
      %vm492 = vcmp.eq.s32.totalorder %v366, %v411
      %vm493 = vcmp.eq.s32.totalorder %v365, %v414
      %vm494 = vcmp.eq.s32.totalorder %v366, %v414
      %vm495 = vcmp.eq.s32.totalorder %v365, %v417
      %vm496 = vcmp.eq.s32.totalorder %v366, %v417
      %vm497 = vcmp.eq.s32.totalorder %v365, %v420
      %vm498 = vcmp.eq.s32.totalorder %v366, %v420
      %vm499 = vcmp.eq.s32.totalorder %v365, %v423
      %vm500 = vcmp.eq.s32.totalorder %v366, %v423
      %vm501 = vcmp.eq.s32.totalorder %v365, %v426
      %vm502 = vcmp.eq.s32.totalorder %v366, %v426
      %vm503 = vcmp.eq.s32.totalorder %v365, %v429
      %vm504 = vcmp.eq.s32.totalorder %v366, %v429
      %vm505 = vcmp.eq.s32.totalorder %v365, %v432
      %vm506 = vcmp.eq.s32.totalorder %v366, %v432
      %vm507 = vcmp.eq.s32.totalorder %v365, %v435
      %vm508 = vcmp.eq.s32.totalorder %v366, %v435
      %vm509 = vcmp.eq.s32.totalorder %v365, %v438
      %vm510 = vcmp.eq.s32.totalorder %v366, %v438
      %vm511 = vcmp.eq.s32.totalorder %v365, %v441
      %vm512 = vcmp.eq.s32.totalorder %v366, %v441
      %vm513 = vcmp.eq.s32.totalorder %v365, %v444
      %vm514 = vcmp.eq.s32.totalorder %v366, %v444
      %vm515 = vcmp.eq.s32.totalorder %v365, %v447
      %vm516 = vcmp.eq.s32.totalorder %v366, %v447
      %vm517 = vcmp.eq.s32.totalorder %v365, %v450
      %vm518 = vcmp.eq.s32.totalorder %v366, %v450
      %vm519 = vcmp.eq.s32.totalorder %v365, %v453
      %vm520 = vcmp.eq.s32.totalorder %v366, %v453
      %vm521 = vcmp.eq.s32.totalorder %v365, %v456
      %vm522 = vcmp.eq.s32.totalorder %v366, %v456
      %vm523 = vcmp.eq.s32.totalorder %v365, %v459
      %vm524 = vcmp.eq.s32.totalorder %v366, %v459
      %vm525 = vcmp.eq.s32.totalorder %v365, %v462
      %vm526 = vcmp.eq.s32.totalorder %v366, %v462
      %v527 = vsel %vm463, 1, 0
      %v528 = vsel %vm464, 1, 0
      %v529 = vsel %vm465, 1, 0
      %v530 = vsel %vm466, 1, 0
      %v531 = vsel %vm467, 1, 0
      %v532 = vsel %vm468, 1, 0
      %v533 = vsel %vm469, 1, 0
      %v534 = vsel %vm470, 1, 0
      %v535 = vsel %vm471, 1, 0
      %v536 = vsel %vm472, 1, 0
      %v537 = vsel %vm473, 1, 0
      %v538 = vsel %vm474, 1, 0
      %v539 = vsel %vm475, 1, 0
      %v540 = vsel %vm476, 1, 0
      %v541 = vsel %vm477, 1, 0
      %v542 = vsel %vm478, 1, 0
      %v543 = vsel %vm479, 1, 0
      %v544 = vsel %vm480, 1, 0
      %v545 = vsel %vm481, 1, 0
      %v546 = vsel %vm482, 1, 0
      %v547 = vsel %vm483, 1, 0
      %v548 = vsel %vm484, 1, 0
      %v549 = vsel %vm485, 1, 0
      %v550 = vsel %vm486, 1, 0
      %v551 = vsel %vm487, 1, 0
      %v552 = vsel %vm488, 1, 0
      %v553 = vsel %vm489, 1, 0
      %v554 = vsel %vm490, 1, 0
      %v555 = vsel %vm491, 1, 0
      %v556 = vsel %vm492, 1, 0
      %v557 = vsel %vm493, 1, 0
      %v558 = vsel %vm494, 1, 0
      %v559 = vsel %vm495, 1, 0
      %v560 = vsel %vm496, 1, 0
      %v561 = vsel %vm497, 1, 0
      %v562 = vsel %vm498, 1, 0
      %v563 = vsel %vm499, 1, 0
      %v564 = vsel %vm500, 1, 0
      %v565 = vsel %vm501, 1, 0
      %v566 = vsel %vm502, 1, 0
      %v567 = vsel %vm503, 1, 0
      %v568 = vsel %vm504, 1, 0
      %v569 = vsel %vm505, 1, 0
      %v570 = vsel %vm506, 1, 0
      %v571 = vsel %vm507, 1, 0
      %v572 = vsel %vm508, 1, 0
      %v573 = vsel %vm509, 1, 0
      %v574 = vsel %vm510, 1, 0
      %v575 = vsel %vm511, 1, 0
      %v576 = vsel %vm512, 1, 0
      %v577 = vsel %vm513, 1, 0
      %v578 = vsel %vm514, 1, 0
      %v579 = vsel %vm515, 1, 0
      %v580 = vsel %vm516, 1, 0
      %v581 = vsel %vm517, 1, 0
      %v582 = vsel %vm518, 1, 0
      %v583 = vsel %vm519, 1, 0
      %v584 = vsel %vm520, 1, 0
      %v585 = vsel %vm521, 1, 0
      %v586 = vsel %vm522, 1, 0
      %v587 = vsel %vm523, 1, 0
      %v588 = vsel %vm524, 1, 0
      %v589 = vsel %vm525, 1, 0
      %v590 = vsel %vm526, 1, 0
      %v591 = vcvt.s32.f32 %v527
      %v592 = vcvt.s32.f32 %v528
      %v593 = vcvt.s32.f32 %v529
      %v594 = vcvt.s32.f32 %v530
      %v595 = vcvt.s32.f32 %v531
      %v596 = vcvt.s32.f32 %v532
      %v597 = vcvt.s32.f32 %v533
      %v598 = vcvt.s32.f32 %v534
      %v599 = vcvt.s32.f32 %v535
      %v600 = vcvt.s32.f32 %v536
      %v601 = vcvt.s32.f32 %v537
      %v602 = vcvt.s32.f32 %v538
      %v603 = vcvt.s32.f32 %v539
      %v604 = vcvt.s32.f32 %v540
      %v605 = vcvt.s32.f32 %v541
      %v606 = vcvt.s32.f32 %v542
      %v607 = vcvt.s32.f32 %v543
      %v608 = vcvt.s32.f32 %v544
      %v609 = vcvt.s32.f32 %v545
      %v610 = vcvt.s32.f32 %v546
      %v611 = vcvt.s32.f32 %v547
      %v612 = vcvt.s32.f32 %v548
      %v613 = vcvt.s32.f32 %v549
      %v614 = vcvt.s32.f32 %v550
      %v615 = vcvt.s32.f32 %v551
      %v616 = vcvt.s32.f32 %v552
      %v617 = vcvt.s32.f32 %v553
      %v618 = vcvt.s32.f32 %v554
      %v619 = vcvt.s32.f32 %v555
      %v620 = vcvt.s32.f32 %v556
      %v621 = vcvt.s32.f32 %v557
      %v622 = vcvt.s32.f32 %v558
      %v623 = vcvt.s32.f32 %v559
      %v624 = vcvt.s32.f32 %v560
      %v625 = vcvt.s32.f32 %v561
      %v626 = vcvt.s32.f32 %v562
      %v627 = vcvt.s32.f32 %v563
      %v628 = vcvt.s32.f32 %v564
      %v629 = vcvt.s32.f32 %v565
      %v630 = vcvt.s32.f32 %v566
      %v631 = vcvt.s32.f32 %v567
      %v632 = vcvt.s32.f32 %v568
      %v633 = vcvt.s32.f32 %v569
      %v634 = vcvt.s32.f32 %v570
      %v635 = vcvt.s32.f32 %v571
      %v636 = vcvt.s32.f32 %v572
      %v637 = vcvt.s32.f32 %v573
      %v638 = vcvt.s32.f32 %v574
      %v639 = vcvt.s32.f32 %v575
      %v640 = vcvt.s32.f32 %v576
      %v641 = vcvt.s32.f32 %v577
      %v642 = vcvt.s32.f32 %v578
      %v643 = vcvt.s32.f32 %v579
      %v644 = vcvt.s32.f32 %v580
      %v645 = vcvt.s32.f32 %v581
      %v646 = vcvt.s32.f32 %v582
      %v647 = vcvt.s32.f32 %v583
      %v648 = vcvt.s32.f32 %v584
      %v649 = vcvt.s32.f32 %v585
      %v650 = vcvt.s32.f32 %v586
      %v651 = vcvt.s32.f32 %v587
      %v652 = vcvt.s32.f32 %v588
      %v653 = vcvt.s32.f32 %v589
      %v654 = vcvt.s32.f32 %v590
      %655 = vset.pattern.permute.xlu0 1
      %656 = vperm.xlu0 %655, %v332
      %v657 = vpop.permute.xlu0 %656
      %658 = vset.pattern.permute.xlu0 1
      %659 = vperm.xlu0 %658, %v333
      %v660 = vpop.permute.xlu0 %659
      %661 = vset.pattern.permute.xlu0 1
      %662 = vperm.xlu0 %661, %v334
      %v663 = vpop.permute.xlu0 %662
      %664 = vset.pattern.permute.xlu0 1
      %665 = vperm.xlu0 %664, %v335
      %v666 = vpop.permute.xlu0 %665
      %667 = vset.pattern.permute.xlu0 1
      %668 = vperm.xlu0 %667, %v336
      %v669 = vpop.permute.xlu0 %668
      %670 = vset.pattern.permute.xlu0 1
      %671 = vperm.xlu0 %670, %v337
      %v672 = vpop.permute.xlu0 %671
      %673 = vset.pattern.permute.xlu0 1
      %674 = vperm.xlu0 %673, %v338
      %v675 = vpop.permute.xlu0 %674
      %676 = vset.pattern.permute.xlu0 1
      %677 = vperm.xlu0 %676, %v339
      %v678 = vpop.permute.xlu0 %677
      %679 = vset.pattern.permute.xlu0 1
      %680 = vperm.xlu0 %679, %v340
      %v681 = vpop.permute.xlu0 %680
      %682 = vset.pattern.permute.xlu0 1
      %683 = vperm.xlu0 %682, %v341
      %v684 = vpop.permute.xlu0 %683
      %685 = vset.pattern.permute.xlu0 1
      %686 = vperm.xlu0 %685, %v342
      %v687 = vpop.permute.xlu0 %686
      %688 = vset.pattern.permute.xlu0 1
      %689 = vperm.xlu0 %688, %v343
      %v690 = vpop.permute.xlu0 %689
      %691 = vset.pattern.permute.xlu0 1
      %692 = vperm.xlu0 %691, %v344
      %v693 = vpop.permute.xlu0 %692
      %694 = vset.pattern.permute.xlu0 1
      %695 = vperm.xlu0 %694, %v345
      %v696 = vpop.permute.xlu0 %695
      %697 = vset.pattern.permute.xlu0 1
      %698 = vperm.xlu0 %697, %v346
      %v699 = vpop.permute.xlu0 %698
      %700 = vset.pattern.permute.xlu0 1
      %701 = vperm.xlu0 %700, %v347
      %v702 = vpop.permute.xlu0 %701
      %703 = vset.pattern.permute.xlu0 1
      %704 = vperm.xlu0 %703, %v348
      %v705 = vpop.permute.xlu0 %704
      %706 = vset.pattern.permute.xlu0 1
      %707 = vperm.xlu0 %706, %v349
      %v708 = vpop.permute.xlu0 %707
      %709 = vset.pattern.permute.xlu0 1
      %710 = vperm.xlu0 %709, %v350
      %v711 = vpop.permute.xlu0 %710
      %712 = vset.pattern.permute.xlu0 1
      %713 = vperm.xlu0 %712, %v351
      %v714 = vpop.permute.xlu0 %713
      %715 = vset.pattern.permute.xlu0 1
      %716 = vperm.xlu0 %715, %v352
      %v717 = vpop.permute.xlu0 %716
      %718 = vset.pattern.permute.xlu0 1
      %719 = vperm.xlu0 %718, %v353
      %v720 = vpop.permute.xlu0 %719
      %721 = vset.pattern.permute.xlu0 1
      %722 = vperm.xlu0 %721, %v354
      %v723 = vpop.permute.xlu0 %722
      %724 = vset.pattern.permute.xlu0 1
      %725 = vperm.xlu0 %724, %v355
      %v726 = vpop.permute.xlu0 %725
      %727 = vset.pattern.permute.xlu0 1
      %728 = vperm.xlu0 %727, %v356
      %v729 = vpop.permute.xlu0 %728
      %730 = vset.pattern.permute.xlu0 1
      %731 = vperm.xlu0 %730, %v357
      %v732 = vpop.permute.xlu0 %731
      %733 = vset.pattern.permute.xlu0 1
      %734 = vperm.xlu0 %733, %v358
      %v735 = vpop.permute.xlu0 %734
      %736 = vset.pattern.permute.xlu0 1
      %737 = vperm.xlu0 %736, %v359
      %v738 = vpop.permute.xlu0 %737
      %739 = vset.pattern.permute.xlu0 1
      %740 = vperm.xlu0 %739, %v360
      %v741 = vpop.permute.xlu0 %740
      %742 = vset.pattern.permute.xlu0 1
      %743 = vperm.xlu0 %742, %v361
      %v744 = vpop.permute.xlu0 %743
      %745 = vset.pattern.permute.xlu0 1
      %746 = vperm.xlu0 %745, %v362
      %v747 = vpop.permute.xlu0 %746
      %748 = vset.pattern.permute.xlu0 1
      %749 = vperm.xlu0 %748, %v363
      %v750 = vpop.permute.xlu0 %749
      %vm751 = vcmp.eq.s32.totalorder %v365, %v657
      %vm752 = vcmp.eq.s32.totalorder %v366, %v657
      %vm753 = vcmp.eq.s32.totalorder %v365, %v660
      %vm754 = vcmp.eq.s32.totalorder %v366, %v660
      %vm755 = vcmp.eq.s32.totalorder %v365, %v663
      %vm756 = vcmp.eq.s32.totalorder %v366, %v663
      %vm757 = vcmp.eq.s32.totalorder %v365, %v666
      %vm758 = vcmp.eq.s32.totalorder %v366, %v666
      %vm759 = vcmp.eq.s32.totalorder %v365, %v669
      %vm760 = vcmp.eq.s32.totalorder %v366, %v669
      %vm761 = vcmp.eq.s32.totalorder %v365, %v672
      %vm762 = vcmp.eq.s32.totalorder %v366, %v672
      %vm763 = vcmp.eq.s32.totalorder %v365, %v675
      %vm764 = vcmp.eq.s32.totalorder %v366, %v675
      %vm765 = vcmp.eq.s32.totalorder %v365, %v678
      %vm766 = vcmp.eq.s32.totalorder %v366, %v678
      %vm767 = vcmp.eq.s32.totalorder %v365, %v681
      %vm768 = vcmp.eq.s32.totalorder %v366, %v681
      %vm769 = vcmp.eq.s32.totalorder %v365, %v684
      %vm770 = vcmp.eq.s32.totalorder %v366, %v684
      %vm771 = vcmp.eq.s32.totalorder %v365, %v687
      %vm772 = vcmp.eq.s32.totalorder %v366, %v687
      %vm773 = vcmp.eq.s32.totalorder %v365, %v690
      %vm774 = vcmp.eq.s32.totalorder %v366, %v690
      %vm775 = vcmp.eq.s32.totalorder %v365, %v693
      %vm776 = vcmp.eq.s32.totalorder %v366, %v693
      %vm777 = vcmp.eq.s32.totalorder %v365, %v696
      %vm778 = vcmp.eq.s32.totalorder %v366, %v696
      %vm779 = vcmp.eq.s32.totalorder %v365, %v699
      %vm780 = vcmp.eq.s32.totalorder %v366, %v699
      %vm781 = vcmp.eq.s32.totalorder %v365, %v702
      %vm782 = vcmp.eq.s32.totalorder %v366, %v702
      %vm783 = vcmp.eq.s32.totalorder %v365, %v705
      %vm784 = vcmp.eq.s32.totalorder %v366, %v705
      %vm785 = vcmp.eq.s32.totalorder %v365, %v708
      %vm786 = vcmp.eq.s32.totalorder %v366, %v708
      %vm787 = vcmp.eq.s32.totalorder %v365, %v711
      %vm788 = vcmp.eq.s32.totalorder %v366, %v711
      %vm789 = vcmp.eq.s32.totalorder %v365, %v714
      %vm790 = vcmp.eq.s32.totalorder %v366, %v714
      %vm791 = vcmp.eq.s32.totalorder %v365, %v717
      %vm792 = vcmp.eq.s32.totalorder %v366, %v717
      %vm793 = vcmp.eq.s32.totalorder %v365, %v720
      %vm794 = vcmp.eq.s32.totalorder %v366, %v720
      %vm795 = vcmp.eq.s32.totalorder %v365, %v723
      %vm796 = vcmp.eq.s32.totalorder %v366, %v723
      %vm797 = vcmp.eq.s32.totalorder %v365, %v726
      %vm798 = vcmp.eq.s32.totalorder %v366, %v726
      %vm799 = vcmp.eq.s32.totalorder %v365, %v729
      %vm800 = vcmp.eq.s32.totalorder %v366, %v729
      %vm801 = vcmp.eq.s32.totalorder %v365, %v732
      %vm802 = vcmp.eq.s32.totalorder %v366, %v732
      %vm803 = vcmp.eq.s32.totalorder %v365, %v735
      %vm804 = vcmp.eq.s32.totalorder %v366, %v735
      %vm805 = vcmp.eq.s32.totalorder %v365, %v738
      %vm806 = vcmp.eq.s32.totalorder %v366, %v738
      %vm807 = vcmp.eq.s32.totalorder %v365, %v741
      %vm808 = vcmp.eq.s32.totalorder %v366, %v741
      %vm809 = vcmp.eq.s32.totalorder %v365, %v744
      %vm810 = vcmp.eq.s32.totalorder %v366, %v744
      %vm811 = vcmp.eq.s32.totalorder %v365, %v747
      %vm812 = vcmp.eq.s32.totalorder %v366, %v747
      %vm813 = vcmp.eq.s32.totalorder %v365, %v750
      %vm814 = vcmp.eq.s32.totalorder %v366, %v750
      %v815 = vsel %vm751, 1, 0
      %v816 = vsel %vm752, 1, 0
      %v817 = vsel %vm753, 1, 0
      %v818 = vsel %vm754, 1, 0
      %v819 = vsel %vm755, 1, 0
      %v820 = vsel %vm756, 1, 0
      %v821 = vsel %vm757, 1, 0
      %v822 = vsel %vm758, 1, 0
      %v823 = vsel %vm759, 1, 0
      %v824 = vsel %vm760, 1, 0
      %v825 = vsel %vm761, 1, 0
      %v826 = vsel %vm762, 1, 0
      %v827 = vsel %vm763, 1, 0
      %v828 = vsel %vm764, 1, 0
      %v829 = vsel %vm765, 1, 0
      %v830 = vsel %vm766, 1, 0
      %v831 = vsel %vm767, 1, 0
      %v832 = vsel %vm768, 1, 0
      %v833 = vsel %vm769, 1, 0
      %v834 = vsel %vm770, 1, 0
      %v835 = vsel %vm771, 1, 0
      %v836 = vsel %vm772, 1, 0
      %v837 = vsel %vm773, 1, 0
      %v838 = vsel %vm774, 1, 0
      %v839 = vsel %vm775, 1, 0
      %v840 = vsel %vm776, 1, 0
      %v841 = vsel %vm777, 1, 0
      %v842 = vsel %vm778, 1, 0
      %v843 = vsel %vm779, 1, 0
      %v844 = vsel %vm780, 1, 0
      %v845 = vsel %vm781, 1, 0
      %v846 = vsel %vm782, 1, 0
      %v847 = vsel %vm783, 1, 0
      %v848 = vsel %vm784, 1, 0
      %v849 = vsel %vm785, 1, 0
      %v850 = vsel %vm786, 1, 0
      %v851 = vsel %vm787, 1, 0
      %v852 = vsel %vm788, 1, 0
      %v853 = vsel %vm789, 1, 0
      %v854 = vsel %vm790, 1, 0
      %v855 = vsel %vm791, 1, 0
      %v856 = vsel %vm792, 1, 0
      %v857 = vsel %vm793, 1, 0
      %v858 = vsel %vm794, 1, 0
      %v859 = vsel %vm795, 1, 0
      %v860 = vsel %vm796, 1, 0
      %v861 = vsel %vm797, 1, 0
      %v862 = vsel %vm798, 1, 0
      %v863 = vsel %vm799, 1, 0
      %v864 = vsel %vm800, 1, 0
      %v865 = vsel %vm801, 1, 0
      %v866 = vsel %vm802, 1, 0
      %v867 = vsel %vm803, 1, 0
      %v868 = vsel %vm804, 1, 0
      %v869 = vsel %vm805, 1, 0
      %v870 = vsel %vm806, 1, 0
      %v871 = vsel %vm807, 1, 0
      %v872 = vsel %vm808, 1, 0
      %v873 = vsel %vm809, 1, 0
      %v874 = vsel %vm810, 1, 0
      %v875 = vsel %vm811, 1, 0
      %v876 = vsel %vm812, 1, 0
      %v877 = vsel %vm813, 1, 0
      %v878 = vsel %vm814, 1, 0
      %v879 = vcvt.s32.f32 %v815
      %v880 = vcvt.s32.f32 %v816
      %v881 = vcvt.s32.f32 %v817
      %v882 = vcvt.s32.f32 %v818
      %v883 = vcvt.s32.f32 %v819
      %v884 = vcvt.s32.f32 %v820
      %v885 = vcvt.s32.f32 %v821
      %v886 = vcvt.s32.f32 %v822
      %v887 = vcvt.s32.f32 %v823
      %v888 = vcvt.s32.f32 %v824
      %v889 = vcvt.s32.f32 %v825
      %v890 = vcvt.s32.f32 %v826
      %v891 = vcvt.s32.f32 %v827
      %v892 = vcvt.s32.f32 %v828
      %v893 = vcvt.s32.f32 %v829
      %v894 = vcvt.s32.f32 %v830
      %v895 = vcvt.s32.f32 %v831
      %v896 = vcvt.s32.f32 %v832
      %v897 = vcvt.s32.f32 %v833
      %v898 = vcvt.s32.f32 %v834
      %v899 = vcvt.s32.f32 %v835
      %v900 = vcvt.s32.f32 %v836
      %v901 = vcvt.s32.f32 %v837
      %v902 = vcvt.s32.f32 %v838
      %v903 = vcvt.s32.f32 %v839
      %v904 = vcvt.s32.f32 %v840
      %v905 = vcvt.s32.f32 %v841
      %v906 = vcvt.s32.f32 %v842
      %v907 = vcvt.s32.f32 %v843
      %v908 = vcvt.s32.f32 %v844
      %v909 = vcvt.s32.f32 %v845
      %v910 = vcvt.s32.f32 %v846
      %v911 = vcvt.s32.f32 %v847
      %v912 = vcvt.s32.f32 %v848
      %v913 = vcvt.s32.f32 %v849
      %v914 = vcvt.s32.f32 %v850
      %v915 = vcvt.s32.f32 %v851
      %v916 = vcvt.s32.f32 %v852
      %v917 = vcvt.s32.f32 %v853
      %v918 = vcvt.s32.f32 %v854
      %v919 = vcvt.s32.f32 %v855
      %v920 = vcvt.s32.f32 %v856
      %v921 = vcvt.s32.f32 %v857
      %v922 = vcvt.s32.f32 %v858
      %v923 = vcvt.s32.f32 %v859
      %v924 = vcvt.s32.f32 %v860
      %v925 = vcvt.s32.f32 %v861
      %v926 = vcvt.s32.f32 %v862
      %v927 = vcvt.s32.f32 %v863
      %v928 = vcvt.s32.f32 %v864
      %v929 = vcvt.s32.f32 %v865
      %v930 = vcvt.s32.f32 %v866
      %v931 = vcvt.s32.f32 %v867
      %v932 = vcvt.s32.f32 %v868
      %v933 = vcvt.s32.f32 %v869
      %v934 = vcvt.s32.f32 %v870
      %v935 = vcvt.s32.f32 %v871
      %v936 = vcvt.s32.f32 %v872
      %v937 = vcvt.s32.f32 %v873
      %v938 = vcvt.s32.f32 %v874
      %v939 = vcvt.s32.f32 %v875
      %v940 = vcvt.s32.f32 %v876
      %v941 = vcvt.s32.f32 %v877
      %v942 = vcvt.s32.f32 %v878
      %v943 = vadd.f32 %v591, %v879
      %v944 = vadd.f32 %v592, %v880
      %v945 = vadd.f32 %v593, %v881
      %v946 = vadd.f32 %v594, %v882
      %v947 = vadd.f32 %v595, %v883
      %v948 = vadd.f32 %v596, %v884
      %v949 = vadd.f32 %v597, %v885
      %v950 = vadd.f32 %v598, %v886
      %v951 = vadd.f32 %v599, %v887
      %v952 = vadd.f32 %v600, %v888
      %v953 = vadd.f32 %v601, %v889
      %v954 = vadd.f32 %v602, %v890
      %v955 = vadd.f32 %v603, %v891
      %v956 = vadd.f32 %v604, %v892
      %v957 = vadd.f32 %v605, %v893
      %v958 = vadd.f32 %v606, %v894
      %v959 = vadd.f32 %v607, %v895
      %v960 = vadd.f32 %v608, %v896
      %v961 = vadd.f32 %v609, %v897
      %v962 = vadd.f32 %v610, %v898
      %v963 = vadd.f32 %v611, %v899
      %v964 = vadd.f32 %v612, %v900
      %v965 = vadd.f32 %v613, %v901
      %v966 = vadd.f32 %v614, %v902
      %v967 = vadd.f32 %v615, %v903
      %v968 = vadd.f32 %v616, %v904
      %v969 = vadd.f32 %v617, %v905
      %v970 = vadd.f32 %v618, %v906
      %v971 = vadd.f32 %v619, %v907
      %v972 = vadd.f32 %v620, %v908
      %v973 = vadd.f32 %v621, %v909
      %v974 = vadd.f32 %v622, %v910
      %v975 = vadd.f32 %v623, %v911
      %v976 = vadd.f32 %v624, %v912
      %v977 = vadd.f32 %v625, %v913
      %v978 = vadd.f32 %v626, %v914
      %v979 = vadd.f32 %v627, %v915
      %v980 = vadd.f32 %v628, %v916
      %v981 = vadd.f32 %v629, %v917
      %v982 = vadd.f32 %v630, %v918
      %v983 = vadd.f32 %v631, %v919
      %v984 = vadd.f32 %v632, %v920
      %v985 = vadd.f32 %v633, %v921
      %v986 = vadd.f32 %v634, %v922
      %v987 = vadd.f32 %v635, %v923
      %v988 = vadd.f32 %v636, %v924
      %v989 = vadd.f32 %v637, %v925
      %v990 = vadd.f32 %v638, %v926
      %v991 = vadd.f32 %v639, %v927
      %v992 = vadd.f32 %v640, %v928
      %v993 = vadd.f32 %v641, %v929
      %v994 = vadd.f32 %v642, %v930
      %v995 = vadd.f32 %v643, %v931
      %v996 = vadd.f32 %v644, %v932
      %v997 = vadd.f32 %v645, %v933
      %v998 = vadd.f32 %v646, %v934
      %v999 = vadd.f32 %v647, %v935
      %v1000 = vadd.f32 %v648, %v936
      %v1001 = vadd.f32 %v649, %v937
      %v1002 = vadd.f32 %v650, %v938
      %v1003 = vadd.f32 %v651, %v939
      %v1004 = vadd.f32 %v652, %v940
      %v1005 = vadd.f32 %v653, %v941
      %v1006 = vadd.f32 %v654, %v942
      %1007 = vset.pattern.permute.xlu0 2
      %1008 = vperm.xlu0 %1007, %v332
      %v1009 = vpop.permute.xlu0 %1008
      %1010 = vset.pattern.permute.xlu0 2
      %1011 = vperm.xlu0 %1010, %v333
      %v1012 = vpop.permute.xlu0 %1011
      %1013 = vset.pattern.permute.xlu0 2
      %1014 = vperm.xlu0 %1013, %v334
      %v1015 = vpop.permute.xlu0 %1014
      %1016 = vset.pattern.permute.xlu0 2
      %1017 = vperm.xlu0 %1016, %v335
      %v1018 = vpop.permute.xlu0 %1017
      %1019 = vset.pattern.permute.xlu0 2
      %1020 = vperm.xlu0 %1019, %v336
      %v1021 = vpop.permute.xlu0 %1020
      %1022 = vset.pattern.permute.xlu0 2
      %1023 = vperm.xlu0 %1022, %v337
      %v1024 = vpop.permute.xlu0 %1023
      %1025 = vset.pattern.permute.xlu0 2
      %1026 = vperm.xlu0 %1025, %v338
      %v1027 = vpop.permute.xlu0 %1026
      %1028 = vset.pattern.permute.xlu0 2
      %1029 = vperm.xlu0 %1028, %v339
      %v1030 = vpop.permute.xlu0 %1029
      %1031 = vset.pattern.permute.xlu0 2
      %1032 = vperm.xlu0 %1031, %v340
      %v1033 = vpop.permute.xlu0 %1032
      %1034 = vset.pattern.permute.xlu0 2
      %1035 = vperm.xlu0 %1034, %v341
      %v1036 = vpop.permute.xlu0 %1035
      %1037 = vset.pattern.permute.xlu0 2
      %1038 = vperm.xlu0 %1037, %v342
      %v1039 = vpop.permute.xlu0 %1038
      %1040 = vset.pattern.permute.xlu0 2
      %1041 = vperm.xlu0 %1040, %v343
      %v1042 = vpop.permute.xlu0 %1041
      %1043 = vset.pattern.permute.xlu0 2
      %1044 = vperm.xlu0 %1043, %v344
      %v1045 = vpop.permute.xlu0 %1044
      %1046 = vset.pattern.permute.xlu0 2
      %1047 = vperm.xlu0 %1046, %v345
      %v1048 = vpop.permute.xlu0 %1047
      %1049 = vset.pattern.permute.xlu0 2
      %1050 = vperm.xlu0 %1049, %v346
      %v1051 = vpop.permute.xlu0 %1050
      %1052 = vset.pattern.permute.xlu0 2
      %1053 = vperm.xlu0 %1052, %v347
      %v1054 = vpop.permute.xlu0 %1053
      %1055 = vset.pattern.permute.xlu0 2
      %1056 = vperm.xlu0 %1055, %v348
      %v1057 = vpop.permute.xlu0 %1056
      %1058 = vset.pattern.permute.xlu0 2
      %1059 = vperm.xlu0 %1058, %v349
      %v1060 = vpop.permute.xlu0 %1059
      %1061 = vset.pattern.permute.xlu0 2
      %1062 = vperm.xlu0 %1061, %v350
      %v1063 = vpop.permute.xlu0 %1062
      %1064 = vset.pattern.permute.xlu0 2
      %1065 = vperm.xlu0 %1064, %v351
      %v1066 = vpop.permute.xlu0 %1065
      %1067 = vset.pattern.permute.xlu0 2
      %1068 = vperm.xlu0 %1067, %v352
      %v1069 = vpop.permute.xlu0 %1068
      %1070 = vset.pattern.permute.xlu0 2
      %1071 = vperm.xlu0 %1070, %v353
      %v1072 = vpop.permute.xlu0 %1071
      %1073 = vset.pattern.permute.xlu0 2
      %1074 = vperm.xlu0 %1073, %v354
      %v1075 = vpop.permute.xlu0 %1074
      %1076 = vset.pattern.permute.xlu0 2
      %1077 = vperm.xlu0 %1076, %v355
      %v1078 = vpop.permute.xlu0 %1077
      %1079 = vset.pattern.permute.xlu0 2
      %1080 = vperm.xlu0 %1079, %v356
      %v1081 = vpop.permute.xlu0 %1080
      %1082 = vset.pattern.permute.xlu0 2
      %1083 = vperm.xlu0 %1082, %v357
      %v1084 = vpop.permute.xlu0 %1083
      %1085 = vset.pattern.permute.xlu0 2
      %1086 = vperm.xlu0 %1085, %v358
      %v1087 = vpop.permute.xlu0 %1086
      %1088 = vset.pattern.permute.xlu0 2
      %1089 = vperm.xlu0 %1088, %v359
      %v1090 = vpop.permute.xlu0 %1089
      %1091 = vset.pattern.permute.xlu0 2
      %1092 = vperm.xlu0 %1091, %v360
      %v1093 = vpop.permute.xlu0 %1092
      %1094 = vset.pattern.permute.xlu0 2
      %1095 = vperm.xlu0 %1094, %v361
      %v1096 = vpop.permute.xlu0 %1095
      %1097 = vset.pattern.permute.xlu0 2
      %1098 = vperm.xlu0 %1097, %v362
      %v1099 = vpop.permute.xlu0 %1098
      %1100 = vset.pattern.permute.xlu0 2
      %1101 = vperm.xlu0 %1100, %v363
      %v1102 = vpop.permute.xlu0 %1101
      %vm1103 = vcmp.eq.s32.totalorder %v365, %v1009
      %vm1104 = vcmp.eq.s32.totalorder %v366, %v1009
      %vm1105 = vcmp.eq.s32.totalorder %v365, %v1012
      %vm1106 = vcmp.eq.s32.totalorder %v366, %v1012
      %vm1107 = vcmp.eq.s32.totalorder %v365, %v1015
      %vm1108 = vcmp.eq.s32.totalorder %v366, %v1015
      %vm1109 = vcmp.eq.s32.totalorder %v365, %v1018
      %vm1110 = vcmp.eq.s32.totalorder %v366, %v1018
      %vm1111 = vcmp.eq.s32.totalorder %v365, %v1021
      %vm1112 = vcmp.eq.s32.totalorder %v366, %v1021
      %vm1113 = vcmp.eq.s32.totalorder %v365, %v1024
      %vm1114 = vcmp.eq.s32.totalorder %v366, %v1024
      %vm1115 = vcmp.eq.s32.totalorder %v365, %v1027
      %vm1116 = vcmp.eq.s32.totalorder %v366, %v1027
      %vm1117 = vcmp.eq.s32.totalorder %v365, %v1030
      %vm1118 = vcmp.eq.s32.totalorder %v366, %v1030
      %vm1119 = vcmp.eq.s32.totalorder %v365, %v1033
      %vm1120 = vcmp.eq.s32.totalorder %v366, %v1033
      %vm1121 = vcmp.eq.s32.totalorder %v365, %v1036
      %vm1122 = vcmp.eq.s32.totalorder %v366, %v1036
      %vm1123 = vcmp.eq.s32.totalorder %v365, %v1039
      %vm1124 = vcmp.eq.s32.totalorder %v366, %v1039
      %vm1125 = vcmp.eq.s32.totalorder %v365, %v1042
      %vm1126 = vcmp.eq.s32.totalorder %v366, %v1042
      %vm1127 = vcmp.eq.s32.totalorder %v365, %v1045
      %vm1128 = vcmp.eq.s32.totalorder %v366, %v1045
      %vm1129 = vcmp.eq.s32.totalorder %v365, %v1048
      %vm1130 = vcmp.eq.s32.totalorder %v366, %v1048
      %vm1131 = vcmp.eq.s32.totalorder %v365, %v1051
      %vm1132 = vcmp.eq.s32.totalorder %v366, %v1051
      %vm1133 = vcmp.eq.s32.totalorder %v365, %v1054
      %vm1134 = vcmp.eq.s32.totalorder %v366, %v1054
      %vm1135 = vcmp.eq.s32.totalorder %v365, %v1057
      %vm1136 = vcmp.eq.s32.totalorder %v366, %v1057
      %vm1137 = vcmp.eq.s32.totalorder %v365, %v1060
      %vm1138 = vcmp.eq.s32.totalorder %v366, %v1060
      %vm1139 = vcmp.eq.s32.totalorder %v365, %v1063
      %vm1140 = vcmp.eq.s32.totalorder %v366, %v1063
      %vm1141 = vcmp.eq.s32.totalorder %v365, %v1066
      %vm1142 = vcmp.eq.s32.totalorder %v366, %v1066
      %vm1143 = vcmp.eq.s32.totalorder %v365, %v1069
      %vm1144 = vcmp.eq.s32.totalorder %v366, %v1069
      %vm1145 = vcmp.eq.s32.totalorder %v365, %v1072
      %vm1146 = vcmp.eq.s32.totalorder %v366, %v1072
      %vm1147 = vcmp.eq.s32.totalorder %v365, %v1075
      %vm1148 = vcmp.eq.s32.totalorder %v366, %v1075
      %vm1149 = vcmp.eq.s32.totalorder %v365, %v1078
      %vm1150 = vcmp.eq.s32.totalorder %v366, %v1078
      %vm1151 = vcmp.eq.s32.totalorder %v365, %v1081
      %vm1152 = vcmp.eq.s32.totalorder %v366, %v1081
      %vm1153 = vcmp.eq.s32.totalorder %v365, %v1084
      %vm1154 = vcmp.eq.s32.totalorder %v366, %v1084
      %vm1155 = vcmp.eq.s32.totalorder %v365, %v1087
      %vm1156 = vcmp.eq.s32.totalorder %v366, %v1087
      %vm1157 = vcmp.eq.s32.totalorder %v365, %v1090
      %vm1158 = vcmp.eq.s32.totalorder %v366, %v1090
      %vm1159 = vcmp.eq.s32.totalorder %v365, %v1093
      %vm1160 = vcmp.eq.s32.totalorder %v366, %v1093
      %vm1161 = vcmp.eq.s32.totalorder %v365, %v1096
      %vm1162 = vcmp.eq.s32.totalorder %v366, %v1096
      %vm1163 = vcmp.eq.s32.totalorder %v365, %v1099
      %vm1164 = vcmp.eq.s32.totalorder %v366, %v1099
      %vm1165 = vcmp.eq.s32.totalorder %v365, %v1102
      %vm1166 = vcmp.eq.s32.totalorder %v366, %v1102
      %v1167 = vsel %vm1103, 1, 0
      %v1168 = vsel %vm1104, 1, 0
      %v1169 = vsel %vm1105, 1, 0
      %v1170 = vsel %vm1106, 1, 0
      %v1171 = vsel %vm1107, 1, 0
      %v1172 = vsel %vm1108, 1, 0
      %v1173 = vsel %vm1109, 1, 0
      %v1174 = vsel %vm1110, 1, 0
      %v1175 = vsel %vm1111, 1, 0
      %v1176 = vsel %vm1112, 1, 0
      %v1177 = vsel %vm1113, 1, 0
      %v1178 = vsel %vm1114, 1, 0
      %v1179 = vsel %vm1115, 1, 0
      %v1180 = vsel %vm1116, 1, 0
      %v1181 = vsel %vm1117, 1, 0
      %v1182 = vsel %vm1118, 1, 0
      %v1183 = vsel %vm1119, 1, 0
      %v1184 = vsel %vm1120, 1, 0
      %v1185 = vsel %vm1121, 1, 0
      %v1186 = vsel %vm1122, 1, 0
      %v1187 = vsel %vm1123, 1, 0
      %v1188 = vsel %vm1124, 1, 0
      %v1189 = vsel %vm1125, 1, 0
      %v1190 = vsel %vm1126, 1, 0
      %v1191 = vsel %vm1127, 1, 0
      %v1192 = vsel %vm1128, 1, 0
      %v1193 = vsel %vm1129, 1, 0
      %v1194 = vsel %vm1130, 1, 0
      %v1195 = vsel %vm1131, 1, 0
      %v1196 = vsel %vm1132, 1, 0
      %v1197 = vsel %vm1133, 1, 0
      %v1198 = vsel %vm1134, 1, 0
      %v1199 = vsel %vm1135, 1, 0
      %v1200 = vsel %vm1136, 1, 0
      %v1201 = vsel %vm1137, 1, 0
      %v1202 = vsel %vm1138, 1, 0
      %v1203 = vsel %vm1139, 1, 0
      %v1204 = vsel %vm1140, 1, 0
      %v1205 = vsel %vm1141, 1, 0
      %v1206 = vsel %vm1142, 1, 0
      %v1207 = vsel %vm1143, 1, 0
      %v1208 = vsel %vm1144, 1, 0
      %v1209 = vsel %vm1145, 1, 0
      %v1210 = vsel %vm1146, 1, 0
      %v1211 = vsel %vm1147, 1, 0
      %v1212 = vsel %vm1148, 1, 0
      %v1213 = vsel %vm1149, 1, 0
      %v1214 = vsel %vm1150, 1, 0
      %v1215 = vsel %vm1151, 1, 0
      %v1216 = vsel %vm1152, 1, 0
      %v1217 = vsel %vm1153, 1, 0
      %v1218 = vsel %vm1154, 1, 0
      %v1219 = vsel %vm1155, 1, 0
      %v1220 = vsel %vm1156, 1, 0
      %v1221 = vsel %vm1157, 1, 0
      %v1222 = vsel %vm1158, 1, 0
      %v1223 = vsel %vm1159, 1, 0
      %v1224 = vsel %vm1160, 1, 0
      %v1225 = vsel %vm1161, 1, 0
      %v1226 = vsel %vm1162, 1, 0
      %v1227 = vsel %vm1163, 1, 0
      %v1228 = vsel %vm1164, 1, 0
      %v1229 = vsel %vm1165, 1, 0
      %v1230 = vsel %vm1166, 1, 0
      %v1231 = vcvt.s32.f32 %v1167
      %v1232 = vcvt.s32.f32 %v1168
      %v1233 = vcvt.s32.f32 %v1169
      %v1234 = vcvt.s32.f32 %v1170
      %v1235 = vcvt.s32.f32 %v1171
      %v1236 = vcvt.s32.f32 %v1172
      %v1237 = vcvt.s32.f32 %v1173
      %v1238 = vcvt.s32.f32 %v1174
      %v1239 = vcvt.s32.f32 %v1175
      %v1240 = vcvt.s32.f32 %v1176
      %v1241 = vcvt.s32.f32 %v1177
      %v1242 = vcvt.s32.f32 %v1178
      %v1243 = vcvt.s32.f32 %v1179
      %v1244 = vcvt.s32.f32 %v1180
      %v1245 = vcvt.s32.f32 %v1181
      %v1246 = vcvt.s32.f32 %v1182
      %v1247 = vcvt.s32.f32 %v1183
      %v1248 = vcvt.s32.f32 %v1184
      %v1249 = vcvt.s32.f32 %v1185
      %v1250 = vcvt.s32.f32 %v1186
      %v1251 = vcvt.s32.f32 %v1187
      %v1252 = vcvt.s32.f32 %v1188
      %v1253 = vcvt.s32.f32 %v1189
      %v1254 = vcvt.s32.f32 %v1190
      %v1255 = vcvt.s32.f32 %v1191
      %v1256 = vcvt.s32.f32 %v1192
      %v1257 = vcvt.s32.f32 %v1193
      %v1258 = vcvt.s32.f32 %v1194
      %v1259 = vcvt.s32.f32 %v1195
      %v1260 = vcvt.s32.f32 %v1196
      %v1261 = vcvt.s32.f32 %v1197
      %v1262 = vcvt.s32.f32 %v1198
      %v1263 = vcvt.s32.f32 %v1199
      %v1264 = vcvt.s32.f32 %v1200
      %v1265 = vcvt.s32.f32 %v1201
      %v1266 = vcvt.s32.f32 %v1202
      %v1267 = vcvt.s32.f32 %v1203
      %v1268 = vcvt.s32.f32 %v1204
      %v1269 = vcvt.s32.f32 %v1205
      %v1270 = vcvt.s32.f32 %v1206
      %v1271 = vcvt.s32.f32 %v1207
      %v1272 = vcvt.s32.f32 %v1208
      %v1273 = vcvt.s32.f32 %v1209
      %v1274 = vcvt.s32.f32 %v1210
      %v1275 = vcvt.s32.f32 %v1211
      %v1276 = vcvt.s32.f32 %v1212
      %v1277 = vcvt.s32.f32 %v1213
      %v1278 = vcvt.s32.f32 %v1214
      %v1279 = vcvt.s32.f32 %v1215
      %v1280 = vcvt.s32.f32 %v1216
      %v1281 = vcvt.s32.f32 %v1217
      %v1282 = vcvt.s32.f32 %v1218
      %v1283 = vcvt.s32.f32 %v1219
      %v1284 = vcvt.s32.f32 %v1220
      %v1285 = vcvt.s32.f32 %v1221
      %v1286 = vcvt.s32.f32 %v1222
      %v1287 = vcvt.s32.f32 %v1223
      %v1288 = vcvt.s32.f32 %v1224
      %v1289 = vcvt.s32.f32 %v1225
      %v1290 = vcvt.s32.f32 %v1226
      %v1291 = vcvt.s32.f32 %v1227
      %v1292 = vcvt.s32.f32 %v1228
      %v1293 = vcvt.s32.f32 %v1229
      %v1294 = vcvt.s32.f32 %v1230
      %v1295 = vadd.f32 %v943, %v1231
      %v1296 = vadd.f32 %v944, %v1232
      %v1297 = vadd.f32 %v945, %v1233
      %v1298 = vadd.f32 %v946, %v1234
      %v1299 = vadd.f32 %v947, %v1235
      %v1300 = vadd.f32 %v948, %v1236
      %v1301 = vadd.f32 %v949, %v1237
      %v1302 = vadd.f32 %v950, %v1238
      %v1303 = vadd.f32 %v951, %v1239
      %v1304 = vadd.f32 %v952, %v1240
      %v1305 = vadd.f32 %v953, %v1241
      %v1306 = vadd.f32 %v954, %v1242
      %v1307 = vadd.f32 %v955, %v1243
      %v1308 = vadd.f32 %v956, %v1244
      %v1309 = vadd.f32 %v957, %v1245
      %v1310 = vadd.f32 %v958, %v1246
      %v1311 = vadd.f32 %v959, %v1247
      %v1312 = vadd.f32 %v960, %v1248
      %v1313 = vadd.f32 %v961, %v1249
      %v1314 = vadd.f32 %v962, %v1250
      %v1315 = vadd.f32 %v963, %v1251
      %v1316 = vadd.f32 %v964, %v1252
      %v1317 = vadd.f32 %v965, %v1253
      %v1318 = vadd.f32 %v966, %v1254
      %v1319 = vadd.f32 %v967, %v1255
      %v1320 = vadd.f32 %v968, %v1256
      %v1321 = vadd.f32 %v969, %v1257
      %v1322 = vadd.f32 %v970, %v1258
      %v1323 = vadd.f32 %v971, %v1259
      %v1324 = vadd.f32 %v972, %v1260
      %v1325 = vadd.f32 %v973, %v1261
      %v1326 = vadd.f32 %v974, %v1262
      %v1327 = vadd.f32 %v975, %v1263
      %v1328 = vadd.f32 %v976, %v1264
      %v1329 = vadd.f32 %v977, %v1265
      %v1330 = vadd.f32 %v978, %v1266
      %v1331 = vadd.f32 %v979, %v1267
      %v1332 = vadd.f32 %v980, %v1268
      %v1333 = vadd.f32 %v981, %v1269
      %v1334 = vadd.f32 %v982, %v1270
      %v1335 = vadd.f32 %v983, %v1271
      %v1336 = vadd.f32 %v984, %v1272
      %v1337 = vadd.f32 %v985, %v1273
      %v1338 = vadd.f32 %v986, %v1274
      %v1339 = vadd.f32 %v987, %v1275
      %v1340 = vadd.f32 %v988, %v1276
      %v1341 = vadd.f32 %v989, %v1277
      %v1342 = vadd.f32 %v990, %v1278
      %v1343 = vadd.f32 %v991, %v1279
      %v1344 = vadd.f32 %v992, %v1280
      %v1345 = vadd.f32 %v993, %v1281
      %v1346 = vadd.f32 %v994, %v1282
      %v1347 = vadd.f32 %v995, %v1283
      %v1348 = vadd.f32 %v996, %v1284
      %v1349 = vadd.f32 %v997, %v1285
      %v1350 = vadd.f32 %v998, %v1286
      %v1351 = vadd.f32 %v999, %v1287
      %v1352 = vadd.f32 %v1000, %v1288
      %v1353 = vadd.f32 %v1001, %v1289
      %v1354 = vadd.f32 %v1002, %v1290
      %v1355 = vadd.f32 %v1003, %v1291
      %v1356 = vadd.f32 %v1004, %v1292
      %v1357 = vadd.f32 %v1005, %v1293
      %v1358 = vadd.f32 %v1006, %v1294
      %1359 = vset.pattern.permute.xlu0 3
      %1360 = vperm.xlu0 %1359, %v332
      %v1361 = vpop.permute.xlu0 %1360
      %1362 = vset.pattern.permute.xlu0 3
      %1363 = vperm.xlu0 %1362, %v333
      %v1364 = vpop.permute.xlu0 %1363
      %1365 = vset.pattern.permute.xlu0 3
      %1366 = vperm.xlu0 %1365, %v334
      %v1367 = vpop.permute.xlu0 %1366
      %1368 = vset.pattern.permute.xlu0 3
      %1369 = vperm.xlu0 %1368, %v335
      %v1370 = vpop.permute.xlu0 %1369
      %1371 = vset.pattern.permute.xlu0 3
      %1372 = vperm.xlu0 %1371, %v336
      %v1373 = vpop.permute.xlu0 %1372
      %1374 = vset.pattern.permute.xlu0 3
      %1375 = vperm.xlu0 %1374, %v337
      %v1376 = vpop.permute.xlu0 %1375
      %1377 = vset.pattern.permute.xlu0 3
      %1378 = vperm.xlu0 %1377, %v338
      %v1379 = vpop.permute.xlu0 %1378
      %1380 = vset.pattern.permute.xlu0 3
      %1381 = vperm.xlu0 %1380, %v339
      %v1382 = vpop.permute.xlu0 %1381
      %1383 = vset.pattern.permute.xlu0 3
      %1384 = vperm.xlu0 %1383, %v340
      %v1385 = vpop.permute.xlu0 %1384
      %1386 = vset.pattern.permute.xlu0 3
      %1387 = vperm.xlu0 %1386, %v341
      %v1388 = vpop.permute.xlu0 %1387
      %1389 = vset.pattern.permute.xlu0 3
      %1390 = vperm.xlu0 %1389, %v342
      %v1391 = vpop.permute.xlu0 %1390
      %1392 = vset.pattern.permute.xlu0 3
      %1393 = vperm.xlu0 %1392, %v343
      %v1394 = vpop.permute.xlu0 %1393
      %1395 = vset.pattern.permute.xlu0 3
      %1396 = vperm.xlu0 %1395, %v344
      %v1397 = vpop.permute.xlu0 %1396
      %1398 = vset.pattern.permute.xlu0 3
      %1399 = vperm.xlu0 %1398, %v345
      %v1400 = vpop.permute.xlu0 %1399
      %1401 = vset.pattern.permute.xlu0 3
      %1402 = vperm.xlu0 %1401, %v346
      %v1403 = vpop.permute.xlu0 %1402
      %1404 = vset.pattern.permute.xlu0 3
      %1405 = vperm.xlu0 %1404, %v347
      %v1406 = vpop.permute.xlu0 %1405
      %1407 = vset.pattern.permute.xlu0 3
      %1408 = vperm.xlu0 %1407, %v348
      %v1409 = vpop.permute.xlu0 %1408
      %1410 = vset.pattern.permute.xlu0 3
      %1411 = vperm.xlu0 %1410, %v349
      %v1412 = vpop.permute.xlu0 %1411
      %1413 = vset.pattern.permute.xlu0 3
      %1414 = vperm.xlu0 %1413, %v350
      %v1415 = vpop.permute.xlu0 %1414
      %1416 = vset.pattern.permute.xlu0 3
      %1417 = vperm.xlu0 %1416, %v351
      %v1418 = vpop.permute.xlu0 %1417
      %1419 = vset.pattern.permute.xlu0 3
      %1420 = vperm.xlu0 %1419, %v352
      %v1421 = vpop.permute.xlu0 %1420
      %1422 = vset.pattern.permute.xlu0 3
      %1423 = vperm.xlu0 %1422, %v353
      %v1424 = vpop.permute.xlu0 %1423
      %1425 = vset.pattern.permute.xlu0 3
      %1426 = vperm.xlu0 %1425, %v354
      %v1427 = vpop.permute.xlu0 %1426
      %1428 = vset.pattern.permute.xlu0 3
      %1429 = vperm.xlu0 %1428, %v355
      %v1430 = vpop.permute.xlu0 %1429
      %1431 = vset.pattern.permute.xlu0 3
      %1432 = vperm.xlu0 %1431, %v356
      %v1433 = vpop.permute.xlu0 %1432
      %1434 = vset.pattern.permute.xlu0 3
      %1435 = vperm.xlu0 %1434, %v357
      %v1436 = vpop.permute.xlu0 %1435
      %1437 = vset.pattern.permute.xlu0 3
      %1438 = vperm.xlu0 %1437, %v358
      %v1439 = vpop.permute.xlu0 %1438
      %1440 = vset.pattern.permute.xlu0 3
      %1441 = vperm.xlu0 %1440, %v359
      %v1442 = vpop.permute.xlu0 %1441
      %1443 = vset.pattern.permute.xlu0 3
      %1444 = vperm.xlu0 %1443, %v360
      %v1445 = vpop.permute.xlu0 %1444
      %1446 = vset.pattern.permute.xlu0 3
      %1447 = vperm.xlu0 %1446, %v361
      %v1448 = vpop.permute.xlu0 %1447
      %1449 = vset.pattern.permute.xlu0 3
      %1450 = vperm.xlu0 %1449, %v362
      %v1451 = vpop.permute.xlu0 %1450
      %1452 = vset.pattern.permute.xlu0 3
      %1453 = vperm.xlu0 %1452, %v363
      %v1454 = vpop.permute.xlu0 %1453
      %vm1455 = vcmp.eq.s32.totalorder %v365, %v1361
      %vm1456 = vcmp.eq.s32.totalorder %v366, %v1361
      %vm1457 = vcmp.eq.s32.totalorder %v365, %v1364
      %vm1458 = vcmp.eq.s32.totalorder %v366, %v1364
      %vm1459 = vcmp.eq.s32.totalorder %v365, %v1367
      %vm1460 = vcmp.eq.s32.totalorder %v366, %v1367
      %vm1461 = vcmp.eq.s32.totalorder %v365, %v1370
      %vm1462 = vcmp.eq.s32.totalorder %v366, %v1370
      %vm1463 = vcmp.eq.s32.totalorder %v365, %v1373
      %vm1464 = vcmp.eq.s32.totalorder %v366, %v1373
      %vm1465 = vcmp.eq.s32.totalorder %v365, %v1376
      %vm1466 = vcmp.eq.s32.totalorder %v366, %v1376
      %vm1467 = vcmp.eq.s32.totalorder %v365, %v1379
      %vm1468 = vcmp.eq.s32.totalorder %v366, %v1379
      %vm1469 = vcmp.eq.s32.totalorder %v365, %v1382
      %vm1470 = vcmp.eq.s32.totalorder %v366, %v1382
      %vm1471 = vcmp.eq.s32.totalorder %v365, %v1385
      %vm1472 = vcmp.eq.s32.totalorder %v366, %v1385
      %vm1473 = vcmp.eq.s32.totalorder %v365, %v1388
      %vm1474 = vcmp.eq.s32.totalorder %v366, %v1388
      %vm1475 = vcmp.eq.s32.totalorder %v365, %v1391
      %vm1476 = vcmp.eq.s32.totalorder %v366, %v1391
      %vm1477 = vcmp.eq.s32.totalorder %v365, %v1394
      %vm1478 = vcmp.eq.s32.totalorder %v366, %v1394
      %vm1479 = vcmp.eq.s32.totalorder %v365, %v1397
      %vm1480 = vcmp.eq.s32.totalorder %v366, %v1397
      %vm1481 = vcmp.eq.s32.totalorder %v365, %v1400
      %vm1482 = vcmp.eq.s32.totalorder %v366, %v1400
      %vm1483 = vcmp.eq.s32.totalorder %v365, %v1403
      %vm1484 = vcmp.eq.s32.totalorder %v366, %v1403
      %vm1485 = vcmp.eq.s32.totalorder %v365, %v1406
      %vm1486 = vcmp.eq.s32.totalorder %v366, %v1406
      %vm1487 = vcmp.eq.s32.totalorder %v365, %v1409
      %vm1488 = vcmp.eq.s32.totalorder %v366, %v1409
      %vm1489 = vcmp.eq.s32.totalorder %v365, %v1412
      %vm1490 = vcmp.eq.s32.totalorder %v366, %v1412
      %vm1491 = vcmp.eq.s32.totalorder %v365, %v1415
      %vm1492 = vcmp.eq.s32.totalorder %v366, %v1415
      %vm1493 = vcmp.eq.s32.totalorder %v365, %v1418
      %vm1494 = vcmp.eq.s32.totalorder %v366, %v1418
      %vm1495 = vcmp.eq.s32.totalorder %v365, %v1421
      %vm1496 = vcmp.eq.s32.totalorder %v366, %v1421
      %vm1497 = vcmp.eq.s32.totalorder %v365, %v1424
      %vm1498 = vcmp.eq.s32.totalorder %v366, %v1424
      %vm1499 = vcmp.eq.s32.totalorder %v365, %v1427
      %vm1500 = vcmp.eq.s32.totalorder %v366, %v1427
      %vm1501 = vcmp.eq.s32.totalorder %v365, %v1430
      %vm1502 = vcmp.eq.s32.totalorder %v366, %v1430
      %vm1503 = vcmp.eq.s32.totalorder %v365, %v1433
      %vm1504 = vcmp.eq.s32.totalorder %v366, %v1433
      %vm1505 = vcmp.eq.s32.totalorder %v365, %v1436
      %vm1506 = vcmp.eq.s32.totalorder %v366, %v1436
      %vm1507 = vcmp.eq.s32.totalorder %v365, %v1439
      %vm1508 = vcmp.eq.s32.totalorder %v366, %v1439
      %vm1509 = vcmp.eq.s32.totalorder %v365, %v1442
      %vm1510 = vcmp.eq.s32.totalorder %v366, %v1442
      %vm1511 = vcmp.eq.s32.totalorder %v365, %v1445
      %vm1512 = vcmp.eq.s32.totalorder %v366, %v1445
      %vm1513 = vcmp.eq.s32.totalorder %v365, %v1448
      %vm1514 = vcmp.eq.s32.totalorder %v366, %v1448
      %vm1515 = vcmp.eq.s32.totalorder %v365, %v1451
      %vm1516 = vcmp.eq.s32.totalorder %v366, %v1451
      %vm1517 = vcmp.eq.s32.totalorder %v365, %v1454
      %vm1518 = vcmp.eq.s32.totalorder %v366, %v1454
      %v1519 = vsel %vm1455, 1, 0
      %v1520 = vsel %vm1456, 1, 0
      %v1521 = vsel %vm1457, 1, 0
      %v1522 = vsel %vm1458, 1, 0
      %v1523 = vsel %vm1459, 1, 0
      %v1524 = vsel %vm1460, 1, 0
      %v1525 = vsel %vm1461, 1, 0
      %v1526 = vsel %vm1462, 1, 0
      %v1527 = vsel %vm1463, 1, 0
      %v1528 = vsel %vm1464, 1, 0
      %v1529 = vsel %vm1465, 1, 0
      %v1530 = vsel %vm1466, 1, 0
      %v1531 = vsel %vm1467, 1, 0
      %v1532 = vsel %vm1468, 1, 0
      %v1533 = vsel %vm1469, 1, 0
      %v1534 = vsel %vm1470, 1, 0
      %v1535 = vsel %vm1471, 1, 0
      %v1536 = vsel %vm1472, 1, 0
      %v1537 = vsel %vm1473, 1, 0
      %v1538 = vsel %vm1474, 1, 0
      %v1539 = vsel %vm1475, 1, 0
      %v1540 = vsel %vm1476, 1, 0
      %v1541 = vsel %vm1477, 1, 0
      %v1542 = vsel %vm1478, 1, 0
      %v1543 = vsel %vm1479, 1, 0
      %v1544 = vsel %vm1480, 1, 0
      %v1545 = vsel %vm1481, 1, 0
      %v1546 = vsel %vm1482, 1, 0
      %v1547 = vsel %vm1483, 1, 0
      %v1548 = vsel %vm1484, 1, 0
      %v1549 = vsel %vm1485, 1, 0
      %v1550 = vsel %vm1486, 1, 0
      %v1551 = vsel %vm1487, 1, 0
      %v1552 = vsel %vm1488, 1, 0
      %v1553 = vsel %vm1489, 1, 0
      %v1554 = vsel %vm1490, 1, 0
      %v1555 = vsel %vm1491, 1, 0
      %v1556 = vsel %vm1492, 1, 0
      %v1557 = vsel %vm1493, 1, 0
      %v1558 = vsel %vm1494, 1, 0
      %v1559 = vsel %vm1495, 1, 0
      %v1560 = vsel %vm1496, 1, 0
      %v1561 = vsel %vm1497, 1, 0
      %v1562 = vsel %vm1498, 1, 0
      %v1563 = vsel %vm1499, 1, 0
      %v1564 = vsel %vm1500, 1, 0
      %v1565 = vsel %vm1501, 1, 0
      %v1566 = vsel %vm1502, 1, 0
      %v1567 = vsel %vm1503, 1, 0
      %v1568 = vsel %vm1504, 1, 0
      %v1569 = vsel %vm1505, 1, 0
      %v1570 = vsel %vm1506, 1, 0
      %v1571 = vsel %vm1507, 1, 0
      %v1572 = vsel %vm1508, 1, 0
      %v1573 = vsel %vm1509, 1, 0
      %v1574 = vsel %vm1510, 1, 0
      %v1575 = vsel %vm1511, 1, 0
      %v1576 = vsel %vm1512, 1, 0
      %v1577 = vsel %vm1513, 1, 0
      %v1578 = vsel %vm1514, 1, 0
      %v1579 = vsel %vm1515, 1, 0
      %v1580 = vsel %vm1516, 1, 0
      %v1581 = vsel %vm1517, 1, 0
      %v1582 = vsel %vm1518, 1, 0
      %v1583 = vcvt.s32.f32 %v1519
      %v1584 = vcvt.s32.f32 %v1520
      %v1585 = vcvt.s32.f32 %v1521
      %v1586 = vcvt.s32.f32 %v1522
      %v1587 = vcvt.s32.f32 %v1523
      %v1588 = vcvt.s32.f32 %v1524
      %v1589 = vcvt.s32.f32 %v1525
      %v1590 = vcvt.s32.f32 %v1526
      %v1591 = vcvt.s32.f32 %v1527
      %v1592 = vcvt.s32.f32 %v1528
      %v1593 = vcvt.s32.f32 %v1529
      %v1594 = vcvt.s32.f32 %v1530
      %v1595 = vcvt.s32.f32 %v1531
      %v1596 = vcvt.s32.f32 %v1532
      %v1597 = vcvt.s32.f32 %v1533
      %v1598 = vcvt.s32.f32 %v1534
      %v1599 = vcvt.s32.f32 %v1535
      %v1600 = vcvt.s32.f32 %v1536
      %v1601 = vcvt.s32.f32 %v1537
      %v1602 = vcvt.s32.f32 %v1538
      %v1603 = vcvt.s32.f32 %v1539
      %v1604 = vcvt.s32.f32 %v1540
      %v1605 = vcvt.s32.f32 %v1541
      %v1606 = vcvt.s32.f32 %v1542
      %v1607 = vcvt.s32.f32 %v1543
      %v1608 = vcvt.s32.f32 %v1544
      %v1609 = vcvt.s32.f32 %v1545
      %v1610 = vcvt.s32.f32 %v1546
      %v1611 = vcvt.s32.f32 %v1547
      %v1612 = vcvt.s32.f32 %v1548
      %v1613 = vcvt.s32.f32 %v1549
      %v1614 = vcvt.s32.f32 %v1550
      %v1615 = vcvt.s32.f32 %v1551
      %v1616 = vcvt.s32.f32 %v1552
      %v1617 = vcvt.s32.f32 %v1553
      %v1618 = vcvt.s32.f32 %v1554
      %v1619 = vcvt.s32.f32 %v1555
      %v1620 = vcvt.s32.f32 %v1556
      %v1621 = vcvt.s32.f32 %v1557
      %v1622 = vcvt.s32.f32 %v1558
      %v1623 = vcvt.s32.f32 %v1559
      %v1624 = vcvt.s32.f32 %v1560
      %v1625 = vcvt.s32.f32 %v1561
      %v1626 = vcvt.s32.f32 %v1562
      %v1627 = vcvt.s32.f32 %v1563
      %v1628 = vcvt.s32.f32 %v1564
      %v1629 = vcvt.s32.f32 %v1565
      %v1630 = vcvt.s32.f32 %v1566
      %v1631 = vcvt.s32.f32 %v1567
      %v1632 = vcvt.s32.f32 %v1568
      %v1633 = vcvt.s32.f32 %v1569
      %v1634 = vcvt.s32.f32 %v1570
      %v1635 = vcvt.s32.f32 %v1571
      %v1636 = vcvt.s32.f32 %v1572
      %v1637 = vcvt.s32.f32 %v1573
      %v1638 = vcvt.s32.f32 %v1574
      %v1639 = vcvt.s32.f32 %v1575
      %v1640 = vcvt.s32.f32 %v1576
      %v1641 = vcvt.s32.f32 %v1577
      %v1642 = vcvt.s32.f32 %v1578
      %v1643 = vcvt.s32.f32 %v1579
      %v1644 = vcvt.s32.f32 %v1580
      %v1645 = vcvt.s32.f32 %v1581
      %v1646 = vcvt.s32.f32 %v1582
      %v1647 = vadd.f32 %v1295, %v1583
      %v1648 = vadd.f32 %v1296, %v1584
      %v1649 = vadd.f32 %v1297, %v1585
      %v1650 = vadd.f32 %v1298, %v1586
      %v1651 = vadd.f32 %v1299, %v1587
      %v1652 = vadd.f32 %v1300, %v1588
      %v1653 = vadd.f32 %v1301, %v1589
      %v1654 = vadd.f32 %v1302, %v1590
      %v1655 = vadd.f32 %v1303, %v1591
      %v1656 = vadd.f32 %v1304, %v1592
      %v1657 = vadd.f32 %v1305, %v1593
      %v1658 = vadd.f32 %v1306, %v1594
      %v1659 = vadd.f32 %v1307, %v1595
      %v1660 = vadd.f32 %v1308, %v1596
      %v1661 = vadd.f32 %v1309, %v1597
      %v1662 = vadd.f32 %v1310, %v1598
      %v1663 = vadd.f32 %v1311, %v1599
      %v1664 = vadd.f32 %v1312, %v1600
      %v1665 = vadd.f32 %v1313, %v1601
      %v1666 = vadd.f32 %v1314, %v1602
      %v1667 = vadd.f32 %v1315, %v1603
      %v1668 = vadd.f32 %v1316, %v1604
      %v1669 = vadd.f32 %v1317, %v1605
      %v1670 = vadd.f32 %v1318, %v1606
      %v1671 = vadd.f32 %v1319, %v1607
      %v1672 = vadd.f32 %v1320, %v1608
      %v1673 = vadd.f32 %v1321, %v1609
      %v1674 = vadd.f32 %v1322, %v1610
      %v1675 = vadd.f32 %v1323, %v1611
      %v1676 = vadd.f32 %v1324, %v1612
      %v1677 = vadd.f32 %v1325, %v1613
      %v1678 = vadd.f32 %v1326, %v1614
      %v1679 = vadd.f32 %v1327, %v1615
      %v1680 = vadd.f32 %v1328, %v1616
      %v1681 = vadd.f32 %v1329, %v1617
      %v1682 = vadd.f32 %v1330, %v1618
      %v1683 = vadd.f32 %v1331, %v1619
      %v1684 = vadd.f32 %v1332, %v1620
      %v1685 = vadd.f32 %v1333, %v1621
      %v1686 = vadd.f32 %v1334, %v1622
      %v1687 = vadd.f32 %v1335, %v1623
      %v1688 = vadd.f32 %v1336, %v1624
      %v1689 = vadd.f32 %v1337, %v1625
      %v1690 = vadd.f32 %v1338, %v1626
      %v1691 = vadd.f32 %v1339, %v1627
      %v1692 = vadd.f32 %v1340, %v1628
      %v1693 = vadd.f32 %v1341, %v1629
      %v1694 = vadd.f32 %v1342, %v1630
      %v1695 = vadd.f32 %v1343, %v1631
      %v1696 = vadd.f32 %v1344, %v1632
      %v1697 = vadd.f32 %v1345, %v1633
      %v1698 = vadd.f32 %v1346, %v1634
      %v1699 = vadd.f32 %v1347, %v1635
      %v1700 = vadd.f32 %v1348, %v1636
      %v1701 = vadd.f32 %v1349, %v1637
      %v1702 = vadd.f32 %v1350, %v1638
      %v1703 = vadd.f32 %v1351, %v1639
      %v1704 = vadd.f32 %v1352, %v1640
      %v1705 = vadd.f32 %v1353, %v1641
      %v1706 = vadd.f32 %v1354, %v1642
      %v1707 = vadd.f32 %v1355, %v1643
      %v1708 = vadd.f32 %v1356, %v1644
      %v1709 = vadd.f32 %v1357, %v1645
      %v1710 = vadd.f32 %v1358, %v1646
      %v1711 = vpack.c.bf16 %v1649, %v1647
      %v1712 = vpack.c.bf16 %v1650, %v1648
      %v1713 = vpack.c.bf16 %v1653, %v1651
      %v1714 = vpack.c.bf16 %v1654, %v1652
      %v1715 = vpack.c.bf16 %v1657, %v1655
      %v1716 = vpack.c.bf16 %v1658, %v1656
      %v1717 = vpack.c.bf16 %v1661, %v1659
      %v1718 = vpack.c.bf16 %v1662, %v1660
      %v1719 = vpack.c.bf16 %v1665, %v1663
      %v1720 = vpack.c.bf16 %v1666, %v1664
      %v1721 = vpack.c.bf16 %v1669, %v1667
      %v1722 = vpack.c.bf16 %v1670, %v1668
      %v1723 = vpack.c.bf16 %v1673, %v1671
      %v1724 = vpack.c.bf16 %v1674, %v1672
      %v1725 = vpack.c.bf16 %v1677, %v1675
      %v1726 = vpack.c.bf16 %v1678, %v1676
      %v1727 = vpack.c.bf16 %v1681, %v1679
      %v1728 = vpack.c.bf16 %v1682, %v1680
      %v1729 = vpack.c.bf16 %v1685, %v1683
      %v1730 = vpack.c.bf16 %v1686, %v1684
      %v1731 = vpack.c.bf16 %v1689, %v1687
      %v1732 = vpack.c.bf16 %v1690, %v1688
      %v1733 = vpack.c.bf16 %v1693, %v1691
      %v1734 = vpack.c.bf16 %v1694, %v1692
      %v1735 = vpack.c.bf16 %v1697, %v1695
      %v1736 = vpack.c.bf16 %v1698, %v1696
      %v1737 = vpack.c.bf16 %v1701, %v1699
      %v1738 = vpack.c.bf16 %v1702, %v1700
      %v1739 = vpack.c.bf16 %v1705, %v1703
      %v1740 = vpack.c.bf16 %v1706, %v1704
      %v1741 = vpack.c.bf16 %v1709, %v1707
      %v1742 = vpack.c.bf16 %v1710, %v1708
      %v1743 = vld [vmem:[%s2] sm:$0xf]
      %v1744 = vld [vmem:[%s2 + $0x4] sm:$0xf]
      %v1745 = vld [vmem:[%s2 + $0x8] sm:$0xf]
      %v1746 = vld [vmem:[%s2 + $0xc] sm:$0xf]
      %v1747 = vld [vmem:[%s2 + $0x10] sm:$0xf]
      %v1748 = vld [vmem:[%s2 + $0x14] sm:$0xf]
      %v1749 = vld [vmem:[%s2 + $0x18] sm:$0xf]
      %v1750 = vld [vmem:[%s2 + $0x1c] sm:$0xf]
      %v1751 = vld [vmem:[%s2 + $0x20] sm:$0xf]
      %v1752 = vld [vmem:[%s2 + $0x24] sm:$0xf]
      %v1753 = vld [vmem:[%s2 + $0x28] sm:$0xf]
      %v1754 = vld [vmem:[%s2 + $0x2c] sm:$0xf]
      %v1755 = vld [vmem:[%s2 + $0x30] sm:$0xf]
      %v1756 = vld [vmem:[%s2 + $0x34] sm:$0xf]
      %v1757 = vld [vmem:[%s2 + $0x38] sm:$0xf]
      %v1758 = vld [vmem:[%s2 + $0x3c] sm:$0xf]
      %v1759 = vld [vmem:[%s2 + $0x40] sm:$0xf]
      %v1760 = vld [vmem:[%s2 + $0x44] sm:$0xf]
      %v1761 = vld [vmem:[%s2 + $0x48] sm:$0xf]
      %v1762 = vld [vmem:[%s2 + $0x4c] sm:$0xf]
      %v1763 = vld [vmem:[%s2 + $0x50] sm:$0xf]
      %v1764 = vld [vmem:[%s2 + $0x54] sm:$0xf]
      %v1765 = vld [vmem:[%s2 + $0x58] sm:$0xf]
      %v1766 = vld [vmem:[%s2 + $0x5c] sm:$0xf]
      %v1767 = vld [vmem:[%s2 + $0x60] sm:$0xf]
      %v1768 = vld [vmem:[%s2 + $0x64] sm:$0xf]
      %v1769 = vld [vmem:[%s2 + $0x68] sm:$0xf]
      %v1770 = vld [vmem:[%s2 + $0x6c] sm:$0xf]
      %v1771 = vld [vmem:[%s2 + $0x70] sm:$0xf]
      %v1772 = vld [vmem:[%s2 + $0x74] sm:$0xf]
      %v1773 = vld [vmem:[%s2 + $0x78] sm:$0xf]
      %v1774 = vld [vmem:[%s2 + $0x7c] sm:$0xf]
      %v1807 = vunpack.c.l.b16 %v1743
      %v1808 = vunpack.c.l.b16 %v1744
      %v1809 = vunpack.c.l.b16 %v1745
      %v1810 = vunpack.c.l.b16 %v1746
      %v1811 = vunpack.c.l.b16 %v1747
      %v1812 = vunpack.c.l.b16 %v1748
      %v1813 = vunpack.c.l.b16 %v1749
      %v1814 = vunpack.c.l.b16 %v1750
      %v1815 = vunpack.c.l.b16 %v1751
      %v1816 = vunpack.c.l.b16 %v1752
      %v1817 = vunpack.c.l.b16 %v1753
      %v1818 = vunpack.c.l.b16 %v1754
      %v1819 = vunpack.c.l.b16 %v1755
      %v1820 = vunpack.c.l.b16 %v1756
      %v1821 = vunpack.c.l.b16 %v1757
      %v1822 = vunpack.c.l.b16 %v1758
      %v1823 = vunpack.c.l.b16 %v1759
      %v1824 = vunpack.c.l.b16 %v1760
      %v1825 = vunpack.c.l.b16 %v1761
      %v1826 = vunpack.c.l.b16 %v1762
      %v1827 = vunpack.c.l.b16 %v1763
      %v1828 = vunpack.c.l.b16 %v1764
      %v1829 = vunpack.c.l.b16 %v1765
      %v1830 = vunpack.c.l.b16 %v1766
      %v1831 = vunpack.c.l.b16 %v1767
      %v1832 = vunpack.c.l.b16 %v1768
      %v1833 = vunpack.c.l.b16 %v1769
      %v1834 = vunpack.c.l.b16 %v1770
      %v1835 = vunpack.c.l.b16 %v1771
      %v1836 = vunpack.c.l.b16 %v1772
      %v1837 = vunpack.c.l.b16 %v1773
      %v1838 = vunpack.c.l.b16 %v1774
      %v1839 = vpack.c.b16 %v1808, %v1807
      %v1840 = vpack.c.b16 %v1810, %v1809
      %v1841 = vpack.c.b16 %v1812, %v1811
      %v1842 = vpack.c.b16 %v1814, %v1813
      %v1843 = vpack.c.b16 %v1816, %v1815
      %v1844 = vpack.c.b16 %v1818, %v1817
      %v1845 = vpack.c.b16 %v1820, %v1819
      %v1846 = vpack.c.b16 %v1822, %v1821
      %v1847 = vpack.c.b16 %v1824, %v1823
      %v1848 = vpack.c.b16 %v1826, %v1825
      %v1849 = vpack.c.b16 %v1828, %v1827
      %v1850 = vpack.c.b16 %v1830, %v1829
      %v1851 = vpack.c.b16 %v1832, %v1831
      %v1852 = vpack.c.b16 %v1834, %v1833
      %v1853 = vpack.c.b16 %v1836, %v1835
      %v1854 = vpack.c.b16 %v1838, %v1837
      %1871 = vmatpush.bf16.msra.mxu0 %v1846
      %1872 = vmatpush.bf16.msra.mxu0 %v1845
      %1873 = vmatpush.bf16.msra.mxu0 %v1844
      %1874 = vmatpush.bf16.msra.mxu0 %v1843
      %1875 = vmatpush.bf16.msra.mxu0 %v1842
      %1876 = vmatpush.bf16.msra.mxu0 %v1841
      %1877 = vmatpush.bf16.msra.mxu0 %v1840
      %1878 = vmatpush.bf16.msra.mxu0 %v1839
      %1879 = vmatmul.bf16.gmra.mxu0 %v1711
      %v1880 = vpop.f32.mrf.mxu0
      %v1881 = vadd.f32 0.0, %v1880
      %v1882 = vpop.f32.mrf.mxu0
      %v1883 = vadd.f32 0.0, %v1882
      %1884 = vmatmul.bf16.gmra.mxu0 %v1713
      %v1885 = vpop.f32.mrf.mxu0
      %v1886 = vadd.f32 0.0, %v1885
      %v1887 = vpop.f32.mrf.mxu0
      %v1888 = vadd.f32 0.0, %v1887
      %1889 = vmatmul.bf16.gmra.mxu0 %v1715
      %v1890 = vpop.f32.mrf.mxu0
      %v1891 = vadd.f32 0.0, %v1890
      %v1892 = vpop.f32.mrf.mxu0
      %v1893 = vadd.f32 0.0, %v1892
      %1894 = vmatmul.bf16.gmra.mxu0 %v1717
      %v1895 = vpop.f32.mrf.mxu0
      %v1896 = vadd.f32 0.0, %v1895
      %v1897 = vpop.f32.mrf.mxu0
      %v1898 = vadd.f32 0.0, %v1897
      %1899 = vmatmul.bf16.gmra.mxu0 %v1719
      %v1900 = vpop.f32.mrf.mxu0
      %v1901 = vadd.f32 0.0, %v1900
      %v1902 = vpop.f32.mrf.mxu0
      %v1903 = vadd.f32 0.0, %v1902
      %1904 = vmatmul.bf16.gmra.mxu0 %v1721
      %v1905 = vpop.f32.mrf.mxu0
      %v1906 = vadd.f32 0.0, %v1905
      %v1907 = vpop.f32.mrf.mxu0
      %v1908 = vadd.f32 0.0, %v1907
      %1909 = vmatmul.bf16.gmra.mxu0 %v1723
      %v1910 = vpop.f32.mrf.mxu0
      %v1911 = vadd.f32 0.0, %v1910
      %v1912 = vpop.f32.mrf.mxu0
      %v1913 = vadd.f32 0.0, %v1912
      %1914 = vmatmul.bf16.gmra.mxu0 %v1725
      %v1915 = vpop.f32.mrf.mxu0
      %v1916 = vadd.f32 0.0, %v1915
      %v1917 = vpop.f32.mrf.mxu0
      %v1918 = vadd.f32 0.0, %v1917
      %1919 = vmatmul.bf16.gmra.mxu0 %v1727
      %v1920 = vpop.f32.mrf.mxu0
      %v1921 = vadd.f32 0.0, %v1920
      %v1922 = vpop.f32.mrf.mxu0
      %v1923 = vadd.f32 0.0, %v1922
      %1924 = vmatmul.bf16.gmra.mxu0 %v1729
      %v1925 = vpop.f32.mrf.mxu0
      %v1926 = vadd.f32 0.0, %v1925
      %v1927 = vpop.f32.mrf.mxu0
      %v1928 = vadd.f32 0.0, %v1927
      %1929 = vmatmul.bf16.gmra.mxu0 %v1731
      %v1930 = vpop.f32.mrf.mxu0
      %v1931 = vadd.f32 0.0, %v1930
      %v1932 = vpop.f32.mrf.mxu0
      %v1933 = vadd.f32 0.0, %v1932
      %1934 = vmatmul.bf16.gmra.mxu0 %v1733
      %v1935 = vpop.f32.mrf.mxu0
      %v1936 = vadd.f32 0.0, %v1935
      %v1937 = vpop.f32.mrf.mxu0
      %v1938 = vadd.f32 0.0, %v1937
      %1939 = vmatmul.bf16.gmra.mxu0 %v1735
      %v1940 = vpop.f32.mrf.mxu0
      %v1941 = vadd.f32 0.0, %v1940
      %v1942 = vpop.f32.mrf.mxu0
      %v1943 = vadd.f32 0.0, %v1942
      %1944 = vmatmul.bf16.gmra.mxu0 %v1737
      %v1945 = vpop.f32.mrf.mxu0
      %v1946 = vadd.f32 0.0, %v1945
      %v1947 = vpop.f32.mrf.mxu0
      %v1948 = vadd.f32 0.0, %v1947
      %1949 = vmatmul.bf16.gmra.mxu0 %v1739
      %v1950 = vpop.f32.mrf.mxu0
      %v1951 = vadd.f32 0.0, %v1950
      %v1952 = vpop.f32.mrf.mxu0
      %v1953 = vadd.f32 0.0, %v1952
      %1954 = vmatmul.bf16.gmra.mxu0 %v1741
      %v1955 = vpop.f32.mrf.mxu0
      %v1956 = vadd.f32 0.0, %v1955
      %v1957 = vpop.f32.mrf.mxu0
      %v1958 = vadd.f32 0.0, %v1957
      %1959 = vdwg.mxu0
      %1960 = vmatpush.bf16.msra.mxu0 %v1854
      %1961 = vmatpush.bf16.msra.mxu0 %v1853
      %1962 = vmatpush.bf16.msra.mxu0 %v1852
      %1963 = vmatpush.bf16.msra.mxu0 %v1851
      %1964 = vmatpush.bf16.msra.mxu0 %v1850
      %1965 = vmatpush.bf16.msra.mxu0 %v1849
      %1966 = vmatpush.bf16.msra.mxu0 %v1848
      %1967 = vmatpush.bf16.msra.mxu0 %v1847
      %1968 = vmatmul.bf16.gmra.mxu0 %v1712
      %v1969 = vpop.f32.mrf.mxu0
      %v1970 = vadd.f32 %v1881, %v1969
      %v1971 = vpop.f32.mrf.mxu0
      %v1972 = vadd.f32 %v1883, %v1971
      %1973 = vmatmul.bf16.gmra.mxu0 %v1714
      %v1974 = vpop.f32.mrf.mxu0
      %v1975 = vadd.f32 %v1886, %v1974
      %v1976 = vpop.f32.mrf.mxu0
      %v1977 = vadd.f32 %v1888, %v1976
      %1978 = vmatmul.bf16.gmra.mxu0 %v1716
      %v1979 = vpop.f32.mrf.mxu0
      %v1980 = vadd.f32 %v1891, %v1979
      %v1981 = vpop.f32.mrf.mxu0
      %v1982 = vadd.f32 %v1893, %v1981
      %1983 = vmatmul.bf16.gmra.mxu0 %v1718
      %v1984 = vpop.f32.mrf.mxu0
      %v1985 = vadd.f32 %v1896, %v1984
      %v1986 = vpop.f32.mrf.mxu0
      %v1987 = vadd.f32 %v1898, %v1986
      %1988 = vmatmul.bf16.gmra.mxu0 %v1720
      %v1989 = vpop.f32.mrf.mxu0
      %v1990 = vadd.f32 %v1901, %v1989
      %v1991 = vpop.f32.mrf.mxu0
      %v1992 = vadd.f32 %v1903, %v1991
      %1993 = vmatmul.bf16.gmra.mxu0 %v1722
      %v1994 = vpop.f32.mrf.mxu0
      %v1995 = vadd.f32 %v1906, %v1994
      %v1996 = vpop.f32.mrf.mxu0
      %v1997 = vadd.f32 %v1908, %v1996
      %1998 = vmatmul.bf16.gmra.mxu0 %v1724
      %v1999 = vpop.f32.mrf.mxu0
      %v2000 = vadd.f32 %v1911, %v1999
      %v2001 = vpop.f32.mrf.mxu0
      %v2002 = vadd.f32 %v1913, %v2001
      %2003 = vmatmul.bf16.gmra.mxu0 %v1726
      %v2004 = vpop.f32.mrf.mxu0
      %v2005 = vadd.f32 %v1916, %v2004
      %v2006 = vpop.f32.mrf.mxu0
      %v2007 = vadd.f32 %v1918, %v2006
      %2008 = vmatmul.bf16.gmra.mxu0 %v1728
      %v2009 = vpop.f32.mrf.mxu0
      %v2010 = vadd.f32 %v1921, %v2009
      %v2011 = vpop.f32.mrf.mxu0
      %v2012 = vadd.f32 %v1923, %v2011
      %2013 = vmatmul.bf16.gmra.mxu0 %v1730
      %v2014 = vpop.f32.mrf.mxu0
      %v2015 = vadd.f32 %v1926, %v2014
      %v2016 = vpop.f32.mrf.mxu0
      %v2017 = vadd.f32 %v1928, %v2016
      %2018 = vmatmul.bf16.gmra.mxu0 %v1732
      %v2019 = vpop.f32.mrf.mxu0
      %v2020 = vadd.f32 %v1931, %v2019
      %v2021 = vpop.f32.mrf.mxu0
      %v2022 = vadd.f32 %v1933, %v2021
      %2023 = vmatmul.bf16.gmra.mxu0 %v1734
      %v2024 = vpop.f32.mrf.mxu0
      %v2025 = vadd.f32 %v1936, %v2024
      %v2026 = vpop.f32.mrf.mxu0
      %v2027 = vadd.f32 %v1938, %v2026
      %2028 = vmatmul.bf16.gmra.mxu0 %v1736
      %v2029 = vpop.f32.mrf.mxu0
      %v2030 = vadd.f32 %v1941, %v2029
      %v2031 = vpop.f32.mrf.mxu0
      %v2032 = vadd.f32 %v1943, %v2031
      %2033 = vmatmul.bf16.gmra.mxu0 %v1738
      %v2034 = vpop.f32.mrf.mxu0
      %v2035 = vadd.f32 %v1946, %v2034
      %v2036 = vpop.f32.mrf.mxu0
      %v2037 = vadd.f32 %v1948, %v2036
      %2038 = vmatmul.bf16.gmra.mxu0 %v1740
      %v2039 = vpop.f32.mrf.mxu0
      %v2040 = vadd.f32 %v1951, %v2039
      %v2041 = vpop.f32.mrf.mxu0
      %v2042 = vadd.f32 %v1953, %v2041
      %2043 = vmatmul.bf16.gmra.mxu0 %v1742
      %v2044 = vpop.f32.mrf.mxu0
      %v2045 = vadd.f32 %v1956, %v2044
      %v2046 = vpop.f32.mrf.mxu0
      %v2047 = vadd.f32 %v1958, %v2046
      %2048 = vdwg.mxu0
      %v2049 = vld [vmem:[%s324] sm:$0xff]
      %v2050 = vld [vmem:[%s324 + $0x8] sm:$0xff]
      %v2051 = vld [vmem:[%s324 + $0x10] sm:$0xff]
      %v2052 = vld [vmem:[%s324 + $0x18] sm:$0xff]
      %v2053 = vld [vmem:[%s3] sm:$0xff]
      %v2054 = vld [vmem:[%s3 + $0x8] sm:$0xff]
      %v2055 = vld [vmem:[%s3 + $0x10] sm:$0xff]
      %v2056 = vld [vmem:[%s3 + $0x18] sm:$0xff]
      %v2057 = vld [vmem:[%s4] sm:$0x1]
      %v2059 = vperm.slane %v2057, 0
      %vm2061 = vcmask 261120
      %v2063 = vsel %vm2061, %v2049, 0
      %v2066 = vsel %vm2061, %v2050, 0
      %v2069 = vsel %vm2061, %v2051, 0
      %v2072 = vsel %vm2061, %v2052, 0
      %2074 = vmatpush.msra.mxu0 0.0
      %2075 = vmatpush.msra.mxu0 0.0
      %2076 = vmatpush.msra.mxu0 0.0
      %2077 = vmatpush.msra.mxu0 0.0
      %2078 = vmatpush.msra.mxu0 0.0
      %2079 = vmatpush.msra.mxu0 0.0
      %2080 = vmatpush.msra.mxu0 0.0
      %2081 = vmatpush.msra.mxu0 0.0
      %2082 = vmatpush.msra.mxu0 0.0
      %2083 = vmatpush.msra.mxu0 0.0
      %2084 = vmatpush.msra.mxu0 0.0
      %2085 = vmatpush.msra.mxu0 0.0
      %2086 = vmatpush.msra.mxu0 %v2056
      %2087 = vmatpush.msra.mxu0 %v2055
      %2088 = vmatpush.msra.mxu0 %v2054
      %2089 = vmatpush.msra.mxu0 %v2053
      %2090 = vmatmul.f32.gmra.mxu0 %v2063
      %v2091 = vpop.f32.mrf.mxu0
      %v2092 = vadd.f32 %v2059, %v2091
      %2093 = vmatmul.f32.gmra.mxu0 %v2066
      %v2094 = vpop.f32.mrf.mxu0
      %v2095 = vadd.f32 %v2059, %v2094
      %2096 = vmatmul.f32.gmra.mxu0 %v2069
      %v2097 = vpop.f32.mrf.mxu0
      %v2098 = vadd.f32 %v2059, %v2097
      %2099 = vmatmul.f32.gmra.mxu0 %v2072
      %v2100 = vpop.f32.mrf.mxu0
      %v2101 = vadd.f32 %v2059, %v2100
      %2102 = vdwg.mxu0
      %v2107 = vrot.slane %v2092, 1
      %v2108 = vrot.slane %v2092, 2
      %v2109 = vrot.slane %v2092, 3
      %v2110 = vrot.slane %v2092, 4
      %v2111 = vrot.slane %v2092, 5
      %v2112 = vrot.slane %v2092, 6
      %v2113 = vrot.slane %v2092, 7
      %v2114 = vrot.slane %v2095, 1
      %v2115 = vrot.slane %v2095, 2
      %v2116 = vrot.slane %v2095, 3
      %v2117 = vrot.slane %v2095, 4
      %v2118 = vrot.slane %v2095, 5
      %v2119 = vrot.slane %v2095, 6
      %v2120 = vrot.slane %v2095, 7
      %v2121 = vrot.slane %v2098, 1
      %v2122 = vrot.slane %v2098, 2
      %v2123 = vrot.slane %v2098, 3
      %v2124 = vrot.slane %v2098, 4
      %v2125 = vrot.slane %v2098, 5
      %v2126 = vrot.slane %v2098, 6
      %v2127 = vrot.slane %v2098, 7
      %v2128 = vrot.slane %v2101, 1
      %v2129 = vrot.slane %v2101, 2
      %v2130 = vrot.slane %v2101, 3
      %v2131 = vrot.slane %v2101, 4
      %v2132 = vrot.slane %v2101, 5
      %v2133 = vrot.slane %v2101, 6
      %v2134 = vrot.slane %v2101, 7
      %v2135 = vperm.slane %v2092, 0
      %v2136 = vperm.slane %v2107, 0
      %v2137 = vperm.slane %v2108, 0
      %v2138 = vperm.slane %v2109, 0
      %v2139 = vperm.slane %v2110, 0
      %v2140 = vperm.slane %v2111, 0
      %v2141 = vperm.slane %v2112, 0
      %v2142 = vperm.slane %v2113, 0
      %v2143 = vperm.slane %v2095, 0
      %v2144 = vperm.slane %v2114, 0
      %v2145 = vperm.slane %v2115, 0
      %v2146 = vperm.slane %v2116, 0
      %v2147 = vperm.slane %v2117, 0
      %v2148 = vperm.slane %v2118, 0
      %v2149 = vperm.slane %v2119, 0
      %v2150 = vperm.slane %v2120, 0
      %v2151 = vperm.slane %v2098, 0
      %v2152 = vperm.slane %v2121, 0
      %v2153 = vperm.slane %v2122, 0
      %v2154 = vperm.slane %v2123, 0
      %v2155 = vperm.slane %v2124, 0
      %v2156 = vperm.slane %v2125, 0
      %v2157 = vperm.slane %v2126, 0
      %v2158 = vperm.slane %v2127, 0
      %v2159 = vperm.slane %v2101, 0
      %v2160 = vperm.slane %v2128, 0
      %v2161 = vperm.slane %v2129, 0
      %v2162 = vperm.slane %v2130, 0
      %v2163 = vperm.slane %v2131, 0
      %v2164 = vperm.slane %v2132, 0
      %v2165 = vperm.slane %v2133, 0
      %v2166 = vperm.slane %v2134, 0
      %2167 = vrot.lane.b32.xlu0 %v2135, 32
      %v2168 = vpop.permute.xlu0 %2167
      %2169 = vrot.lane.b32.xlu0 %v2136, 32
      %v2170 = vpop.permute.xlu0 %2169
      %2171 = vrot.lane.b32.xlu0 %v2137, 32
      %v2172 = vpop.permute.xlu0 %2171
      %2173 = vrot.lane.b32.xlu0 %v2138, 32
      %v2174 = vpop.permute.xlu0 %2173
      %2175 = vrot.lane.b32.xlu0 %v2139, 32
      %v2176 = vpop.permute.xlu0 %2175
      %2177 = vrot.lane.b32.xlu0 %v2140, 32
      %v2178 = vpop.permute.xlu0 %2177
      %2179 = vrot.lane.b32.xlu0 %v2141, 32
      %v2180 = vpop.permute.xlu0 %2179
      %2181 = vrot.lane.b32.xlu0 %v2142, 32
      %v2182 = vpop.permute.xlu0 %2181
      %2183 = vrot.lane.b32.xlu0 %v2143, 32
      %v2184 = vpop.permute.xlu0 %2183
      %2185 = vrot.lane.b32.xlu0 %v2144, 32
      %v2186 = vpop.permute.xlu0 %2185
      %2187 = vrot.lane.b32.xlu0 %v2145, 32
      %v2188 = vpop.permute.xlu0 %2187
      %2189 = vrot.lane.b32.xlu0 %v2146, 32
      %v2190 = vpop.permute.xlu0 %2189
      %2191 = vrot.lane.b32.xlu0 %v2147, 32
      %v2192 = vpop.permute.xlu0 %2191
      %2193 = vrot.lane.b32.xlu0 %v2148, 32
      %v2194 = vpop.permute.xlu0 %2193
      %2195 = vrot.lane.b32.xlu0 %v2149, 32
      %v2196 = vpop.permute.xlu0 %2195
      %2197 = vrot.lane.b32.xlu0 %v2150, 32
      %v2198 = vpop.permute.xlu0 %2197
      %2199 = vrot.lane.b32.xlu0 %v2151, 32
      %v2200 = vpop.permute.xlu0 %2199
      %2201 = vrot.lane.b32.xlu0 %v2152, 32
      %v2202 = vpop.permute.xlu0 %2201
      %2203 = vrot.lane.b32.xlu0 %v2153, 32
      %v2204 = vpop.permute.xlu0 %2203
      %2205 = vrot.lane.b32.xlu0 %v2154, 32
      %v2206 = vpop.permute.xlu0 %2205
      %2207 = vrot.lane.b32.xlu0 %v2155, 32
      %v2208 = vpop.permute.xlu0 %2207
      %2209 = vrot.lane.b32.xlu0 %v2156, 32
      %v2210 = vpop.permute.xlu0 %2209
      %2211 = vrot.lane.b32.xlu0 %v2157, 32
      %v2212 = vpop.permute.xlu0 %2211
      %2213 = vrot.lane.b32.xlu0 %v2158, 32
      %v2214 = vpop.permute.xlu0 %2213
      %2215 = vrot.lane.b32.xlu0 %v2159, 32
      %v2216 = vpop.permute.xlu0 %2215
      %2217 = vrot.lane.b32.xlu0 %v2160, 32
      %v2218 = vpop.permute.xlu0 %2217
      %2219 = vrot.lane.b32.xlu0 %v2161, 32
      %v2220 = vpop.permute.xlu0 %2219
      %2221 = vrot.lane.b32.xlu0 %v2162, 32
      %v2222 = vpop.permute.xlu0 %2221
      %2223 = vrot.lane.b32.xlu0 %v2163, 32
      %v2224 = vpop.permute.xlu0 %2223
      %2225 = vrot.lane.b32.xlu0 %v2164, 32
      %v2226 = vpop.permute.xlu0 %2225
      %2227 = vrot.lane.b32.xlu0 %v2165, 32
      %v2228 = vpop.permute.xlu0 %2227
      %2229 = vrot.lane.b32.xlu0 %v2166, 32
      %v2230 = vpop.permute.xlu0 %2229
      %v2263 = vadd.f32 %v1970, %v2168
      %v2264 = vadd.f32 %v1972, %v2170
      %v2265 = vadd.f32 %v1975, %v2172
      %v2266 = vadd.f32 %v1977, %v2174
      %v2267 = vadd.f32 %v1980, %v2176
      %v2268 = vadd.f32 %v1982, %v2178
      %v2269 = vadd.f32 %v1985, %v2180
      %v2270 = vadd.f32 %v1987, %v2182
      %v2271 = vadd.f32 %v1990, %v2184
      %v2272 = vadd.f32 %v1992, %v2186
      %v2273 = vadd.f32 %v1995, %v2188
      %v2274 = vadd.f32 %v1997, %v2190
      %v2275 = vadd.f32 %v2000, %v2192
      %v2276 = vadd.f32 %v2002, %v2194
      %v2277 = vadd.f32 %v2005, %v2196
      %v2278 = vadd.f32 %v2007, %v2198
      %v2279 = vadd.f32 %v2010, %v2200
      %v2280 = vadd.f32 %v2012, %v2202
      %v2281 = vadd.f32 %v2015, %v2204
      %v2282 = vadd.f32 %v2017, %v2206
      %v2283 = vadd.f32 %v2020, %v2208
      %v2284 = vadd.f32 %v2022, %v2210
      %v2285 = vadd.f32 %v2025, %v2212
      %v2286 = vadd.f32 %v2027, %v2214
      %v2287 = vadd.f32 %v2030, %v2216
      %v2288 = vadd.f32 %v2032, %v2218
      %v2289 = vadd.f32 %v2035, %v2220
      %v2290 = vadd.f32 %v2037, %v2222
      %v2291 = vadd.f32 %v2040, %v2224
      %v2292 = vadd.f32 %v2042, %v2226
      %v2293 = vadd.f32 %v2045, %v2228
      %v2294 = vadd.f32 %v2047, %v2230
      %v2295 = vmax.f32 %v2263, 0.0
      %v2296 = vmax.f32 %v2264, 0.0
      %v2297 = vmax.f32 %v2265, 0.0
      %v2298 = vmax.f32 %v2266, 0.0
      %v2299 = vmax.f32 %v2267, 0.0
      %v2300 = vmax.f32 %v2268, 0.0
      %v2301 = vmax.f32 %v2269, 0.0
      %v2302 = vmax.f32 %v2270, 0.0
      %v2303 = vmax.f32 %v2271, 0.0
      %v2304 = vmax.f32 %v2272, 0.0
      %v2305 = vmax.f32 %v2273, 0.0
      %v2306 = vmax.f32 %v2274, 0.0
      %v2307 = vmax.f32 %v2275, 0.0
      %v2308 = vmax.f32 %v2276, 0.0
      %v2309 = vmax.f32 %v2277, 0.0
      %v2310 = vmax.f32 %v2278, 0.0
      %v2311 = vmax.f32 %v2279, 0.0
      %v2312 = vmax.f32 %v2280, 0.0
      %v2313 = vmax.f32 %v2281, 0.0
      %v2314 = vmax.f32 %v2282, 0.0
      %v2315 = vmax.f32 %v2283, 0.0
      %v2316 = vmax.f32 %v2284, 0.0
      %v2317 = vmax.f32 %v2285, 0.0
      %v2318 = vmax.f32 %v2286, 0.0
      %v2319 = vmax.f32 %v2287, 0.0
      %v2320 = vmax.f32 %v2288, 0.0
      %v2321 = vmax.f32 %v2289, 0.0
      %v2322 = vmax.f32 %v2290, 0.0
      %v2323 = vmax.f32 %v2291, 0.0
      %v2324 = vmax.f32 %v2292, 0.0
      %v2325 = vmax.f32 %v2293, 0.0
      %v2326 = vmax.f32 %v2294, 0.0
      %v2327 = vld [vmem:[%s5] sm:$0x1]
      %v2329 = vperm.slane %v2327, 0
      %2330 = vrot.lane.b32.xlu0 %v2329, 32
      %v2331 = vpop.permute.xlu0 %2330
      %v2333 = vmul.f32 %v2295, %v2331
      %v2334 = vmul.f32 %v2296, %v2331
      %v2335 = vmul.f32 %v2297, %v2331
      %v2336 = vmul.f32 %v2298, %v2331
      %v2337 = vmul.f32 %v2299, %v2331
      %v2338 = vmul.f32 %v2300, %v2331
      %v2339 = vmul.f32 %v2301, %v2331
      %v2340 = vmul.f32 %v2302, %v2331
      %v2341 = vmul.f32 %v2303, %v2331
      %v2342 = vmul.f32 %v2304, %v2331
      %v2343 = vmul.f32 %v2305, %v2331
      %v2344 = vmul.f32 %v2306, %v2331
      %v2345 = vmul.f32 %v2307, %v2331
      %v2346 = vmul.f32 %v2308, %v2331
      %v2347 = vmul.f32 %v2309, %v2331
      %v2348 = vmul.f32 %v2310, %v2331
      %v2349 = vmul.f32 %v2311, %v2331
      %v2350 = vmul.f32 %v2312, %v2331
      %v2351 = vmul.f32 %v2313, %v2331
      %v2352 = vmul.f32 %v2314, %v2331
      %v2353 = vmul.f32 %v2315, %v2331
      %v2354 = vmul.f32 %v2316, %v2331
      %v2355 = vmul.f32 %v2317, %v2331
      %v2356 = vmul.f32 %v2318, %v2331
      %v2357 = vmul.f32 %v2319, %v2331
      %v2358 = vmul.f32 %v2320, %v2331
      %v2359 = vmul.f32 %v2321, %v2331
      %v2360 = vmul.f32 %v2322, %v2331
      %v2361 = vmul.f32 %v2323, %v2331
      %v2362 = vmul.f32 %v2324, %v2331
      %v2363 = vmul.f32 %v2325, %v2331
      %v2364 = vmul.f32 %v2326, %v2331
      %2397 = vrot.lane.b32.xlu0 %v2333, 96
      %v2398 = vpop.permute.xlu0 %2397
      %2399 = vrot.lane.b32.xlu0 %v2334, 96
      %v2400 = vpop.permute.xlu0 %2399
      %2401 = vrot.lane.b32.xlu0 %v2335, 96
      %v2402 = vpop.permute.xlu0 %2401
      %2403 = vrot.lane.b32.xlu0 %v2336, 96
      %v2404 = vpop.permute.xlu0 %2403
      %2405 = vrot.lane.b32.xlu0 %v2337, 96
      %v2406 = vpop.permute.xlu0 %2405
      %2407 = vrot.lane.b32.xlu0 %v2338, 96
      %v2408 = vpop.permute.xlu0 %2407
      %2409 = vrot.lane.b32.xlu0 %v2339, 96
      %v2410 = vpop.permute.xlu0 %2409
      %2411 = vrot.lane.b32.xlu0 %v2340, 96
      %v2412 = vpop.permute.xlu0 %2411
      %2413 = vrot.lane.b32.xlu0 %v2341, 96
      %v2414 = vpop.permute.xlu0 %2413
      %2415 = vrot.lane.b32.xlu0 %v2342, 96
      %v2416 = vpop.permute.xlu0 %2415
      %2417 = vrot.lane.b32.xlu0 %v2343, 96
      %v2418 = vpop.permute.xlu0 %2417
      %2419 = vrot.lane.b32.xlu0 %v2344, 96
      %v2420 = vpop.permute.xlu0 %2419
      %2421 = vrot.lane.b32.xlu0 %v2345, 96
      %v2422 = vpop.permute.xlu0 %2421
      %2423 = vrot.lane.b32.xlu0 %v2346, 96
      %v2424 = vpop.permute.xlu0 %2423
      %2425 = vrot.lane.b32.xlu0 %v2347, 96
      %v2426 = vpop.permute.xlu0 %2425
      %2427 = vrot.lane.b32.xlu0 %v2348, 96
      %v2428 = vpop.permute.xlu0 %2427
      %2429 = vrot.lane.b32.xlu0 %v2349, 96
      %v2430 = vpop.permute.xlu0 %2429
      %2431 = vrot.lane.b32.xlu0 %v2350, 96
      %v2432 = vpop.permute.xlu0 %2431
      %2433 = vrot.lane.b32.xlu0 %v2351, 96
      %v2434 = vpop.permute.xlu0 %2433
      %2435 = vrot.lane.b32.xlu0 %v2352, 96
      %v2436 = vpop.permute.xlu0 %2435
      %2437 = vrot.lane.b32.xlu0 %v2353, 96
      %v2438 = vpop.permute.xlu0 %2437
      %2439 = vrot.lane.b32.xlu0 %v2354, 96
      %v2440 = vpop.permute.xlu0 %2439
      %2441 = vrot.lane.b32.xlu0 %v2355, 96
      %v2442 = vpop.permute.xlu0 %2441
      %2443 = vrot.lane.b32.xlu0 %v2356, 96
      %v2444 = vpop.permute.xlu0 %2443
      %2445 = vrot.lane.b32.xlu0 %v2357, 96
      %v2446 = vpop.permute.xlu0 %2445
      %2447 = vrot.lane.b32.xlu0 %v2358, 96
      %v2448 = vpop.permute.xlu0 %2447
      %2449 = vrot.lane.b32.xlu0 %v2359, 96
      %v2450 = vpop.permute.xlu0 %2449
      %2451 = vrot.lane.b32.xlu0 %v2360, 96
      %v2452 = vpop.permute.xlu0 %2451
      %2453 = vrot.lane.b32.xlu0 %v2361, 96
      %v2454 = vpop.permute.xlu0 %2453
      %2455 = vrot.lane.b32.xlu0 %v2362, 96
      %v2456 = vpop.permute.xlu0 %2455
      %2457 = vrot.lane.b32.xlu0 %v2363, 96
      %v2458 = vpop.permute.xlu0 %2457
      %2459 = vrot.lane.b32.xlu0 %v2364, 96
      %v2460 = vpop.permute.xlu0 %2459
      %vm2493 = vcmask 130048
      %v2494 = vsel %vm2493, %v2398, 0.0
      %2495 = vadd.xlane.f32.xlu0 %v2494
      %v2496 = vpop.xlane.xlu0 %2495
      %v2497 = vsel %vm2493, %v2400, 0.0
      %2498 = vadd.xlane.f32.xlu0 %v2497
      %v2499 = vpop.xlane.xlu0 %2498
      %v2500 = vsel %vm2493, %v2402, 0.0
      %2501 = vadd.xlane.f32.xlu0 %v2500
      %v2502 = vpop.xlane.xlu0 %2501
      %v2503 = vsel %vm2493, %v2404, 0.0
      %2504 = vadd.xlane.f32.xlu0 %v2503
      %v2505 = vpop.xlane.xlu0 %2504
      %v2506 = vsel %vm2493, %v2406, 0.0
      %2507 = vadd.xlane.f32.xlu0 %v2506
      %v2508 = vpop.xlane.xlu0 %2507
      %v2509 = vsel %vm2493, %v2408, 0.0
      %2510 = vadd.xlane.f32.xlu0 %v2509
      %v2511 = vpop.xlane.xlu0 %2510
      %v2512 = vsel %vm2493, %v2410, 0.0
      %2513 = vadd.xlane.f32.xlu0 %v2512
      %v2514 = vpop.xlane.xlu0 %2513
      %v2515 = vsel %vm2493, %v2412, 0.0
      %2516 = vadd.xlane.f32.xlu0 %v2515
      %v2517 = vpop.xlane.xlu0 %2516
      %v2518 = vsel %vm2493, %v2414, 0.0
      %2519 = vadd.xlane.f32.xlu0 %v2518
      %v2520 = vpop.xlane.xlu0 %2519
      %v2521 = vsel %vm2493, %v2416, 0.0
      %2522 = vadd.xlane.f32.xlu0 %v2521
      %v2523 = vpop.xlane.xlu0 %2522
      %v2524 = vsel %vm2493, %v2418, 0.0
      %2525 = vadd.xlane.f32.xlu0 %v2524
      %v2526 = vpop.xlane.xlu0 %2525
      %v2527 = vsel %vm2493, %v2420, 0.0
      %2528 = vadd.xlane.f32.xlu0 %v2527
      %v2529 = vpop.xlane.xlu0 %2528
      %v2530 = vsel %vm2493, %v2422, 0.0
      %2531 = vadd.xlane.f32.xlu0 %v2530
      %v2532 = vpop.xlane.xlu0 %2531
      %v2533 = vsel %vm2493, %v2424, 0.0
      %2534 = vadd.xlane.f32.xlu0 %v2533
      %v2535 = vpop.xlane.xlu0 %2534
      %v2536 = vsel %vm2493, %v2426, 0.0
      %2537 = vadd.xlane.f32.xlu0 %v2536
      %v2538 = vpop.xlane.xlu0 %2537
      %v2539 = vsel %vm2493, %v2428, 0.0
      %2540 = vadd.xlane.f32.xlu0 %v2539
      %v2541 = vpop.xlane.xlu0 %2540
      %v2542 = vsel %vm2493, %v2430, 0.0
      %2543 = vadd.xlane.f32.xlu0 %v2542
      %v2544 = vpop.xlane.xlu0 %2543
      %v2545 = vsel %vm2493, %v2432, 0.0
      %2546 = vadd.xlane.f32.xlu0 %v2545
      %v2547 = vpop.xlane.xlu0 %2546
      %v2548 = vsel %vm2493, %v2434, 0.0
      %2549 = vadd.xlane.f32.xlu0 %v2548
      %v2550 = vpop.xlane.xlu0 %2549
      %v2551 = vsel %vm2493, %v2436, 0.0
      %2552 = vadd.xlane.f32.xlu0 %v2551
      %v2553 = vpop.xlane.xlu0 %2552
      %v2554 = vsel %vm2493, %v2438, 0.0
      %2555 = vadd.xlane.f32.xlu0 %v2554
      %v2556 = vpop.xlane.xlu0 %2555
      %v2557 = vsel %vm2493, %v2440, 0.0
      %2558 = vadd.xlane.f32.xlu0 %v2557
      %v2559 = vpop.xlane.xlu0 %2558
      %v2560 = vsel %vm2493, %v2442, 0.0
      %2561 = vadd.xlane.f32.xlu0 %v2560
      %v2562 = vpop.xlane.xlu0 %2561
      %v2563 = vsel %vm2493, %v2444, 0.0
      %2564 = vadd.xlane.f32.xlu0 %v2563
      %v2565 = vpop.xlane.xlu0 %2564
      %v2566 = vsel %vm2493, %v2446, 0.0
      %2567 = vadd.xlane.f32.xlu0 %v2566
      %v2568 = vpop.xlane.xlu0 %2567
      %v2569 = vsel %vm2493, %v2448, 0.0
      %2570 = vadd.xlane.f32.xlu0 %v2569
      %v2571 = vpop.xlane.xlu0 %2570
      %v2572 = vsel %vm2493, %v2450, 0.0
      %2573 = vadd.xlane.f32.xlu0 %v2572
      %v2574 = vpop.xlane.xlu0 %2573
      %v2575 = vsel %vm2493, %v2452, 0.0
      %2576 = vadd.xlane.f32.xlu0 %v2575
      %v2577 = vpop.xlane.xlu0 %2576
      %v2578 = vsel %vm2493, %v2454, 0.0
      %2579 = vadd.xlane.f32.xlu0 %v2578
      %v2580 = vpop.xlane.xlu0 %2579
      %v2581 = vsel %vm2493, %v2456, 0.0
      %2582 = vadd.xlane.f32.xlu0 %v2581
      %v2583 = vpop.xlane.xlu0 %2582
      %v2584 = vsel %vm2493, %v2458, 0.0
      %2585 = vadd.xlane.f32.xlu0 %v2584
      %v2586 = vpop.xlane.xlu0 %2585
      %v2587 = vsel %vm2493, %v2460, 0.0
      %2588 = vadd.xlane.f32.xlu0 %v2587
      %v2589 = vpop.xlane.xlu0 %2588
      %s2590 = sld [smem:[#allocation2]]
      %v2591 = vstv %s2590
      %v2592 = vadd.f32 %v2496, %v2591
      %v2593 = vadd.f32 %v2499, %v2591
      %v2594 = vadd.f32 %v2502, %v2591
      %v2595 = vadd.f32 %v2505, %v2591
      %v2596 = vadd.f32 %v2508, %v2591
      %v2597 = vadd.f32 %v2511, %v2591
      %v2598 = vadd.f32 %v2514, %v2591
      %v2599 = vadd.f32 %v2517, %v2591
      %v2600 = vadd.f32 %v2520, %v2591
      %v2601 = vadd.f32 %v2523, %v2591
      %v2602 = vadd.f32 %v2526, %v2591
      %v2603 = vadd.f32 %v2529, %v2591
      %v2604 = vadd.f32 %v2532, %v2591
      %v2605 = vadd.f32 %v2535, %v2591
      %v2606 = vadd.f32 %v2538, %v2591
      %v2607 = vadd.f32 %v2541, %v2591
      %v2608 = vadd.f32 %v2544, %v2591
      %v2609 = vadd.f32 %v2547, %v2591
      %v2610 = vadd.f32 %v2550, %v2591
      %v2611 = vadd.f32 %v2553, %v2591
      %v2612 = vadd.f32 %v2556, %v2591
      %v2613 = vadd.f32 %v2559, %v2591
      %v2614 = vadd.f32 %v2562, %v2591
      %v2615 = vadd.f32 %v2565, %v2591
      %v2616 = vadd.f32 %v2568, %v2591
      %v2617 = vadd.f32 %v2571, %v2591
      %v2618 = vadd.f32 %v2574, %v2591
      %v2619 = vadd.f32 %v2577, %v2591
      %v2620 = vadd.f32 %v2580, %v2591
      %v2621 = vadd.f32 %v2583, %v2591
      %v2622 = vadd.f32 %v2586, %v2591
      %v2623 = vadd.f32 %v2589, %v2591
      %v2624 = vmax.f32 %v2592, 0.0
      %v2625 = vmax.f32 %v2593, 0.0
      %v2626 = vmax.f32 %v2594, 0.0
      %v2627 = vmax.f32 %v2595, 0.0
      %v2628 = vmax.f32 %v2596, 0.0
      %v2629 = vmax.f32 %v2597, 0.0
      %v2630 = vmax.f32 %v2598, 0.0
      %v2631 = vmax.f32 %v2599, 0.0
      %v2632 = vmax.f32 %v2600, 0.0
      %v2633 = vmax.f32 %v2601, 0.0
      %v2634 = vmax.f32 %v2602, 0.0
      %v2635 = vmax.f32 %v2603, 0.0
      %v2636 = vmax.f32 %v2604, 0.0
      %v2637 = vmax.f32 %v2605, 0.0
      %v2638 = vmax.f32 %v2606, 0.0
      %v2639 = vmax.f32 %v2607, 0.0
      %v2640 = vmax.f32 %v2608, 0.0
      %v2641 = vmax.f32 %v2609, 0.0
      %v2642 = vmax.f32 %v2610, 0.0
      %v2643 = vmax.f32 %v2611, 0.0
      %v2644 = vmax.f32 %v2612, 0.0
      %v2645 = vmax.f32 %v2613, 0.0
      %v2646 = vmax.f32 %v2614, 0.0
      %v2647 = vmax.f32 %v2615, 0.0
      %v2648 = vmax.f32 %v2616, 0.0
      %v2649 = vmax.f32 %v2617, 0.0
      %v2650 = vmax.f32 %v2618, 0.0
      %v2651 = vmax.f32 %v2619, 0.0
      %v2652 = vmax.f32 %v2620, 0.0
      %v2653 = vmax.f32 %v2621, 0.0
      %v2654 = vmax.f32 %v2622, 0.0
      %v2655 = vmax.f32 %v2623, 0.0
      %v2688 = vperm.slane %v2624, %v365
      %v2689 = vperm.slane %v2625, %v365
      %v2690 = vperm.slane %v2626, %v365
      %v2691 = vperm.slane %v2627, %v365
      %v2692 = vperm.slane %v2628, %v365
      %v2693 = vperm.slane %v2629, %v365
      %v2694 = vperm.slane %v2630, %v365
      %v2695 = vperm.slane %v2631, %v365
      %v2696 = vperm.slane %v2632, %v365
      %v2697 = vperm.slane %v2633, %v365
      %v2698 = vperm.slane %v2634, %v365
      %v2699 = vperm.slane %v2635, %v365
      %v2700 = vperm.slane %v2636, %v365
      %v2701 = vperm.slane %v2637, %v365
      %v2702 = vperm.slane %v2638, %v365
      %v2703 = vperm.slane %v2639, %v365
      %v2704 = vperm.slane %v2640, %v365
      %v2705 = vperm.slane %v2641, %v365
      %v2706 = vperm.slane %v2642, %v365
      %v2707 = vperm.slane %v2643, %v365
      %v2708 = vperm.slane %v2644, %v365
      %v2709 = vperm.slane %v2645, %v365
      %v2710 = vperm.slane %v2646, %v365
      %v2711 = vperm.slane %v2647, %v365
      %v2712 = vperm.slane %v2648, %v365
      %v2713 = vperm.slane %v2649, %v365
      %v2714 = vperm.slane %v2650, %v365
      %v2715 = vperm.slane %v2651, %v365
      %v2716 = vperm.slane %v2652, %v365
      %v2717 = vperm.slane %v2653, %v365
      %v2718 = vperm.slane %v2654, %v365
      %v2719 = vperm.slane %v2655, %v365
      %vm2720 = vcmask 1041409
      %v2721 = vsel %vm2720, %v2689, %v2688
      %vm2722 = vcmask 1042434
      %v2723 = vsel %vm2722, %v2690, %v2721
      %vm2724 = vcmask 1043459
      %v2725 = vsel %vm2724, %v2691, %v2723
      %vm2726 = vcmask 1044484
      %v2727 = vsel %vm2726, %v2692, %v2725
      %vm2728 = vcmask 1045509
      %v2729 = vsel %vm2728, %v2693, %v2727
      %vm2730 = vcmask 1046534
      %v2731 = vsel %vm2730, %v2694, %v2729
      %vm2732 = vcmask 1047559
      %v2733 = vsel %vm2732, %v2695, %v2731
      %v2734 = vsel %vm2720, %v2697, %v2696
      %v2735 = vsel %vm2722, %v2698, %v2734
      %v2736 = vsel %vm2724, %v2699, %v2735
      %v2737 = vsel %vm2726, %v2700, %v2736
      %v2738 = vsel %vm2728, %v2701, %v2737
      %v2739 = vsel %vm2730, %v2702, %v2738
      %v2740 = vsel %vm2732, %v2703, %v2739
      %v2741 = vsel %vm2720, %v2705, %v2704
      %v2742 = vsel %vm2722, %v2706, %v2741
      %v2743 = vsel %vm2724, %v2707, %v2742
      %v2744 = vsel %vm2726, %v2708, %v2743
      %v2745 = vsel %vm2728, %v2709, %v2744
      %v2746 = vsel %vm2730, %v2710, %v2745
      %v2747 = vsel %vm2732, %v2711, %v2746
      %v2748 = vsel %vm2720, %v2713, %v2712
      %v2749 = vsel %vm2722, %v2714, %v2748
      %v2750 = vsel %vm2724, %v2715, %v2749
      %v2751 = vsel %vm2726, %v2716, %v2750
      %v2752 = vsel %vm2728, %v2717, %v2751
      %v2753 = vsel %vm2730, %v2718, %v2752
      %v2754 = vsel %vm2732, %v2719, %v2753
      %vm2759 = vcmask 64512
      %v2760 = vsel %vm2759, %v2733, -inf
      %2761 = vmax.xlane.f32.xlu0 %v2760
      %v2762 = vpop.xlane.xlu0 %2761
      %v2763 = vsel %vm2759, %v2740, -inf
      %2764 = vmax.xlane.f32.xlu0 %v2763
      %v2765 = vpop.xlane.xlu0 %2764
      %v2766 = vsel %vm2759, %v2747, -inf
      %2767 = vmax.xlane.f32.xlu0 %v2766
      %v2768 = vpop.xlane.xlu0 %2767
      %v2769 = vsel %vm2759, %v2754, -inf
      %2770 = vmax.xlane.f32.xlu0 %v2769
      %v2771 = vpop.xlane.xlu0 %2770
      %v2776 = vperm.slane %v2762, 0
      %v2777 = vperm.slane %v2762, 1
      %v2778 = vperm.slane %v2762, 2
      %v2779 = vperm.slane %v2762, 3
      %v2780 = vperm.slane %v2762, 4
      %v2781 = vperm.slane %v2762, 5
      %v2782 = vperm.slane %v2762, 6
      %v2783 = vperm.slane %v2762, 7
      %v2784 = vperm.slane %v2765, 0
      %v2785 = vperm.slane %v2765, 1
      %v2786 = vperm.slane %v2765, 2
      %v2787 = vperm.slane %v2765, 3
      %v2788 = vperm.slane %v2765, 4
      %v2789 = vperm.slane %v2765, 5
      %v2790 = vperm.slane %v2765, 6
      %v2791 = vperm.slane %v2765, 7
      %v2792 = vperm.slane %v2768, 0
      %v2793 = vperm.slane %v2768, 1
      %v2794 = vperm.slane %v2768, 2
      %v2795 = vperm.slane %v2768, 3
      %v2796 = vperm.slane %v2768, 4
      %v2797 = vperm.slane %v2768, 5
      %v2798 = vperm.slane %v2768, 6
      %v2799 = vperm.slane %v2768, 7
      %v2800 = vperm.slane %v2771, 0
      %v2801 = vperm.slane %v2771, 1
      %v2802 = vperm.slane %v2771, 2
      %v2803 = vperm.slane %v2771, 3
      %v2804 = vperm.slane %v2771, 4
      %v2805 = vperm.slane %v2771, 5
      %v2806 = vperm.slane %v2771, 6
      %v2807 = vperm.slane %v2771, 7
      %v2840 = vsub.f32 %v2624, %v2776
      %v2841 = vsub.f32 %v2625, %v2777
      %v2842 = vsub.f32 %v2626, %v2778
      %v2843 = vsub.f32 %v2627, %v2779
      %v2844 = vsub.f32 %v2628, %v2780
      %v2845 = vsub.f32 %v2629, %v2781
      %v2846 = vsub.f32 %v2630, %v2782
      %v2847 = vsub.f32 %v2631, %v2783
      %v2848 = vsub.f32 %v2632, %v2784
      %v2849 = vsub.f32 %v2633, %v2785
      %v2850 = vsub.f32 %v2634, %v2786
      %v2851 = vsub.f32 %v2635, %v2787
      %v2852 = vsub.f32 %v2636, %v2788
      %v2853 = vsub.f32 %v2637, %v2789
      %v2854 = vsub.f32 %v2638, %v2790
      %v2855 = vsub.f32 %v2639, %v2791
      %v2856 = vsub.f32 %v2640, %v2792
      %v2857 = vsub.f32 %v2641, %v2793
      %v2858 = vsub.f32 %v2642, %v2794
      %v2859 = vsub.f32 %v2643, %v2795
      %v2860 = vsub.f32 %v2644, %v2796
      %v2861 = vsub.f32 %v2645, %v2797
      %v2862 = vsub.f32 %v2646, %v2798
      %v2863 = vsub.f32 %v2647, %v2799
      %v2864 = vsub.f32 %v2648, %v2800
      %v2865 = vsub.f32 %v2649, %v2801
      %v2866 = vsub.f32 %v2650, %v2802
      %v2867 = vsub.f32 %v2651, %v2803
      %v2868 = vsub.f32 %v2652, %v2804
      %v2869 = vsub.f32 %v2653, %v2805
      %v2870 = vsub.f32 %v2654, %v2806
      %v2871 = vsub.f32 %v2655, %v2807
      %v2872 = vmul.f32 %v2840, 1.442695
      %v2873 = vpow.pop %v2872
      %v2874 = vmul.f32 %v2841, 1.442695
      %v2875 = vpow.pop %v2874
      %v2876 = vmul.f32 %v2842, 1.442695
      %v2877 = vpow.pop %v2876
      %v2878 = vmul.f32 %v2843, 1.442695
      %v2879 = vpow.pop %v2878
      %v2880 = vmul.f32 %v2844, 1.442695
      %v2881 = vpow.pop %v2880
      %v2882 = vmul.f32 %v2845, 1.442695
      %v2883 = vpow.pop %v2882
      %v2884 = vmul.f32 %v2846, 1.442695
      %v2885 = vpow.pop %v2884
      %v2886 = vmul.f32 %v2847, 1.442695
      %v2887 = vpow.pop %v2886
      %v2888 = vmul.f32 %v2848, 1.442695
      %v2889 = vpow.pop %v2888
      %v2890 = vmul.f32 %v2849, 1.442695
      %v2891 = vpow.pop %v2890
      %v2892 = vmul.f32 %v2850, 1.442695
      %v2893 = vpow.pop %v2892
      %v2894 = vmul.f32 %v2851, 1.442695
      %v2895 = vpow.pop %v2894
      %v2896 = vmul.f32 %v2852, 1.442695
      %v2897 = vpow.pop %v2896
      %v2898 = vmul.f32 %v2853, 1.442695
      %v2899 = vpow.pop %v2898
      %v2900 = vmul.f32 %v2854, 1.442695
      %v2901 = vpow.pop %v2900
      %v2902 = vmul.f32 %v2855, 1.442695
      %v2903 = vpow.pop %v2902
      %v2904 = vmul.f32 %v2856, 1.442695
      %v2905 = vpow.pop %v2904
      %v2906 = vmul.f32 %v2857, 1.442695
      %v2907 = vpow.pop %v2906
      %v2908 = vmul.f32 %v2858, 1.442695
      %v2909 = vpow.pop %v2908
      %v2910 = vmul.f32 %v2859, 1.442695
      %v2911 = vpow.pop %v2910
      %v2912 = vmul.f32 %v2860, 1.442695
      %v2913 = vpow.pop %v2912
      %v2914 = vmul.f32 %v2861, 1.442695
      %v2915 = vpow.pop %v2914
      %v2916 = vmul.f32 %v2862, 1.442695
      %v2917 = vpow.pop %v2916
      %v2918 = vmul.f32 %v2863, 1.442695
      %v2919 = vpow.pop %v2918
      %v2920 = vmul.f32 %v2864, 1.442695
      %v2921 = vpow.pop %v2920
      %v2922 = vmul.f32 %v2865, 1.442695
      %v2923 = vpow.pop %v2922
      %v2924 = vmul.f32 %v2866, 1.442695
      %v2925 = vpow.pop %v2924
      %v2926 = vmul.f32 %v2867, 1.442695
      %v2927 = vpow.pop %v2926
      %v2928 = vmul.f32 %v2868, 1.442695
      %v2929 = vpow.pop %v2928
      %v2930 = vmul.f32 %v2869, 1.442695
      %v2931 = vpow.pop %v2930
      %v2932 = vmul.f32 %v2870, 1.442695
      %v2933 = vpow.pop %v2932
      %v2934 = vmul.f32 %v2871, 1.442695
      %v2935 = vpow.pop %v2934
      %2968 = vset.pattern.permute.xlu0 0
      %2969 = vperm.xlu0 %2968, %v2873
      %v2970 = vpop.permute.xlu0 %2969
      %2971 = vset.pattern.permute.xlu0 0
      %2972 = vperm.xlu0 %2971, %v2875
      %v2973 = vpop.permute.xlu0 %2972
      %2974 = vset.pattern.permute.xlu0 0
      %2975 = vperm.xlu0 %2974, %v2877
      %v2976 = vpop.permute.xlu0 %2975
      %2977 = vset.pattern.permute.xlu0 0
      %2978 = vperm.xlu0 %2977, %v2879
      %v2979 = vpop.permute.xlu0 %2978
      %2980 = vset.pattern.permute.xlu0 0
      %2981 = vperm.xlu0 %2980, %v2881
      %v2982 = vpop.permute.xlu0 %2981
      %2983 = vset.pattern.permute.xlu0 0
      %2984 = vperm.xlu0 %2983, %v2883
      %v2985 = vpop.permute.xlu0 %2984
      %2986 = vset.pattern.permute.xlu0 0
      %2987 = vperm.xlu0 %2986, %v2885
      %v2988 = vpop.permute.xlu0 %2987
      %2989 = vset.pattern.permute.xlu0 0
      %2990 = vperm.xlu0 %2989, %v2887
      %v2991 = vpop.permute.xlu0 %2990
      %2992 = vset.pattern.permute.xlu0 0
      %2993 = vperm.xlu0 %2992, %v2889
      %v2994 = vpop.permute.xlu0 %2993
      %2995 = vset.pattern.permute.xlu0 0
      %2996 = vperm.xlu0 %2995, %v2891
      %v2997 = vpop.permute.xlu0 %2996
      %2998 = vset.pattern.permute.xlu0 0
      %2999 = vperm.xlu0 %2998, %v2893
      %v3000 = vpop.permute.xlu0 %2999
      %3001 = vset.pattern.permute.xlu0 0
      %3002 = vperm.xlu0 %3001, %v2895
      %v3003 = vpop.permute.xlu0 %3002
      %3004 = vset.pattern.permute.xlu0 0
      %3005 = vperm.xlu0 %3004, %v2897
      %v3006 = vpop.permute.xlu0 %3005
      %3007 = vset.pattern.permute.xlu0 0
      %3008 = vperm.xlu0 %3007, %v2899
      %v3009 = vpop.permute.xlu0 %3008
      %3010 = vset.pattern.permute.xlu0 0
      %3011 = vperm.xlu0 %3010, %v2901
      %v3012 = vpop.permute.xlu0 %3011
      %3013 = vset.pattern.permute.xlu0 0
      %3014 = vperm.xlu0 %3013, %v2903
      %v3015 = vpop.permute.xlu0 %3014
      %3016 = vset.pattern.permute.xlu0 0
      %3017 = vperm.xlu0 %3016, %v2905
      %v3018 = vpop.permute.xlu0 %3017
      %3019 = vset.pattern.permute.xlu0 0
      %3020 = vperm.xlu0 %3019, %v2907
      %v3021 = vpop.permute.xlu0 %3020
      %3022 = vset.pattern.permute.xlu0 0
      %3023 = vperm.xlu0 %3022, %v2909
      %v3024 = vpop.permute.xlu0 %3023
      %3025 = vset.pattern.permute.xlu0 0
      %3026 = vperm.xlu0 %3025, %v2911
      %v3027 = vpop.permute.xlu0 %3026
      %3028 = vset.pattern.permute.xlu0 0
      %3029 = vperm.xlu0 %3028, %v2913
      %v3030 = vpop.permute.xlu0 %3029
      %3031 = vset.pattern.permute.xlu0 0
      %3032 = vperm.xlu0 %3031, %v2915
      %v3033 = vpop.permute.xlu0 %3032
      %3034 = vset.pattern.permute.xlu0 0
      %3035 = vperm.xlu0 %3034, %v2917
      %v3036 = vpop.permute.xlu0 %3035
      %3037 = vset.pattern.permute.xlu0 0
      %3038 = vperm.xlu0 %3037, %v2919
      %v3039 = vpop.permute.xlu0 %3038
      %3040 = vset.pattern.permute.xlu0 0
      %3041 = vperm.xlu0 %3040, %v2921
      %v3042 = vpop.permute.xlu0 %3041
      %3043 = vset.pattern.permute.xlu0 0
      %3044 = vperm.xlu0 %3043, %v2923
      %v3045 = vpop.permute.xlu0 %3044
      %3046 = vset.pattern.permute.xlu0 0
      %3047 = vperm.xlu0 %3046, %v2925
      %v3048 = vpop.permute.xlu0 %3047
      %3049 = vset.pattern.permute.xlu0 0
      %3050 = vperm.xlu0 %3049, %v2927
      %v3051 = vpop.permute.xlu0 %3050
      %3052 = vset.pattern.permute.xlu0 0
      %3053 = vperm.xlu0 %3052, %v2929
      %v3054 = vpop.permute.xlu0 %3053
      %3055 = vset.pattern.permute.xlu0 0
      %3056 = vperm.xlu0 %3055, %v2931
      %v3057 = vpop.permute.xlu0 %3056
      %3058 = vset.pattern.permute.xlu0 0
      %3059 = vperm.xlu0 %3058, %v2933
      %v3060 = vpop.permute.xlu0 %3059
      %3061 = vset.pattern.permute.xlu0 0
      %3062 = vperm.xlu0 %3061, %v2935
      %v3063 = vpop.permute.xlu0 %3062
      %v3064 = vperm.slane %v2970, %v365
      %v3065 = vperm.slane %v2973, %v365
      %v3066 = vperm.slane %v2976, %v365
      %v3067 = vperm.slane %v2979, %v365
      %v3068 = vperm.slane %v2982, %v365
      %v3069 = vperm.slane %v2985, %v365
      %v3070 = vperm.slane %v2988, %v365
      %v3071 = vperm.slane %v2991, %v365
      %v3072 = vperm.slane %v2994, %v365
      %v3073 = vperm.slane %v2997, %v365
      %v3074 = vperm.slane %v3000, %v365
      %v3075 = vperm.slane %v3003, %v365
      %v3076 = vperm.slane %v3006, %v365
      %v3077 = vperm.slane %v3009, %v365
      %v3078 = vperm.slane %v3012, %v365
      %v3079 = vperm.slane %v3015, %v365
      %v3080 = vperm.slane %v3018, %v365
      %v3081 = vperm.slane %v3021, %v365
      %v3082 = vperm.slane %v3024, %v365
      %v3083 = vperm.slane %v3027, %v365
      %v3084 = vperm.slane %v3030, %v365
      %v3085 = vperm.slane %v3033, %v365
      %v3086 = vperm.slane %v3036, %v365
      %v3087 = vperm.slane %v3039, %v365
      %v3088 = vperm.slane %v3042, %v365
      %v3089 = vperm.slane %v3045, %v365
      %v3090 = vperm.slane %v3048, %v365
      %v3091 = vperm.slane %v3051, %v365
      %v3092 = vperm.slane %v3054, %v365
      %v3093 = vperm.slane %v3057, %v365
      %v3094 = vperm.slane %v3060, %v365
      %v3095 = vperm.slane %v3063, %v365
      %v3096 = vsel %vm2720, %v3065, %v3064
      %v3097 = vsel %vm2722, %v3066, %v3096
      %v3098 = vsel %vm2724, %v3067, %v3097
      %v3099 = vsel %vm2726, %v3068, %v3098
      %v3100 = vsel %vm2728, %v3069, %v3099
      %v3101 = vsel %vm2730, %v3070, %v3100
      %v3102 = vsel %vm2732, %v3071, %v3101
      %v3103 = vsel %vm2720, %v3073, %v3072
      %v3104 = vsel %vm2722, %v3074, %v3103
      %v3105 = vsel %vm2724, %v3075, %v3104
      %v3106 = vsel %vm2726, %v3076, %v3105
      %v3107 = vsel %vm2728, %v3077, %v3106
      %v3108 = vsel %vm2730, %v3078, %v3107
      %v3109 = vsel %vm2732, %v3079, %v3108
      %v3110 = vsel %vm2720, %v3081, %v3080
      %v3111 = vsel %vm2722, %v3082, %v3110
      %v3112 = vsel %vm2724, %v3083, %v3111
      %v3113 = vsel %vm2726, %v3084, %v3112
      %v3114 = vsel %vm2728, %v3085, %v3113
      %v3115 = vsel %vm2730, %v3086, %v3114
      %v3116 = vsel %vm2732, %v3087, %v3115
      %v3117 = vsel %vm2720, %v3089, %v3088
      %v3118 = vsel %vm2722, %v3090, %v3117
      %v3119 = vsel %vm2724, %v3091, %v3118
      %v3120 = vsel %vm2726, %v3092, %v3119
      %v3121 = vsel %vm2728, %v3093, %v3120
      %v3122 = vsel %vm2730, %v3094, %v3121
      %v3123 = vsel %vm2732, %v3095, %v3122
      %v3128 = vsel %vm2759, %v3102, 0.0
      %3129 = vadd.xlane.f32.xlu0 %v3128
      %v3130 = vpop.xlane.xlu0 %3129
      %v3131 = vsel %vm2759, %v3109, 0.0
      %3132 = vadd.xlane.f32.xlu0 %v3131
      %v3133 = vpop.xlane.xlu0 %3132
      %v3134 = vsel %vm2759, %v3116, 0.0
      %3135 = vadd.xlane.f32.xlu0 %v3134
      %v3136 = vpop.xlane.xlu0 %3135
      %v3137 = vsel %vm2759, %v3123, 0.0
      %3138 = vadd.xlane.f32.xlu0 %v3137
      %v3139 = vpop.xlane.xlu0 %3138
      %v3140 = vrcp.pop %v3130
      %v3141 = vrcp.pop %v3133
      %v3142 = vrcp.pop %v3136
      %v3143 = vrcp.pop %v3139
      %v3148 = vperm.slane %v3140, 0
      %v3149 = vperm.slane %v3140, 1
      %v3150 = vperm.slane %v3140, 2
      %v3151 = vperm.slane %v3140, 3
      %v3152 = vperm.slane %v3140, 4
      %v3153 = vperm.slane %v3140, 5
      %v3154 = vperm.slane %v3140, 6
      %v3155 = vperm.slane %v3140, 7
      %v3156 = vperm.slane %v3141, 0
      %v3157 = vperm.slane %v3141, 1
      %v3158 = vperm.slane %v3141, 2
      %v3159 = vperm.slane %v3141, 3
      %v3160 = vperm.slane %v3141, 4
      %v3161 = vperm.slane %v3141, 5
      %v3162 = vperm.slane %v3141, 6
      %v3163 = vperm.slane %v3141, 7
      %v3164 = vperm.slane %v3142, 0
      %v3165 = vperm.slane %v3142, 1
      %v3166 = vperm.slane %v3142, 2
      %v3167 = vperm.slane %v3142, 3
      %v3168 = vperm.slane %v3142, 4
      %v3169 = vperm.slane %v3142, 5
      %v3170 = vperm.slane %v3142, 6
      %v3171 = vperm.slane %v3142, 7
      %v3172 = vperm.slane %v3143, 0
      %v3173 = vperm.slane %v3143, 1
      %v3174 = vperm.slane %v3143, 2
      %v3175 = vperm.slane %v3143, 3
      %v3176 = vperm.slane %v3143, 4
      %v3177 = vperm.slane %v3143, 5
      %v3178 = vperm.slane %v3143, 6
      %v3179 = vperm.slane %v3143, 7
      %v3212 = vmul.f32 %v2873, %v3148
      %v3213 = vmul.f32 %v2875, %v3149
      %v3214 = vmul.f32 %v2877, %v3150
      %v3215 = vmul.f32 %v2879, %v3151
      %v3216 = vmul.f32 %v2881, %v3152
      %v3217 = vmul.f32 %v2883, %v3153
      %v3218 = vmul.f32 %v2885, %v3154
      %v3219 = vmul.f32 %v2887, %v3155
      %v3220 = vmul.f32 %v2889, %v3156
      %v3221 = vmul.f32 %v2891, %v3157
      %v3222 = vmul.f32 %v2893, %v3158
      %v3223 = vmul.f32 %v2895, %v3159
      %v3224 = vmul.f32 %v2897, %v3160
      %v3225 = vmul.f32 %v2899, %v3161
      %v3226 = vmul.f32 %v2901, %v3162
      %v3227 = vmul.f32 %v2903, %v3163
      %v3228 = vmul.f32 %v2905, %v3164
      %v3229 = vmul.f32 %v2907, %v3165
      %v3230 = vmul.f32 %v2909, %v3166
      %v3231 = vmul.f32 %v2911, %v3167
      %v3232 = vmul.f32 %v2913, %v3168
      %v3233 = vmul.f32 %v2915, %v3169
      %v3234 = vmul.f32 %v2917, %v3170
      %v3235 = vmul.f32 %v2919, %v3171
      %v3236 = vmul.f32 %v2921, %v3172
      %v3237 = vmul.f32 %v2923, %v3173
      %v3238 = vmul.f32 %v2925, %v3174
      %v3239 = vmul.f32 %v2927, %v3175
      %v3240 = vmul.f32 %v2929, %v3176
      %v3241 = vmul.f32 %v2931, %v3177
      %v3242 = vmul.f32 %v2933, %v3178
      %v3243 = vmul.f32 %v2935, %v3179
      %3245 = vset.pattern.permute.xlu0 0
      %3246 = vperm.xlu0 %3245, %v3212
      %v3247 = vpop.permute.xlu0 %3246
      %3250 = vset.pattern.permute.xlu0 0
      %3251 = vperm.xlu0 %3250, %v3213
      %v3252 = vpop.permute.xlu0 %3251
      %3255 = vset.pattern.permute.xlu0 0
      %3256 = vperm.xlu0 %3255, %v3214
      %v3257 = vpop.permute.xlu0 %3256
      %3260 = vset.pattern.permute.xlu0 0
      %3261 = vperm.xlu0 %3260, %v3215
      %v3262 = vpop.permute.xlu0 %3261
      %3265 = vset.pattern.permute.xlu0 0
      %3266 = vperm.xlu0 %3265, %v3216
      %v3267 = vpop.permute.xlu0 %3266
      %3270 = vset.pattern.permute.xlu0 0
      %3271 = vperm.xlu0 %3270, %v3217
      %v3272 = vpop.permute.xlu0 %3271
      %3275 = vset.pattern.permute.xlu0 0
      %3276 = vperm.xlu0 %3275, %v3218
      %v3277 = vpop.permute.xlu0 %3276
      %3280 = vset.pattern.permute.xlu0 0
      %3281 = vperm.xlu0 %3280, %v3219
      %v3282 = vpop.permute.xlu0 %3281
      %3285 = vset.pattern.permute.xlu0 0
      %3286 = vperm.xlu0 %3285, %v3220
      %v3287 = vpop.permute.xlu0 %3286
      %3290 = vset.pattern.permute.xlu0 0
      %3291 = vperm.xlu0 %3290, %v3221
      %v3292 = vpop.permute.xlu0 %3291
      %3295 = vset.pattern.permute.xlu0 0
      %3296 = vperm.xlu0 %3295, %v3222
      %v3297 = vpop.permute.xlu0 %3296
      %3300 = vset.pattern.permute.xlu0 0
      %3301 = vperm.xlu0 %3300, %v3223
      %v3302 = vpop.permute.xlu0 %3301
      %3305 = vset.pattern.permute.xlu0 0
      %3306 = vperm.xlu0 %3305, %v3224
      %v3307 = vpop.permute.xlu0 %3306
      %3310 = vset.pattern.permute.xlu0 0
      %3311 = vperm.xlu0 %3310, %v3225
      %v3312 = vpop.permute.xlu0 %3311
      %3315 = vset.pattern.permute.xlu0 0
      %3316 = vperm.xlu0 %3315, %v3226
      %v3317 = vpop.permute.xlu0 %3316
      %3320 = vset.pattern.permute.xlu0 0
      %3321 = vperm.xlu0 %3320, %v3227
      %v3322 = vpop.permute.xlu0 %3321
      %3325 = vset.pattern.permute.xlu0 0
      %3326 = vperm.xlu0 %3325, %v3228
      %v3327 = vpop.permute.xlu0 %3326
      %3330 = vset.pattern.permute.xlu0 0
      %3331 = vperm.xlu0 %3330, %v3229
      %v3332 = vpop.permute.xlu0 %3331
      %3335 = vset.pattern.permute.xlu0 0
      %3336 = vperm.xlu0 %3335, %v3230
      %v3337 = vpop.permute.xlu0 %3336
      %3340 = vset.pattern.permute.xlu0 0
      %3341 = vperm.xlu0 %3340, %v3231
      %v3342 = vpop.permute.xlu0 %3341
      %3345 = vset.pattern.permute.xlu0 0
      %3346 = vperm.xlu0 %3345, %v3232
      %v3347 = vpop.permute.xlu0 %3346
      %3350 = vset.pattern.permute.xlu0 0
      %3351 = vperm.xlu0 %3350, %v3233
      %v3352 = vpop.permute.xlu0 %3351
      %3355 = vset.pattern.permute.xlu0 0
      %3356 = vperm.xlu0 %3355, %v3234
      %v3357 = vpop.permute.xlu0 %3356
      %3360 = vset.pattern.permute.xlu0 0
      %3361 = vperm.xlu0 %3360, %v3235
      %v3362 = vpop.permute.xlu0 %3361
      %3365 = vset.pattern.permute.xlu0 0
      %3366 = vperm.xlu0 %3365, %v3236
      %v3367 = vpop.permute.xlu0 %3366
      %3370 = vset.pattern.permute.xlu0 0
      %3371 = vperm.xlu0 %3370, %v3237
      %v3372 = vpop.permute.xlu0 %3371
      %3375 = vset.pattern.permute.xlu0 0
      %3376 = vperm.xlu0 %3375, %v3238
      %v3377 = vpop.permute.xlu0 %3376
      %3380 = vset.pattern.permute.xlu0 0
      %3381 = vperm.xlu0 %3380, %v3239
      %v3382 = vpop.permute.xlu0 %3381
      %3385 = vset.pattern.permute.xlu0 0
      %3386 = vperm.xlu0 %3385, %v3240
      %v3387 = vpop.permute.xlu0 %3386
      %3390 = vset.pattern.permute.xlu0 0
      %3391 = vperm.xlu0 %3390, %v3241
      %v3392 = vpop.permute.xlu0 %3391
      %3395 = vset.pattern.permute.xlu0 0
      %3396 = vperm.xlu0 %3395, %v3242
      %v3397 = vpop.permute.xlu0 %3396
      %3400 = vset.pattern.permute.xlu0 0
      %3401 = vperm.xlu0 %3400, %v3243
      %v3402 = vpop.permute.xlu0 %3401
      %v3404 = vmul.f32 %v3247, %v1970
      %v3405 = vmul.f32 %v3252, %v1972
      %v3406 = vmul.f32 %v3257, %v1975
      %v3407 = vmul.f32 %v3262, %v1977
      %v3408 = vmul.f32 %v3267, %v1980
      %v3409 = vmul.f32 %v3272, %v1982
      %v3410 = vmul.f32 %v3277, %v1985
      %v3411 = vmul.f32 %v3282, %v1987
      %v3412 = vmul.f32 %v3287, %v1990
      %v3413 = vmul.f32 %v3292, %v1992
      %v3414 = vmul.f32 %v3297, %v1995
      %v3415 = vmul.f32 %v3302, %v1997
      %v3416 = vmul.f32 %v3307, %v2000
      %v3417 = vmul.f32 %v3312, %v2002
      %v3418 = vmul.f32 %v3317, %v2005
      %v3419 = vmul.f32 %v3322, %v2007
      %v3420 = vmul.f32 %v3327, %v2010
      %v3421 = vmul.f32 %v3332, %v2012
      %v3422 = vmul.f32 %v3337, %v2015
      %v3423 = vmul.f32 %v3342, %v2017
      %v3424 = vmul.f32 %v3347, %v2020
      %v3425 = vmul.f32 %v3352, %v2022
      %v3426 = vmul.f32 %v3357, %v2025
      %v3427 = vmul.f32 %v3362, %v2027
      %v3428 = vmul.f32 %v3367, %v2030
      %v3429 = vmul.f32 %v3372, %v2032
      %v3430 = vmul.f32 %v3377, %v2035
      %v3431 = vmul.f32 %v3382, %v2037
      %v3432 = vmul.f32 %v3387, %v2040
      %v3433 = vmul.f32 %v3392, %v2042
      %v3434 = vmul.f32 %v3397, %v2045
      %v3435 = vmul.f32 %v3402, %v2047
      %v3436 = vsel %vm2061, %v3404, 0.0
      %v3437 = vrot.slane %v3436, 4
      %v3438 = vadd.f32 %v3436, %v3437
      %v3439 = vrot.slane %v3438, 2
      %v3440 = vadd.f32 %v3438, %v3439
      %v3441 = vrot.slane %v3440, 1
      %v3442 = vadd.f32 %v3440, %v3441
      %v3443 = vsel %vm2061, %v3405, 0.0
      %v3444 = vrot.slane %v3443, 4
      %v3445 = vadd.f32 %v3443, %v3444
      %v3446 = vrot.slane %v3445, 2
      %v3447 = vadd.f32 %v3445, %v3446
      %v3448 = vrot.slane %v3447, 1
      %v3449 = vadd.f32 %v3447, %v3448
      %v3450 = vsel %vm2061, %v3406, 0.0
      %v3451 = vrot.slane %v3450, 4
      %v3452 = vadd.f32 %v3450, %v3451
      %v3453 = vrot.slane %v3452, 2
      %v3454 = vadd.f32 %v3452, %v3453
      %v3455 = vrot.slane %v3454, 1
      %v3456 = vadd.f32 %v3454, %v3455
      %v3457 = vsel %vm2061, %v3407, 0.0
      %v3458 = vrot.slane %v3457, 4
      %v3459 = vadd.f32 %v3457, %v3458
      %v3460 = vrot.slane %v3459, 2
      %v3461 = vadd.f32 %v3459, %v3460
      %v3462 = vrot.slane %v3461, 1
      %v3463 = vadd.f32 %v3461, %v3462
      %v3464 = vsel %vm2061, %v3408, 0.0
      %v3465 = vrot.slane %v3464, 4
      %v3466 = vadd.f32 %v3464, %v3465
      %v3467 = vrot.slane %v3466, 2
      %v3468 = vadd.f32 %v3466, %v3467
      %v3469 = vrot.slane %v3468, 1
      %v3470 = vadd.f32 %v3468, %v3469
      %v3471 = vsel %vm2061, %v3409, 0.0
      %v3472 = vrot.slane %v3471, 4
      %v3473 = vadd.f32 %v3471, %v3472
      %v3474 = vrot.slane %v3473, 2
      %v3475 = vadd.f32 %v3473, %v3474
      %v3476 = vrot.slane %v3475, 1
      %v3477 = vadd.f32 %v3475, %v3476
      %v3478 = vsel %vm2061, %v3410, 0.0
      %v3479 = vrot.slane %v3478, 4
      %v3480 = vadd.f32 %v3478, %v3479
      %v3481 = vrot.slane %v3480, 2
      %v3482 = vadd.f32 %v3480, %v3481
      %v3483 = vrot.slane %v3482, 1
      %v3484 = vadd.f32 %v3482, %v3483
      %v3485 = vsel %vm2061, %v3411, 0.0
      %v3486 = vrot.slane %v3485, 4
      %v3487 = vadd.f32 %v3485, %v3486
      %v3488 = vrot.slane %v3487, 2
      %v3489 = vadd.f32 %v3487, %v3488
      %v3490 = vrot.slane %v3489, 1
      %v3491 = vadd.f32 %v3489, %v3490
      %v3492 = vsel %vm2061, %v3412, 0.0
      %v3493 = vrot.slane %v3492, 4
      %v3494 = vadd.f32 %v3492, %v3493
      %v3495 = vrot.slane %v3494, 2
      %v3496 = vadd.f32 %v3494, %v3495
      %v3497 = vrot.slane %v3496, 1
      %v3498 = vadd.f32 %v3496, %v3497
      %v3499 = vsel %vm2061, %v3413, 0.0
      %v3500 = vrot.slane %v3499, 4
      %v3501 = vadd.f32 %v3499, %v3500
      %v3502 = vrot.slane %v3501, 2
      %v3503 = vadd.f32 %v3501, %v3502
      %v3504 = vrot.slane %v3503, 1
      %v3505 = vadd.f32 %v3503, %v3504
      %v3506 = vsel %vm2061, %v3414, 0.0
      %v3507 = vrot.slane %v3506, 4
      %v3508 = vadd.f32 %v3506, %v3507
      %v3509 = vrot.slane %v3508, 2
      %v3510 = vadd.f32 %v3508, %v3509
      %v3511 = vrot.slane %v3510, 1
      %v3512 = vadd.f32 %v3510, %v3511
      %v3513 = vsel %vm2061, %v3415, 0.0
      %v3514 = vrot.slane %v3513, 4
      %v3515 = vadd.f32 %v3513, %v3514
      %v3516 = vrot.slane %v3515, 2
      %v3517 = vadd.f32 %v3515, %v3516
      %v3518 = vrot.slane %v3517, 1
      %v3519 = vadd.f32 %v3517, %v3518
      %v3520 = vsel %vm2061, %v3416, 0.0
      %v3521 = vrot.slane %v3520, 4
      %v3522 = vadd.f32 %v3520, %v3521
      %v3523 = vrot.slane %v3522, 2
      %v3524 = vadd.f32 %v3522, %v3523
      %v3525 = vrot.slane %v3524, 1
      %v3526 = vadd.f32 %v3524, %v3525
      %v3527 = vsel %vm2061, %v3417, 0.0
      %v3528 = vrot.slane %v3527, 4
      %v3529 = vadd.f32 %v3527, %v3528
      %v3530 = vrot.slane %v3529, 2
      %v3531 = vadd.f32 %v3529, %v3530
      %v3532 = vrot.slane %v3531, 1
      %v3533 = vadd.f32 %v3531, %v3532
      %v3534 = vsel %vm2061, %v3418, 0.0
      %v3535 = vrot.slane %v3534, 4
      %v3536 = vadd.f32 %v3534, %v3535
      %v3537 = vrot.slane %v3536, 2
      %v3538 = vadd.f32 %v3536, %v3537
      %v3539 = vrot.slane %v3538, 1
      %v3540 = vadd.f32 %v3538, %v3539
      %v3541 = vsel %vm2061, %v3419, 0.0
      %v3542 = vrot.slane %v3541, 4
      %v3543 = vadd.f32 %v3541, %v3542
      %v3544 = vrot.slane %v3543, 2
      %v3545 = vadd.f32 %v3543, %v3544
      %v3546 = vrot.slane %v3545, 1
      %v3547 = vadd.f32 %v3545, %v3546
      %v3548 = vsel %vm2061, %v3420, 0.0
      %v3549 = vrot.slane %v3548, 4
      %v3550 = vadd.f32 %v3548, %v3549
      %v3551 = vrot.slane %v3550, 2
      %v3552 = vadd.f32 %v3550, %v3551
      %v3553 = vrot.slane %v3552, 1
      %v3554 = vadd.f32 %v3552, %v3553
      %v3555 = vsel %vm2061, %v3421, 0.0
      %v3556 = vrot.slane %v3555, 4
      %v3557 = vadd.f32 %v3555, %v3556
      %v3558 = vrot.slane %v3557, 2
      %v3559 = vadd.f32 %v3557, %v3558
      %v3560 = vrot.slane %v3559, 1
      %v3561 = vadd.f32 %v3559, %v3560
      %v3562 = vsel %vm2061, %v3422, 0.0
      %v3563 = vrot.slane %v3562, 4
      %v3564 = vadd.f32 %v3562, %v3563
      %v3565 = vrot.slane %v3564, 2
      %v3566 = vadd.f32 %v3564, %v3565
      %v3567 = vrot.slane %v3566, 1
      %v3568 = vadd.f32 %v3566, %v3567
      %v3569 = vsel %vm2061, %v3423, 0.0
      %v3570 = vrot.slane %v3569, 4
      %v3571 = vadd.f32 %v3569, %v3570
      %v3572 = vrot.slane %v3571, 2
      %v3573 = vadd.f32 %v3571, %v3572
      %v3574 = vrot.slane %v3573, 1
      %v3575 = vadd.f32 %v3573, %v3574
      %v3576 = vsel %vm2061, %v3424, 0.0
      %v3577 = vrot.slane %v3576, 4
      %v3578 = vadd.f32 %v3576, %v3577
      %v3579 = vrot.slane %v3578, 2
      %v3580 = vadd.f32 %v3578, %v3579
      %v3581 = vrot.slane %v3580, 1
      %v3582 = vadd.f32 %v3580, %v3581
      %v3583 = vsel %vm2061, %v3425, 0.0
      %v3584 = vrot.slane %v3583, 4
      %v3585 = vadd.f32 %v3583, %v3584
      %v3586 = vrot.slane %v3585, 2
      %v3587 = vadd.f32 %v3585, %v3586
      %v3588 = vrot.slane %v3587, 1
      %v3589 = vadd.f32 %v3587, %v3588
      %v3590 = vsel %vm2061, %v3426, 0.0
      %v3591 = vrot.slane %v3590, 4
      %v3592 = vadd.f32 %v3590, %v3591
      %v3593 = vrot.slane %v3592, 2
      %v3594 = vadd.f32 %v3592, %v3593
      %v3595 = vrot.slane %v3594, 1
      %v3596 = vadd.f32 %v3594, %v3595
      %v3597 = vsel %vm2061, %v3427, 0.0
      %v3598 = vrot.slane %v3597, 4
      %v3599 = vadd.f32 %v3597, %v3598
      %v3600 = vrot.slane %v3599, 2
      %v3601 = vadd.f32 %v3599, %v3600
      %v3602 = vrot.slane %v3601, 1
      %v3603 = vadd.f32 %v3601, %v3602
      %v3604 = vsel %vm2061, %v3428, 0.0
      %v3605 = vrot.slane %v3604, 4
      %v3606 = vadd.f32 %v3604, %v3605
      %v3607 = vrot.slane %v3606, 2
      %v3608 = vadd.f32 %v3606, %v3607
      %v3609 = vrot.slane %v3608, 1
      %v3610 = vadd.f32 %v3608, %v3609
      %v3611 = vsel %vm2061, %v3429, 0.0
      %v3612 = vrot.slane %v3611, 4
      %v3613 = vadd.f32 %v3611, %v3612
      %v3614 = vrot.slane %v3613, 2
      %v3615 = vadd.f32 %v3613, %v3614
      %v3616 = vrot.slane %v3615, 1
      %v3617 = vadd.f32 %v3615, %v3616
      %v3618 = vsel %vm2061, %v3430, 0.0
      %v3619 = vrot.slane %v3618, 4
      %v3620 = vadd.f32 %v3618, %v3619
      %v3621 = vrot.slane %v3620, 2
      %v3622 = vadd.f32 %v3620, %v3621
      %v3623 = vrot.slane %v3622, 1
      %v3624 = vadd.f32 %v3622, %v3623
      %v3625 = vsel %vm2061, %v3431, 0.0
      %v3626 = vrot.slane %v3625, 4
      %v3627 = vadd.f32 %v3625, %v3626
      %v3628 = vrot.slane %v3627, 2
      %v3629 = vadd.f32 %v3627, %v3628
      %v3630 = vrot.slane %v3629, 1
      %v3631 = vadd.f32 %v3629, %v3630
      %v3632 = vsel %vm2061, %v3432, 0.0
      %v3633 = vrot.slane %v3632, 4
      %v3634 = vadd.f32 %v3632, %v3633
      %v3635 = vrot.slane %v3634, 2
      %v3636 = vadd.f32 %v3634, %v3635
      %v3637 = vrot.slane %v3636, 1
      %v3638 = vadd.f32 %v3636, %v3637
      %v3639 = vsel %vm2061, %v3433, 0.0
      %v3640 = vrot.slane %v3639, 4
      %v3641 = vadd.f32 %v3639, %v3640
      %v3642 = vrot.slane %v3641, 2
      %v3643 = vadd.f32 %v3641, %v3642
      %v3644 = vrot.slane %v3643, 1
      %v3645 = vadd.f32 %v3643, %v3644
      %v3646 = vsel %vm2061, %v3434, 0.0
      %v3647 = vrot.slane %v3646, 4
      %v3648 = vadd.f32 %v3646, %v3647
      %v3649 = vrot.slane %v3648, 2
      %v3650 = vadd.f32 %v3648, %v3649
      %v3651 = vrot.slane %v3650, 1
      %v3652 = vadd.f32 %v3650, %v3651
      %v3653 = vsel %vm2061, %v3435, 0.0
      %v3654 = vrot.slane %v3653, 4
      %v3655 = vadd.f32 %v3653, %v3654
      %v3656 = vrot.slane %v3655, 2
      %v3657 = vadd.f32 %v3655, %v3656
      %v3658 = vrot.slane %v3657, 1
      %v3659 = vadd.f32 %v3657, %v3658
      %v3660 = vld [vmem:[%s7] sm:$0xff]
      %v3661 = vld [vmem:[%s7 + $0x8] sm:$0xff]
      %v3662 = vld [vmem:[%s7 + $0x10] sm:$0xff]
      %v3663 = vld [vmem:[%s7 + $0x18] sm:$0xff]
      %v3696 = vsel %vm2720, %v3449, %v3442
      %v3697 = vsel %vm2722, %v3456, %v3696
      %v3698 = vsel %vm2724, %v3463, %v3697
      %v3699 = vsel %vm2726, %v3470, %v3698
      %v3700 = vsel %vm2728, %v3477, %v3699
      %v3701 = vsel %vm2730, %v3484, %v3700
      %v3702 = vsel %vm2732, %v3491, %v3701
      %v3703 = vsel %vm2720, %v3505, %v3498
      %v3704 = vsel %vm2722, %v3512, %v3703
      %v3705 = vsel %vm2724, %v3519, %v3704
      %v3706 = vsel %vm2726, %v3526, %v3705
      %v3707 = vsel %vm2728, %v3533, %v3706
      %v3708 = vsel %vm2730, %v3540, %v3707
      %v3709 = vsel %vm2732, %v3547, %v3708
      %v3710 = vsel %vm2720, %v3561, %v3554
      %v3711 = vsel %vm2722, %v3568, %v3710
      %v3712 = vsel %vm2724, %v3575, %v3711
      %v3713 = vsel %vm2726, %v3582, %v3712
      %v3714 = vsel %vm2728, %v3589, %v3713
      %v3715 = vsel %vm2730, %v3596, %v3714
      %v3716 = vsel %vm2732, %v3603, %v3715
      %v3717 = vsel %vm2720, %v3617, %v3610
      %v3718 = vsel %vm2722, %v3624, %v3717
      %v3719 = vsel %vm2724, %v3631, %v3718
      %v3720 = vsel %vm2726, %v3638, %v3719
      %v3721 = vsel %vm2728, %v3645, %v3720
      %v3722 = vsel %vm2730, %v3652, %v3721
      %v3723 = vsel %vm2732, %v3659, %v3722
      %3724 = vrot.lane.b32.xlu0 %v2092, 112
      %v3725 = vpop.permute.xlu0 %3724
      %3726 = vrot.lane.b32.xlu0 %v2095, 112
      %v3727 = vpop.permute.xlu0 %3726
      %3728 = vrot.lane.b32.xlu0 %v2098, 112
      %v3729 = vpop.permute.xlu0 %3728
      %3730 = vrot.lane.b32.xlu0 %v2101, 112
      %v3731 = vpop.permute.xlu0 %3730
      %v3736 = vsel %vm2061, %v3702, 0
      %v3738 = vsel %vm2061, %v3709, 0
      %v3740 = vsel %vm2061, %v3716, 0
      %v3742 = vsel %vm2061, %v3723, 0
      %3744 = vmatpush.msra.mxu0 0.0
      %3745 = vmatpush.msra.mxu0 0.0
      %3746 = vmatpush.msra.mxu0 0.0
      %3747 = vmatpush.msra.mxu0 0.0
      %3748 = vmatpush.msra.mxu0 0.0
      %3749 = vmatpush.msra.mxu0 0.0
      %3750 = vmatpush.msra.mxu0 0.0
      %3751 = vmatpush.msra.mxu0 0.0
      %3752 = vmatpush.msra.mxu0 0.0
      %3753 = vmatpush.msra.mxu0 0.0
      %3754 = vmatpush.msra.mxu0 0.0
      %3755 = vmatpush.msra.mxu0 0.0
      %3756 = vmatpush.msra.mxu0 %v3663
      %3757 = vmatpush.msra.mxu0 %v3662
      %3758 = vmatpush.msra.mxu0 %v3661
      %3759 = vmatpush.msra.mxu0 %v3660
      %3760 = vmatmul.f32.gmra.mxu0 %v3736
      %v3761 = vpop.f32.mrf.mxu0
      %v3762 = vadd.f32 %v3725, %v3761
      %3763 = vmatmul.f32.gmra.mxu0 %v3738
      %v3764 = vpop.f32.mrf.mxu0
      %v3765 = vadd.f32 %v3727, %v3764
      %3766 = vmatmul.f32.gmra.mxu0 %v3740
      %v3767 = vpop.f32.mrf.mxu0
      %v3768 = vadd.f32 %v3729, %v3767
      %3769 = vmatmul.f32.gmra.mxu0 %v3742
      %v3770 = vpop.f32.mrf.mxu0
      %v3771 = vadd.f32 %v3731, %v3770
      %3772 = vdwg.mxu0
      %v3773 = vtanh.pop %v3762
      %v3774 = vtanh.pop %v3765
      %v3775 = vtanh.pop %v3768
      %v3776 = vtanh.pop %v3771
      %3777 = vst.msk [vmem:[%s330] sm:$0xff] %vm2061, %v3773
      %3778 = vst.msk [vmem:[%s330 + $0x8] sm:$0xff] %vm2061, %v3774
      %3779 = vst.msk [vmem:[%s330 + $0x10] sm:$0xff] %vm2061, %v3775
      %3780 = vst.msk [vmem:[%s330 + $0x18] sm:$0xff] %vm2061, %v3776
      %s3781 = smul.u32 4, %s20
      %p3782 = scmp.lt.s32.totalorder %s3781, 7
      %s3783 = scalar_select %p3782, %s3781, 7
      %s3784 = smul.addr %s3783, 8
      %s3785 = scalar_lea.vmem %s8, %s3784
      // Predicated region
      $region53: #{tpu_custom_call.1} parent=51 // pred_check
        %p3786 = pneg %p216
      $region54: #{tpu_custom_call.1} parent=51 // pred_check_branch
        %3788 = sbr.rel (%p3786) target = $region56
      $region55: #{tpu_custom_call.1} parent=51 // pred_region
        %s3789 = smul.u32 4, %s20
      $region56: #{tpu_custom_call.1} parent=51 // pred_fallthru
        _
    $region52: #{tpu_custom_call.1} parent=5 // pred_fallthru
      _
    %p3790 = scmp.le.s32.totalorder 2, %s15
    // Predicated region
    $region57: #{tpu_custom_call.1} parent=5 // pred_check
      %p3791 = pneg %p3790
    $region58: #{tpu_custom_call.1} parent=5 // pred_check_branch
      %3793 = sbr.rel (%p3791) target = $region60
    $region59: #{tpu_custom_call.1} parent=5 // pred_region
      %s3794 = ssub.s32 %s15, 2
      // Predicated region
      $region61: #{tpu_custom_call.1} parent=59 // pred_check
        %p3795 = pneg %p222
      $region62: #{tpu_custom_call.1} parent=59 // pred_check_branch
        %3797 = sbr.rel (%p3795) target = $region64
      $region63: #{tpu_custom_call.1} parent=59 // pred_region
        %s3798 = smul.u32 4, %s21
        %p3799 = scmp.lt.s32.totalorder %s3798, 7
        %s3800 = scalar_select %p3799, %s3798, 7
        %s3801 = smul.addr %s3800, 8
        %s3802 = scalar_lea.vmem %s8, %s3801
      $region64: #{tpu_custom_call.1} parent=59 // pred_fallthru
        _
    $region60: #{tpu_custom_call.1} parent=5 // pred_fallthru
      _
  $region6: #{tpu_custom_call.1} parent=0 // loop_footer
    %s19 = sadd.s32 1, %s15
  $region7: #{tpu_custom_call.1} parent=0 // loop_footer_branch
    %14 = sbr.rel target = $region3
  $region8: #{tpu_custom_call.1} parent=0 // loop_exit
    _

</llo_original>
